<compile_context>
chip_gen: v5e
topology: v5e:2x2
jax: 0.10.0
libtpu: 0.0.40
codegen_flags: <defaults>
</compile_context>

<pallas_src>
import functools

import jax
import jax.numpy as jnp
from jax.experimental import pallas as pl
from jax.experimental.pallas import tpu as pltpu


KERNEL_SIZE = 3
# 3 EncoderBlocks x ResidualUnits with dilations (1, 3, 9) -- static constants.
BLOCK_DILATIONS = (1, 3, 9, 1, 3, 9, 1, 3, 9)
BN_EPS = 1e-5
LOUDNESS_SCALE = 8.0
AUX_ROWS = 8          # sublane-padded row count of the lane-dense aux output


# ----------------------------------------------------------------------------
# Fused Pallas kernel: conv stack + fused MLP heads, Bb batch elems / grid step
# ----------------------------------------------------------------------------
def _make_fused_kernel(Bb, T, Cmel, nbins, n_mid, use_per, use_loud):
    K = KERNEL_SIZE
    M = Bb * T
    n_aux = int(use_per) + int(use_loud)
    f32 = jnp.float32
    bf16 = jnp.bfloat16

    def kernel(*refs):
        it = iter(refs)
        mel_ref = next(it)                        # (Bb, T, Cmel)      f32
        wf_ref, bf_ref = next(it), next(it)       # (K*Cmel, H) bf16, (1, H) f32
        wres_ref, bres_ref = next(it), next(it)   # (9, K*H, H) bf16, (9, 1, H)
        wlast_ref, blast_ref = next(it), next(it) # (K*H, H) bf16,    (1, H)
        wh0_ref, bh0_ref = next(it), next(it)     # fused head layer 0
        whm_ref = bhm_ref = None
        if n_mid > 0:
            whm_ref, bhm_ref = next(it), next(it) # fused mid layers (stacked)
        whl_ref, bhl_ref = next(it), next(it)     # fused last layer [F, nbins+n_aux]
        logits_ref = next(it)                     # (Bb, T, nbins)
        aux_ref = next(it) if n_aux else None     # (Bb, AUX_ROWS, T)
        cols_ref = next(it)                       # persistent scratch (M, K*Cmel) f32

        # Row index within each batch element (causal mask; also prevents
        # leakage across elements when Bb > 1).
        local = jax.lax.broadcasted_iota(jnp.int32, (M, 1), 0) % T

        def causal_conv(h, w, b, dilation, relu, residual):
            # h: [M, Cin] f32.  w: [K*Cin, Cout] bf16 (im2col layout, BN folded).
            Cin = h.shape[1]
            pad = dilation * (K - 1)
            # Write the K causally shifted taps into the persistent scratch.
            for j in range(K):
                s = pad - j * dilation            # how far tap j looks back
                c0, c1 = j * Cin, (j + 1) * Cin
                if s == 0:
                    cols_ref[:, c0:c1] = h
                elif s >= M:
                    cols_ref[:, c0:c1] = jnp.zeros((M, Cin), f32)
                else:
                    shifted = jnp.where(local[s:] < s, 0.0, h[:M - s])
                    cols_ref[s:, c0:c1] = shifted
                    cols_ref[:s, c0:c1] = jnp.zeros((s, Cin), f32)
            cols = cols_ref[:, :K * Cin].astype(bf16)
            y = jnp.dot(cols, w, preferred_element_type=f32) + b
            if relu:
                y = jnp.maximum(y, 0.0)
            if residual:
                y = y + h                         # x + relu(bn(conv(x)))
            return y

        # ---- CausalConvNet (eval-mode BN folded into the weights) ----
        x = mel_ref[...].reshape(M, Cmel)
        h = causal_conv(x, wf_ref[...], bf_ref[...], 1, True, False)
        for li, d in enumerate(BLOCK_DILATIONS):
            h = causal_conv(h, wres_ref[li], bres_ref[li], d, True, True)
        h = causal_conv(h, wlast_ref[...], blast_ref[...], 1, False, False)
        # h: [M, hidden] == conv(mel).transpose(1, 2), batch flattened into M

        # ---- fused MLP heads (pitch | periodicity | loudness) ----
        z = jnp.dot(h.astype(bf16), wh0_ref[...], preferred_element_type=f32) + bh0_ref[...]
        z = jnp.maximum(z, 0.0)
        for i in range(n_mid):
            z = jnp.dot(z.astype(bf16), whm_ref[i], preferred_element_type=f32) + bhm_ref[i]
            z = jnp.maximum(z, 0.0)
        out = jnp.dot(z.astype(bf16), whl_ref[...], preferred_element_type=f32) + bhl_ref[...]
        # out: [M, nbins + n_aux]

        logits_ref[...] = out[:, :nbins].reshape(Bb, T, nbins)

        if n_aux:
            pieces = []
            c = nbins
            if use_per:
                pieces.append(jax.nn.sigmoid(out[:, c:c + 1]))
                c += 1
            if use_loud:
                pieces.append(LOUDNESS_SCALE * jax.nn.sigmoid(out[:, c:c + 1]))
                c += 1
            pieces.append(jnp.zeros((M, AUX_ROWS - n_aux), f32))
            aux = jnp.concatenate(pieces, axis=1)                 # [M, AUX_ROWS]
            # Lane-dense aux output: transpose [T, AUX_ROWS] -> [AUX_ROWS, T]
            # per batch element using an identity contraction on the MXU.
            rr = jax.lax.broadcasted_iota(jnp.int32, (AUX_ROWS, AUX_ROWS), 0)
            cc = jax.lax.broadcasted_iota(jnp.int32, (AUX_ROWS, AUX_ROWS), 1)
            eye = (rr == cc).astype(f32)
            for bb in range(Bb):
                slab = aux[bb * T:(bb + 1) * T, :]                # [T, AUX_ROWS]
                slab_t = jax.lax.dot_general(
                    eye, slab, (((1,), (1,)), ((), ())),
                    preferred_element_type=f32)                   # [AUX_ROWS, T]
                aux_ref[bb] = slab_t

    return kernel


# ----------------------------------------------------------------------------
# Parameter construction (PyTorch layout) and packing (BN fold, head fusion)
# ----------------------------------------------------------------------------
def init_params(key, config):
    cc = config["convnet_config"]
    Cin, Hd, Cout, K = (cc["in_channels"], cc["hidden_dim"],
                        cc["out_channels"], cc["kernel_size"])
    assert K == KERNEL_SIZE
    fe, nmid = config["forward_expansion"], config["n_midlayers"]
    hid, nbins = config["hidden_dim"], config["nbins"]
    keys = iter(jax.random.split(key, 256))

    def conv_p(ci, co):
        return dict(w=0.05 * jax.random.normal(next(keys), (co, ci, K), jnp.float32),
                    b=0.10 * jax.random.normal(next(keys), (co,), jnp.float32))

    def bn_p(c):
        return dict(gamma=1.0 + 0.05 * jax.random.normal(next(keys), (c,), jnp.float32),
                    beta=0.05 * jax.random.normal(next(keys), (c,), jnp.float32),
                    mean=0.05 * jax.random.normal(next(keys), (c,), jnp.float32),
                    var=jnp.abs(1.0 + 0.05 * jax.random.normal(next(keys), (c,), jnp.float32)))

    def lin_p(ci, co):
        return dict(w=0.15 * jax.random.normal(next(keys), (co, ci), jnp.float32),
                    b=0.10 * jax.random.normal(next(keys), (co,), jnp.float32))

    def mlp_p(ci, co):
        hf = hid * fe
        layers = [lin_p(ci, hf)]
        for _ in range(nmid):
            layers.append(lin_p(hf, hf))
        layers.append(lin_p(hf, co))
        return layers

    return dict(
        first=dict(conv=conv_p(Cin, Hd), bn=bn_p(Hd)),
        residual=[dict(conv=conv_p(Hd, Hd), bn=bn_p(Hd)) for _ in BLOCK_DILATIONS],
        last=dict(conv=conv_p(Hd, Cout)),
        pitch=mlp_p(hid, nbins),
        periodicity=mlp_p(hid, 1) if config["use_periodicity_head"] else None,
        loudness=mlp_p(hid, 1) if config["use_loudness_head"] else None,
    )


def _block_diag(blocks):
    rows = sum(b.shape[0] for b in blocks)
    cols = sum(b.shape[1] for b in blocks)
    out = jnp.zeros((rows, cols), blocks[0].dtype)
    r = c = 0
    for b in blocks:
        out = out.at[r:r + b.shape[0], c:c + b.shape[1]].set(b)
        r += b.shape[0]
        c += b.shape[1]
    return out


def pack_params(params):
    """Fold eval-mode BN into the conv weights, reshape to im2col matmul
    layout, fuse the MLP heads, and cast matmul weights to bf16."""
    wdt = jnp.bfloat16

    def im2col_w(w):                      # [Cout, Cin, K] -> [K*Cin, Cout]
        return jnp.transpose(w, (2, 1, 0)).reshape(-1, w.shape[0])

    def fold(conv, bn):
        w, b = conv["w"], conv["b"]
        if bn is not None:
            scale = bn["gamma"] / jnp.sqrt(bn["var"] + BN_EPS)
            shift = bn["beta"] - bn["mean"] * scale
            w = w * scale[:, None, None]
            b = b * scale + shift
        return im2col_w(w).astype(wdt), b[None, :].astype(jnp.float32)

    w_first, b_first = fold(params["first"]["conv"], params["first"]["bn"])
    res = [fold(u["conv"], u["bn"]) for u in params["residual"]]
    w_last, b_last = fold(params["last"]["conv"], None)

    heads = [params["pitch"]]
    if params["periodicity"] is not None:
        heads.append(params["periodicity"])
    if params["loudness"] is not None:
        heads.append(params["loudness"])

    L = len(heads[0])
    # Layer 0: concat along the output dim (-> one matmul for all heads).
    w_h0 = jnp.concatenate([h[0]["w"] for h in heads], axis=0).T.astype(wdt)
    b_h0 = jnp.concatenate([h[0]["b"] for h in heads], axis=0)[None, :].astype(jnp.float32)
    # Mid layers: block-diagonal (each head keeps its own feature block).
    mids_w, mids_b = [], []
    for li in range(1, L - 1):
        mids_w.append(_block_diag([h[li]["w"] for h in heads]).T.astype(wdt))
        mids_b.append(jnp.concatenate([h[li]["b"] for h in heads],
                                      axis=0)[None, :].astype(jnp.float32))
    # Last layer: block-diagonal -> [3*hf, nbins + n_aux] (pitch cols first).
    w_hl = _block_diag([h[L - 1]["w"] for h in heads]).T.astype(wdt)
    b_hl = jnp.concatenate([h[L - 1]["b"] for h in heads], axis=0)[None, :].astype(jnp.float32)

    return dict(
        w_first=w_first, b_first=b_first,
        w_res=jnp.stack([w for w, _ in res]), b_res=jnp.stack([b for _, b in res]),
        w_last=w_last, b_last=b_last,
        w_h0=w_h0, b_h0=b_h0,
        w_hm=jnp.stack(mids_w) if mids_w else None,
        b_hm=jnp.stack(mids_b) if mids_b else None,
        w_hl=w_hl, b_hl=b_hl,
    )


# ----------------------------------------------------------------------------
# Forward pass (single pallas_call)
# ----------------------------------------------------------------------------
@functools.partial(jax.jit,
                   static_argnames=("use_periodicity", "use_loudness", "batch_block"))
def rt_pitch_tracker_forward(mel, packed, use_periodicity=True, use_loudness=True,
                             batch_block=None):
    # mel: [B, 128, t] (PyTorch NCW).  Flags must match those used at pack time.
    B, Cmel, T = mel.shape
    assert T % 8 == 0, "time axis must be a multiple of 8"

    use_per = bool(use_periodicity)
    use_loud = bool(use_loudness)
    n_aux = int(use_per) + int(use_loud)
    nbins = packed["w_hl"].shape[1] - n_aux
    n_mid = 0 if packed["w_hm"] is None else packed["w_hm"].shape[0]

    # Batch elements per grid step: fill MXU sublanes (M = Bb*T) but keep at
    # least 2 parallel grid steps when possible (v7x has 2 TensorCores).
    if batch_block is None:
        Bb = B // 2 if (B % 2 == 0 and B >= 4) else 1
    else:
        Bb = int(batch_block)
    assert B % Bb == 0
    grid = (B // Bb,)
    M = Bb * T

    # TODO(synk): move this transpose in-kernel to save one HBM pass over mel.
    x = jnp.transpose(mel, (0, 2, 1)).astype(jnp.float32)        # [B, T, Cmel]

    def full_spec(a):
        nd = a.ndim
        return pl.BlockSpec(a.shape, lambda g, _nd=nd: (0,) * _nd)

    weight_names = ["w_first", "b_first", "w_res", "b_res", "w_last", "b_last",
                    "w_h0", "b_h0"]
    if n_mid > 0:
        weight_names += ["w_hm", "b_hm"]
    weight_names += ["w_hl", "b_hl"]

    inputs = [x] + [packed[n] for n in weight_names]
    in_specs = ([pl.BlockSpec((Bb, T, Cmel), lambda g: (g, 0, 0))]
                + [full_spec(packed[n]) for n in weight_names])

    out_shape = [jax.ShapeDtypeStruct((B, T, nbins), jnp.float32)]
    out_specs = [pl.BlockSpec((Bb, T, nbins), lambda g: (g, 0, 0))]
    if n_aux:
        out_shape.append(jax.ShapeDtypeStruct((B, AUX_ROWS, T), jnp.float32))
        out_specs.append(pl.BlockSpec((Bb, AUX_ROWS, T), lambda g: (g, 0, 0)))

    # One persistent im2col scratch reused by all 11 conv layers.
    scratch_shapes = [pltpu.VMEM((M, KERNEL_SIZE * Cmel), jnp.float32)]

    # VMEM budget: double-buffered mel/logits/aux blocks + weights + scratch
    # + headroom for activation temporaries.  Clamped below v7x's 64 MiB.
    weight_bytes = sum(int(packed[n].size) * packed[n].dtype.itemsize
                       for n in weight_names)
    io_bytes = 4 * (Bb * T * Cmel + Bb * T * nbins + (Bb * AUX_ROWS * T if n_aux else 0))
    est = (2 * io_bytes + 2 * weight_bytes
           + 4 * M * KERNEL_SIZE * Cmel          # scratch
           + 32 * M * 4 * (nbins + n_aux))       # activation temporaries
    vmem_limit = int(min(max(est + (8 << 20), 32 << 20), 56 << 20))

    kernel = _make_fused_kernel(Bb, T, Cmel, nbins, n_mid, use_per, use_loud)

    outs = pl.pallas_call(
        kernel,
        out_shape=tuple(out_shape),
        grid=grid,
        in_specs=in_specs,
        out_specs=tuple(out_specs),
        scratch_shapes=scratch_shapes,
        compiler_params=pltpu.CompilerParams(
            dimension_semantics=("parallel",),
            vmem_limit_bytes=vmem_limit),
    )(*inputs)

    logits = outs[0]
    periodicity = loudness = None
    if n_aux:
        aux = outs[1]                             # [B, AUX_ROWS, T], lane-dense
        row = 0
        if use_per:
            periodicity = aux[:, row:row + 1, :]  # [B, 1, t]
            row += 1
        if use_loud:
            loudness = aux[:, row:row + 1, :]     # [B, 1, t]
    return {"logits": logits, "periodicity": periodicity, "loudness": loudness}


# ----------------------------------------------------------------------------
# Pure-JAX reference: faithful to the PyTorch module (separate heads, eval BN),
# matmul operands rounded to bf16 to mirror the kernel's MXU dtype.
# ----------------------------------------------------------------------------
def reference_forward(mel, params):
    K = KERNEL_SIZE
    f32, bf16 = jnp.float32, jnp.bfloat16
    x = jnp.transpose(mel, (0, 2, 1)).astype(f32)         # [B, T, C]

    def causal_conv1d(x, w, b, dilation):
        Bq, T, _ = x.shape
        pad = dilation * (K - 1)
        xp = jnp.pad(x, ((0, 0), (pad, 0), (0, 0)))
        y = jnp.zeros((Bq, T, w.shape[0]), f32) + b[None, None, :]
        for j in range(K):
            xs = xp[:, j * dilation:j * dilation + T, :]
            y = y + jnp.einsum("btc,oc->bto", xs.astype(bf16), w[:, :, j].astype(bf16),
                               preferred_element_type=f32)
        return y

    def bnorm(x, p):
        scale = p["gamma"] / jnp.sqrt(p["var"] + BN_EPS)
        return (x - p["mean"]) * scale + p["beta"]

    h = jnp.maximum(bnorm(causal_conv1d(x, params["first"]["conv"]["w"],
                                        params["first"]["conv"]["b"], 1),
                          params["first"]["bn"]), 0.0)
    for unit, d in zip(params["residual"], BLOCK_DILATIONS):
        h = h + jnp.maximum(bnorm(causal_conv1d(h, unit["conv"]["w"],
                                                unit["conv"]["b"], d),
                                  unit["bn"]), 0.0)
    h = causal_conv1d(h, params["last"]["conv"]["w"], params["last"]["conv"]["b"], 1)

    def mlp(z, layers):
        for l in layers[:-1]:
            z = jnp.maximum(
                jnp.einsum("btc,oc->bto", z.astype(bf16), l["w"].astype(bf16),
                           preferred_element_type=f32) + l["b"], 0.0)
        l = layers[-1]
        return jnp.einsum("btc,oc->bto", z.astype(bf16), l["w"].astype(bf16),
                          preferred_element_type=f32) + l["b"]

    logits = mlp(h, params["pitch"])
    periodicity = loudness = None
    if params["periodicity"] is not None:
        periodicity = jnp.transpose(jax.nn.sigmoid(mlp(h, params["periodicity"])), (0, 2, 1))
    if params["loudness"] is not None:
        loudness = LOUDNESS_SCALE * jnp.transpose(
            jax.nn.sigmoid(mlp(h, params["loudness"])), (0, 2, 1))
    return {"logits": logits, "periodicity": periodicity, "loudness": loudness}


# ----------------------------------------------------------------------------
# Demo
# ----------------------------------------------------------------------------
if __name__ == "__main__":
    config = dict(
        convnet_config=dict(in_channels=128, hidden_dim=32, out_channels=32,
                            kernel_size=3),
        hidden_dim=32,
        nbins=128,
        forward_expansion=1,
        n_midlayers=1,
        use_periodicity_head=True,
        use_loudness_head=True,
        fmin=50.0, fmax=1000.0, f_base=10.0,
    )

    key = jax.random.PRNGKey(0)
    k_param, k_mel = jax.random.split(key)

    params = init_params(k_param, config)
    packed = pack_params(params)

    B, C_mel, t = 4, 128, 32
    mel = jax.random.normal(k_mel, (B, C_mel, t), jnp.float32)

    out = rt_pitch_tracker_forward(mel, packed)
    jax.block_until_ready(out["logits"])

    assert out["logits"].shape == (B, t, config["nbins"])
    assert out["periodicity"].shape == (B, 1, t)
    assert out["loudness"].shape == (B, 1, t)

    ref = reference_forward(mel, params)
    assert bool(jnp.allclose(out["logits"], ref["logits"], rtol=3e-2, atol=3e-2))
    assert bool(jnp.allclose(out["periodicity"], ref["periodicity"], rtol=3e-2, atol=3e-2))
    assert bool(jnp.allclose(out["loudness"], ref["loudness"], rtol=3e-2, atol=3e-2))

    print("KERNEL_OK")
</pallas_src>

<mosaic_0001>
module attributes {stable_mosaic.version = 11 : i64} {
  func.func @kernel(%arg0: i32, %arg1: memref<2x32x128xf32, #tpu.memory_space<vmem>>, %arg2: memref<384x32xbf16, #tpu.memory_space<vmem>>, %arg3: memref<1x32xf32, #tpu.memory_space<vmem>>, %arg4: memref<9x96x32xbf16, #tpu.memory_space<vmem>>, %arg5: memref<9x1x32xf32, #tpu.memory_space<vmem>>, %arg6: memref<96x32xbf16, #tpu.memory_space<vmem>>, %arg7: memref<1x32xf32, #tpu.memory_space<vmem>>, %arg8: memref<32x96xbf16, #tpu.memory_space<vmem>>, %arg9: memref<1x96xf32, #tpu.memory_space<vmem>>, %arg10: memref<1x96x96xbf16, #tpu.memory_space<vmem>>, %arg11: memref<1x1x96xf32, #tpu.memory_space<vmem>>, %arg12: memref<96x130xbf16, #tpu.memory_space<vmem>>, %arg13: memref<1x130xf32, #tpu.memory_space<vmem>>, %arg14: memref<2x32x128xf32, #tpu.memory_space<vmem>>, %arg15: memref<2x8x32xf32, #tpu.memory_space<vmem>>, %arg16: memref<64x384xf32, #tpu.memory_space<vmem>>) attributes {dimension_semantics = [#tpu.dimension_semantics<parallel>], iteration_bounds = array<i64: 2>, scalar_prefetch = 0 : i64, scratch_operands = 1 : i64, tpu.core_type = #tpu.core_type<tc>, window_params = [{transform_indices = @transform_0, window_bounds = array<i64: 2, 32, 128>}, {pipeline_mode = #tpu.pipeline_mode<synchronous>, transform_indices = @transform_1, window_bounds = array<i64: 384, 32>}, {pipeline_mode = #tpu.pipeline_mode<synchronous>, transform_indices = @transform_2, window_bounds = array<i64: 1, 32>}, {pipeline_mode = #tpu.pipeline_mode<synchronous>, transform_indices = @transform_3, window_bounds = array<i64: 9, 96, 32>}, {pipeline_mode = #tpu.pipeline_mode<synchronous>, transform_indices = @transform_4, window_bounds = array<i64: 9, 1, 32>}, {pipeline_mode = #tpu.pipeline_mode<synchronous>, transform_indices = @transform_5, window_bounds = array<i64: 96, 32>}, {pipeline_mode = #tpu.pipeline_mode<synchronous>, transform_indices = @transform_6, window_bounds = array<i64: 1, 32>}, {pipeline_mode = #tpu.pipeline_mode<synchronous>, transform_indices = @transform_7, window_bounds = array<i64: 32, 96>}, {pipeline_mode = #tpu.pipeline_mode<synchronous>, transform_indices = @transform_8, window_bounds = array<i64: 1, 96>}, {pipeline_mode = #tpu.pipeline_mode<synchronous>, transform_indices = @transform_9, window_bounds = array<i64: 1, 96, 96>}, {pipeline_mode = #tpu.pipeline_mode<synchronous>, transform_indices = @transform_10, window_bounds = array<i64: 1, 1, 96>}, {pipeline_mode = #tpu.pipeline_mode<synchronous>, transform_indices = @transform_11, window_bounds = array<i64: 96, 130>}, {pipeline_mode = #tpu.pipeline_mode<synchronous>, transform_indices = @transform_12, window_bounds = array<i64: 1, 130>}, {transform_indices = @transform_13, window_bounds = array<i64: 2, 32, 128>}, {transform_indices = @transform_14, window_bounds = array<i64: 2, 8, 32>}]} {
    %0 = tpu.iota {dimensions = array<i32: 0>} : vector<64x1xi32>
    %c32_i32 = arith.constant 32 : i32
    %c0_i32 = arith.constant 0 : i32
    %1 = arith.cmpi eq, %c32_i32, %c0_i32 : i32
    %c1_i32 = arith.constant 1 : i32
    %2 = arith.select %1, %c1_i32, %c32_i32 : i32
    %3 = vector.broadcast %2 : i32 to vector<64x1xi32>
    %4 = arith.remsi %0, %3 : vector<64x1xi32>
    %c0_i32_0 = arith.constant 0 : i32
    %5 = vector.broadcast %c0_i32_0 : i32 to vector<64x1xi32>
    %6 = arith.cmpi ne, %4, %5 : vector<64x1xi32>
    %c0_i32_1 = arith.constant 0 : i32
    %7 = vector.broadcast %c0_i32_1 : i32 to vector<64x1xi32>
    %8 = arith.cmpi slt, %4, %7 : vector<64x1xi32>
    %c0_i32_2 = arith.constant 0 : i32
    %9 = arith.cmpi slt, %2, %c0_i32_2 : i32
    %10 = vector.broadcast %9 : i1 to vector<64x1xi1>
    %11 = vector.broadcast %10 : vector<64x1xi1> to vector<64x1xi1>
    %12 = arith.xori %8, %11 : vector<64x1xi1>
    %13 = arith.andi %12, %6 : vector<64x1xi1>
    %14 = vector.broadcast %2 : i32 to vector<64x1xi32>
    %15 = arith.addi %4, %14 : vector<64x1xi32>
    %16 = arith.select %13, %15, %4 : vector<64x1xi1>, vector<64x1xi32>
    %c0 = arith.constant 0 : index
    %c0_3 = arith.constant 0 : index
    %c0_4 = arith.constant 0 : index
    %17 = vector.load %arg1[%c0, %c0_3, %c0_4] : memref<2x32x128xf32, #tpu.memory_space<vmem>>, vector<2x32x128xf32>
    %18 = vector.shape_cast %17 : vector<2x32x128xf32> to vector<64x128xf32>
    %c0_5 = arith.constant 0 : index
    %c0_6 = arith.constant 0 : index
    %19 = vector.load %arg2[%c0_5, %c0_6] : memref<384x32xbf16, #tpu.memory_space<vmem>>, vector<384x32xbf16>
    %c0_7 = arith.constant 0 : index
    %c0_8 = arith.constant 0 : index
    %20 = vector.load %arg3[%c0_7, %c0_8] : memref<1x32xf32, #tpu.memory_space<vmem>>, vector<1x32xf32>
    %21 = vector.extract_strided_slice %16 {offsets = [2, 0], sizes = [62, 1], strides = [1, 1]} : vector<64x1xi32> to vector<62x1xi32>
    %c2_i32 = arith.constant 2 : i32
    %22 = vector.broadcast %c2_i32 : i32 to vector<62x1xi32>
    %23 = arith.cmpi slt, %21, %22 : vector<62x1xi32>
    %24 = vector.extract_strided_slice %18 {offsets = [0, 0], sizes = [62, 128], strides = [1, 1]} : vector<64x128xf32> to vector<62x128xf32>
    %cst = arith.constant 0.000000e+00 : f32
    %25 = vector.shape_cast %23 : vector<62x1xi1> to vector<62x1xi1>
    %26 = vector.broadcast %25 : vector<62x1xi1> to vector<62x128xi1>
    %27 = vector.broadcast %cst : f32 to vector<62x128xf32>
    %28 = arith.select %26, %27, %24 : vector<62x128xi1>, vector<62x128xf32>
    %c2 = arith.constant 2 : index
    %c0_9 = arith.constant 0 : index
    %29 = vector.load %arg16[%c2, %c0_9] : memref<64x384xf32, #tpu.memory_space<vmem>>, vector<62x128xf32>
    tpu.vector_store %arg16[%c2, %c0_9], %28 {strides = array<i32>} : memref<64x384xf32, #tpu.memory_space<vmem>>, vector<62x128xf32>,
    %cst_10 = arith.constant 0.000000e+00 : f32
    %30 = vector.broadcast %cst_10 : f32 to vector<2x128xf32>
    %c0_11 = arith.constant 0 : index
    %c0_12 = arith.constant 0 : index
    %31 = vector.load %arg16[%c0_11, %c0_12] : memref<64x384xf32, #tpu.memory_space<vmem>>, vector<2x128xf32>
    tpu.vector_store %arg16[%c0_11, %c0_12], %30 {strides = array<i32>} : memref<64x384xf32, #tpu.memory_space<vmem>>, vector<2x128xf32>,
    %32 = vector.extract_strided_slice %16 {offsets = [1, 0], sizes = [63, 1], strides = [1, 1]} : vector<64x1xi32> to vector<63x1xi32>
    %c1_i32_13 = arith.constant 1 : i32
    %33 = vector.broadcast %c1_i32_13 : i32 to vector<63x1xi32>
    %34 = arith.cmpi slt, %32, %33 : vector<63x1xi32>
    %35 = vector.extract_strided_slice %18 {offsets = [0, 0], sizes = [63, 128], strides = [1, 1]} : vector<64x128xf32> to vector<63x128xf32>
    %cst_14 = arith.constant 0.000000e+00 : f32
    %36 = vector.shape_cast %34 : vector<63x1xi1> to vector<63x1xi1>
    %37 = vector.broadcast %36 : vector<63x1xi1> to vector<63x128xi1>
    %38 = vector.broadcast %cst_14 : f32 to vector<63x128xf32>
    %39 = arith.select %37, %38, %35 : vector<63x128xi1>, vector<63x128xf32>
    %c1 = arith.constant 1 : index
    %c128 = arith.constant 128 : index
    %40 = vector.load %arg16[%c1, %c128] : memref<64x384xf32, #tpu.memory_space<vmem>>, vector<63x128xf32>
    tpu.vector_store %arg16[%c1, %c128], %39 {strides = array<i32>} : memref<64x384xf32, #tpu.memory_space<vmem>>, vector<63x128xf32>,
    %cst_15 = arith.constant 0.000000e+00 : f32
    %41 = vector.broadcast %cst_15 : f32 to vector<1x128xf32>
    %c0_16 = arith.constant 0 : index
    %c128_17 = arith.constant 128 : index
    %42 = vector.load %arg16[%c0_16, %c128_17] : memref<64x384xf32, #tpu.memory_space<vmem>>, vector<1x128xf32>
    tpu.vector_store %arg16[%c0_16, %c128_17], %41 {strides = array<i32>} : memref<64x384xf32, #tpu.memory_space<vmem>>, vector<1x128xf32>,
    %c0_18 = arith.constant 0 : index
    %c256 = arith.constant 256 : index
    %43 = vector.load %arg16[%c0_18, %c256] : memref<64x384xf32, #tpu.memory_space<vmem>>, vector<64x128xf32>
    tpu.vector_store %arg16[%c0_18, %c256], %18 {strides = array<i32>} : memref<64x384xf32, #tpu.memory_space<vmem>>, vector<64x128xf32>,
    %c0_19 = arith.constant 0 : index
    %c0_20 = arith.constant 0 : index
    %44 = vector.load %arg16[%c0_19, %c0_20] : memref<64x384xf32, #tpu.memory_space<vmem>>, vector<64x384xf32>
    %45 = arith.truncf %44 : vector<64x384xf32> to vector<64x384xbf16>
    %cst_21 = arith.constant dense<0.000000e+00> : vector<64x32xf32>
    %46 = tpu.matmul %45, %19, %cst_21 {dimension_numbers = #tpu.dot_dimension_numbers<[1], [0], [0], [1], [0, 0, 1, 1], [], []>} : vector<64x384xbf16>, vector<384x32xbf16>, vector<64x32xf32> -> vector<64x32xf32>
    %47 = vector.broadcast %20 : vector<1x32xf32> to vector<64x32xf32>
    %48 = arith.addf %46, %47 : vector<64x32xf32>
    %cst_22 = arith.constant 0.000000e+00 : f32
    %49 = vector.broadcast %cst_22 : f32 to vector<64x32xf32>
    %50 = arith.maximumf %48, %49 : vector<64x32xf32>
    %c0_23 = arith.constant 0 : index
    %c0_24 = arith.constant 0 : index
    %c0_25 = arith.constant 0 : index
    %51 = vector.load %arg4[%c0_23, %c0_24, %c0_25] : memref<9x96x32xbf16, #tpu.memory_space<vmem>>, vector<1x96x32xbf16>
    %52 = vector.shape_cast %51 : vector<1x96x32xbf16> to vector<96x32xbf16>
    %c0_26 = arith.constant 0 : index
    %c0_27 = arith.constant 0 : index
    %c0_28 = arith.constant 0 : index
    %53 = vector.load %arg5[%c0_26, %c0_27, %c0_28] : memref<9x1x32xf32, #tpu.memory_space<vmem>>, vector<1x1x32xf32>
    %54 = vector.shape_cast %53 : vector<1x1x32xf32> to vector<1x32xf32>
    %55 = vector.extract_strided_slice %16 {offsets = [2, 0], sizes = [62, 1], strides = [1, 1]} : vector<64x1xi32> to vector<62x1xi32>
    %c2_i32_29 = arith.constant 2 : i32
    %56 = vector.broadcast %c2_i32_29 : i32 to vector<62x1xi32>
    %57 = arith.cmpi slt, %55, %56 : vector<62x1xi32>
    %58 = vector.extract_strided_slice %50 {offsets = [0, 0], sizes = [62, 32], strides = [1, 1]} : vector<64x32xf32> to vector<62x32xf32>
    %cst_30 = arith.constant 0.000000e+00 : f32
    %59 = vector.shape_cast %57 : vector<62x1xi1> to vector<62x1xi1>
    %60 = vector.broadcast %59 : vector<62x1xi1> to vector<62x32xi1>
    %61 = vector.broadcast %cst_30 : f32 to vector<62x32xf32>
    %62 = arith.select %60, %61, %58 : vector<62x32xi1>, vector<62x32xf32>
    %c2_31 = arith.constant 2 : index
    %c0_32 = arith.constant 0 : index
    %63 = vector.load %arg16[%c2_31, %c0_32] : memref<64x384xf32, #tpu.memory_space<vmem>>, vector<62x32xf32>
    tpu.vector_store %arg16[%c2_31, %c0_32], %62 {strides = array<i32>} : memref<64x384xf32, #tpu.memory_space<vmem>>, vector<62x32xf32>,
    %cst_33 = arith.constant 0.000000e+00 : f32
    %64 = vector.broadcast %cst_33 : f32 to vector<2x32xf32>
    %c0_34 = arith.constant 0 : index
    %c0_35 = arith.constant 0 : index
    %65 = vector.load %arg16[%c0_34, %c0_35] : memref<64x384xf32, #tpu.memory_space<vmem>>, vector<2x32xf32>
    tpu.vector_store %arg16[%c0_34, %c0_35], %64 {strides = array<i32>} : memref<64x384xf32, #tpu.memory_space<vmem>>, vector<2x32xf32>,
    %66 = vector.extract_strided_slice %16 {offsets = [1, 0], sizes = [63, 1], strides = [1, 1]} : vector<64x1xi32> to vector<63x1xi32>
    %c1_i32_36 = arith.constant 1 : i32
    %67 = vector.broadcast %c1_i32_36 : i32 to vector<63x1xi32>
    %68 = arith.cmpi slt, %66, %67 : vector<63x1xi32>
    %69 = vector.extract_strided_slice %50 {offsets = [0, 0], sizes = [63, 32], strides = [1, 1]} : vector<64x32xf32> to vector<63x32xf32>
    %cst_37 = arith.constant 0.000000e+00 : f32
    %70 = vector.shape_cast %68 : vector<63x1xi1> to vector<63x1xi1>
    %71 = vector.broadcast %70 : vector<63x1xi1> to vector<63x32xi1>
    %72 = vector.broadcast %cst_37 : f32 to vector<63x32xf32>
    %73 = arith.select %71, %72, %69 : vector<63x32xi1>, vector<63x32xf32>
    %c1_38 = arith.constant 1 : index
    %c32 = arith.constant 32 : index
    %74 = vector.load %arg16[%c1_38, %c32] : memref<64x384xf32, #tpu.memory_space<vmem>>, vector<63x32xf32>
    tpu.vector_store %arg16[%c1_38, %c32], %73 {strides = array<i32>} : memref<64x384xf32, #tpu.memory_space<vmem>>, vector<63x32xf32>,
    %cst_39 = arith.constant 0.000000e+00 : f32
    %75 = vector.broadcast %cst_39 : f32 to vector<1x32xf32>
    %c0_40 = arith.constant 0 : index
    %c32_41 = arith.constant 32 : index
    %76 = vector.load %arg16[%c0_40, %c32_41] : memref<64x384xf32, #tpu.memory_space<vmem>>, vector<1x32xf32>
    tpu.vector_store %arg16[%c0_40, %c32_41], %75 {strides = array<i32>} : memref<64x384xf32, #tpu.memory_space<vmem>>, vector<1x32xf32>,
    %c0_42 = arith.constant 0 : index
    %c64 = arith.constant 64 : index
    %77 = vector.load %arg16[%c0_42, %c64] : memref<64x384xf32, #tpu.memory_space<vmem>>, vector<64x32xf32>
    tpu.vector_store %arg16[%c0_42, %c64], %50 {strides = array<i32>} : memref<64x384xf32, #tpu.memory_space<vmem>>, vector<64x32xf32>,
    %c0_43 = arith.constant 0 : index
    %c0_44 = arith.constant 0 : index
    %78 = vector.load %arg16[%c0_43, %c0_44] : memref<64x384xf32, #tpu.memory_space<vmem>>, vector<64x96xf32>
    %79 = arith.truncf %78 : vector<64x96xf32> to vector<64x96xbf16>
    %cst_45 = arith.constant dense<0.000000e+00> : vector<64x32xf32>
    %80 = tpu.matmul %79, %52, %cst_45 {dimension_numbers = #tpu.dot_dimension_numbers<[1], [0], [0], [1], [0, 0, 1, 1], [], []>} : vector<64x96xbf16>, vector<96x32xbf16>, vector<64x32xf32> -> vector<64x32xf32>
    %81 = vector.broadcast %54 : vector<1x32xf32> to vector<64x32xf32>
    %82 = arith.addf %80, %81 : vector<64x32xf32>
    %cst_46 = arith.constant 0.000000e+00 : f32
    %83 = vector.broadcast %cst_46 : f32 to vector<64x32xf32>
    %84 = arith.maximumf %82, %83 : vector<64x32xf32>
    %85 = arith.addf %84, %50 : vector<64x32xf32>
    %c1_47 = arith.constant 1 : index
    %c0_48 = arith.constant 0 : index
    %c0_49 = arith.constant 0 : index
    %86 = vector.load %arg4[%c1_47, %c0_48, %c0_49] : memref<9x96x32xbf16, #tpu.memory_space<vmem>>, vector<1x96x32xbf16>
    %87 = vector.shape_cast %86 : vector<1x96x32xbf16> to vector<96x32xbf16>
    %c1_50 = arith.constant 1 : index
    %c0_51 = arith.constant 0 : index
    %c0_52 = arith.constant 0 : index
    %88 = vector.load %arg5[%c1_50, %c0_51, %c0_52] : memref<9x1x32xf32, #tpu.memory_space<vmem>>, vector<1x1x32xf32>
    %89 = vector.shape_cast %88 : vector<1x1x32xf32> to vector<1x32xf32>
    %90 = vector.extract_strided_slice %16 {offsets = [6, 0], sizes = [58, 1], strides = [1, 1]} : vector<64x1xi32> to vector<58x1xi32>
    %c6_i32 = arith.constant 6 : i32
    %91 = vector.broadcast %c6_i32 : i32 to vector<58x1xi32>
    %92 = arith.cmpi slt, %90, %91 : vector<58x1xi32>
    %93 = vector.extract_strided_slice %85 {offsets = [0, 0], sizes = [58, 32], strides = [1, 1]} : vector<64x32xf32> to vector<58x32xf32>
    %cst_53 = arith.constant 0.000000e+00 : f32
    %94 = vector.shape_cast %92 : vector<58x1xi1> to vector<58x1xi1>
    %95 = vector.broadcast %94 : vector<58x1xi1> to vector<58x32xi1>
    %96 = vector.broadcast %cst_53 : f32 to vector<58x32xf32>
    %97 = arith.select %95, %96, %93 : vector<58x32xi1>, vector<58x32xf32>
    %c6 = arith.constant 6 : index
    %c0_54 = arith.constant 0 : index
    %98 = vector.load %arg16[%c6, %c0_54] : memref<64x384xf32, #tpu.memory_space<vmem>>, vector<58x32xf32>
    tpu.vector_store %arg16[%c6, %c0_54], %97 {strides = array<i32>} : memref<64x384xf32, #tpu.memory_space<vmem>>, vector<58x32xf32>,
    %cst_55 = arith.constant 0.000000e+00 : f32
    %99 = vector.broadcast %cst_55 : f32 to vector<6x32xf32>
    %c0_56 = arith.constant 0 : index
    %c0_57 = arith.constant 0 : index
    %100 = vector.load %arg16[%c0_56, %c0_57] : memref<64x384xf32, #tpu.memory_space<vmem>>, vector<6x32xf32>
    tpu.vector_store %arg16[%c0_56, %c0_57], %99 {strides = array<i32>} : memref<64x384xf32, #tpu.memory_space<vmem>>, vector<6x32xf32>,
    %101 = vector.extract_strided_slice %16 {offsets = [3, 0], sizes = [61, 1], strides = [1, 1]} : vector<64x1xi32> to vector<61x1xi32>
    %c3_i32 = arith.constant 3 : i32
    %102 = vector.broadcast %c3_i32 : i32 to vector<61x1xi32>
    %103 = arith.cmpi slt, %101, %102 : vector<61x1xi32>
    %104 = vector.extract_strided_slice %85 {offsets = [0, 0], sizes = [61, 32], strides = [1, 1]} : vector<64x32xf32> to vector<61x32xf32>
    %cst_58 = arith.constant 0.000000e+00 : f32
    %105 = vector.shape_cast %103 : vector<61x1xi1> to vector<61x1xi1>
    %106 = vector.broadcast %105 : vector<61x1xi1> to vector<61x32xi1>
    %107 = vector.broadcast %cst_58 : f32 to vector<61x32xf32>
    %108 = arith.select %106, %107, %104 : vector<61x32xi1>, vector<61x32xf32>
    %c3 = arith.constant 3 : index
    %c32_59 = arith.constant 32 : index
    %109 = vector.load %arg16[%c3, %c32_59] : memref<64x384xf32, #tpu.memory_space<vmem>>, vector<61x32xf32>
    tpu.vector_store %arg16[%c3, %c32_59], %108 {strides = array<i32>} : memref<64x384xf32, #tpu.memory_space<vmem>>, vector<61x32xf32>,
    %cst_60 = arith.constant 0.000000e+00 : f32
    %110 = vector.broadcast %cst_60 : f32 to vector<3x32xf32>
    %c0_61 = arith.constant 0 : index
    %c32_62 = arith.constant 32 : index
    %111 = vector.load %arg16[%c0_61, %c32_62] : memref<64x384xf32, #tpu.memory_space<vmem>>, vector<3x32xf32>
    tpu.vector_store %arg16[%c0_61, %c32_62], %110 {strides = array<i32>} : memref<64x384xf32, #tpu.memory_space<vmem>>, vector<3x32xf32>,
    %c0_63 = arith.constant 0 : index
    %c64_64 = arith.constant 64 : index
    %112 = vector.load %arg16[%c0_63, %c64_64] : memref<64x384xf32, #tpu.memory_space<vmem>>, vector<64x32xf32>
    tpu.vector_store %arg16[%c0_63, %c64_64], %85 {strides = array<i32>} : memref<64x384xf32, #tpu.memory_space<vmem>>, vector<64x32xf32>,
    %c0_65 = arith.constant 0 : index
    %c0_66 = arith.constant 0 : index
    %113 = vector.load %arg16[%c0_65, %c0_66] : memref<64x384xf32, #tpu.memory_space<vmem>>, vector<64x96xf32>
    %114 = arith.truncf %113 : vector<64x96xf32> to vector<64x96xbf16>
    %cst_67 = arith.constant dense<0.000000e+00> : vector<64x32xf32>
    %115 = tpu.matmul %114, %87, %cst_67 {dimension_numbers = #tpu.dot_dimension_numbers<[1], [0], [0], [1], [0, 0, 1, 1], [], []>} : vector<64x96xbf16>, vector<96x32xbf16>, vector<64x32xf32> -> vector<64x32xf32>
    %116 = vector.broadcast %89 : vector<1x32xf32> to vector<64x32xf32>
    %117 = arith.addf %115, %116 : vector<64x32xf32>
    %cst_68 = arith.constant 0.000000e+00 : f32
    %118 = vector.broadcast %cst_68 : f32 to vector<64x32xf32>
    %119 = arith.maximumf %117, %118 : vector<64x32xf32>
    %120 = arith.addf %119, %85 : vector<64x32xf32>
    %c2_69 = arith.constant 2 : index
    %c0_70 = arith.constant 0 : index
    %c0_71 = arith.constant 0 : index
    %121 = vector.load %arg4[%c2_69, %c0_70, %c0_71] : memref<9x96x32xbf16, #tpu.memory_space<vmem>>, vector<1x96x32xbf16>
    %122 = vector.shape_cast %121 : vector<1x96x32xbf16> to vector<96x32xbf16>
    %c2_72 = arith.constant 2 : index
    %c0_73 = arith.constant 0 : index
    %c0_74 = arith.constant 0 : index
    %123 = vector.load %arg5[%c2_72, %c0_73, %c0_74] : memref<9x1x32xf32, #tpu.memory_space<vmem>>, vector<1x1x32xf32>
    %124 = vector.shape_cast %123 : vector<1x1x32xf32> to vector<1x32xf32>
    %125 = vector.extract_strided_slice %16 {offsets = [18, 0], sizes = [46, 1], strides = [1, 1]} : vector<64x1xi32> to vector<46x1xi32>
    %c18_i32 = arith.constant 18 : i32
    %126 = vector.broadcast %c18_i32 : i32 to vector<46x1xi32>
    %127 = arith.cmpi slt, %125, %126 : vector<46x1xi32>
    %128 = vector.extract_strided_slice %120 {offsets = [0, 0], sizes = [46, 32], strides = [1, 1]} : vector<64x32xf32> to vector<46x32xf32>
    %cst_75 = arith.constant 0.000000e+00 : f32
    %129 = vector.shape_cast %127 : vector<46x1xi1> to vector<46x1xi1>
    %130 = vector.broadcast %129 : vector<46x1xi1> to vector<46x32xi1>
    %131 = vector.broadcast %cst_75 : f32 to vector<46x32xf32>
    %132 = arith.select %130, %131, %128 : vector<46x32xi1>, vector<46x32xf32>
    %c18 = arith.constant 18 : index
    %c0_76 = arith.constant 0 : index
    %133 = vector.load %arg16[%c18, %c0_76] : memref<64x384xf32, #tpu.memory_space<vmem>>, vector<46x32xf32>
    tpu.vector_store %arg16[%c18, %c0_76], %132 {strides = array<i32>} : memref<64x384xf32, #tpu.memory_space<vmem>>, vector<46x32xf32>,
    %cst_77 = arith.constant 0.000000e+00 : f32
    %134 = vector.broadcast %cst_77 : f32 to vector<18x32xf32>
    %c0_78 = arith.constant 0 : index
    %c0_79 = arith.constant 0 : index
    %135 = vector.load %arg16[%c0_78, %c0_79] : memref<64x384xf32, #tpu.memory_space<vmem>>, vector<18x32xf32>
    tpu.vector_store %arg16[%c0_78, %c0_79], %134 {strides = array<i32>} : memref<64x384xf32, #tpu.memory_space<vmem>>, vector<18x32xf32>,
    %136 = vector.extract_strided_slice %16 {offsets = [9, 0], sizes = [55, 1], strides = [1, 1]} : vector<64x1xi32> to vector<55x1xi32>
    %c9_i32 = arith.constant 9 : i32
    %137 = vector.broadcast %c9_i32 : i32 to vector<55x1xi32>
    %138 = arith.cmpi slt, %136, %137 : vector<55x1xi32>
    %139 = vector.extract_strided_slice %120 {offsets = [0, 0], sizes = [55, 32], strides = [1, 1]} : vector<64x32xf32> to vector<55x32xf32>
    %cst_80 = arith.constant 0.000000e+00 : f32
    %140 = vector.shape_cast %138 : vector<55x1xi1> to vector<55x1xi1>
    %141 = vector.broadcast %140 : vector<55x1xi1> to vector<55x32xi1>
    %142 = vector.broadcast %cst_80 : f32 to vector<55x32xf32>
    %143 = arith.select %141, %142, %139 : vector<55x32xi1>, vector<55x32xf32>
    %c9 = arith.constant 9 : index
    %c32_81 = arith.constant 32 : index
    %144 = vector.load %arg16[%c9, %c32_81] : memref<64x384xf32, #tpu.memory_space<vmem>>, vector<55x32xf32>
    tpu.vector_store %arg16[%c9, %c32_81], %143 {strides = array<i32>} : memref<64x384xf32, #tpu.memory_space<vmem>>, vector<55x32xf32>,
    %cst_82 = arith.constant 0.000000e+00 : f32
    %145 = vector.broadcast %cst_82 : f32 to vector<9x32xf32>
    %c0_83 = arith.constant 0 : index
    %c32_84 = arith.constant 32 : index
    %146 = vector.load %arg16[%c0_83, %c32_84] : memref<64x384xf32, #tpu.memory_space<vmem>>, vector<9x32xf32>
    tpu.vector_store %arg16[%c0_83, %c32_84], %145 {strides = array<i32>} : memref<64x384xf32, #tpu.memory_space<vmem>>, vector<9x32xf32>,
    %c0_85 = arith.constant 0 : index
    %c64_86 = arith.constant 64 : index
    %147 = vector.load %arg16[%c0_85, %c64_86] : memref<64x384xf32, #tpu.memory_space<vmem>>, vector<64x32xf32>
    tpu.vector_store %arg16[%c0_85, %c64_86], %120 {strides = array<i32>} : memref<64x384xf32, #tpu.memory_space<vmem>>, vector<64x32xf32>,
    %c0_87 = arith.constant 0 : index
    %c0_88 = arith.constant 0 : index
    %148 = vector.load %arg16[%c0_87, %c0_88] : memref<64x384xf32, #tpu.memory_space<vmem>>, vector<64x96xf32>
    %149 = arith.truncf %148 : vector<64x96xf32> to vector<64x96xbf16>
    %cst_89 = arith.constant dense<0.000000e+00> : vector<64x32xf32>
    %150 = tpu.matmul %149, %122, %cst_89 {dimension_numbers = #tpu.dot_dimension_numbers<[1], [0], [0], [1], [0, 0, 1, 1], [], []>} : vector<64x96xbf16>, vector<96x32xbf16>, vector<64x32xf32> -> vector<64x32xf32>
    %151 = vector.broadcast %124 : vector<1x32xf32> to vector<64x32xf32>
    %152 = arith.addf %150, %151 : vector<64x32xf32>
    %cst_90 = arith.constant 0.000000e+00 : f32
    %153 = vector.broadcast %cst_90 : f32 to vector<64x32xf32>
    %154 = arith.maximumf %152, %153 : vector<64x32xf32>
    %155 = arith.addf %154, %120 : vector<64x32xf32>
    %c3_91 = arith.constant 3 : index
    %c0_92 = arith.constant 0 : index
    %c0_93 = arith.constant 0 : index
    %156 = vector.load %arg4[%c3_91, %c0_92, %c0_93] : memref<9x96x32xbf16, #tpu.memory_space<vmem>>, vector<1x96x32xbf16>
    %157 = vector.shape_cast %156 : vector<1x96x32xbf16> to vector<96x32xbf16>
    %c3_94 = arith.constant 3 : index
    %c0_95 = arith.constant 0 : index
    %c0_96 = arith.constant 0 : index
    %158 = vector.load %arg5[%c3_94, %c0_95, %c0_96] : memref<9x1x32xf32, #tpu.memory_space<vmem>>, vector<1x1x32xf32>
    %159 = vector.shape_cast %158 : vector<1x1x32xf32> to vector<1x32xf32>
    %160 = vector.extract_strided_slice %16 {offsets = [2, 0], sizes = [62, 1], strides = [1, 1]} : vector<64x1xi32> to vector<62x1xi32>
    %c2_i32_97 = arith.constant 2 : i32
    %161 = vector.broadcast %c2_i32_97 : i32 to vector<62x1xi32>
    %162 = arith.cmpi slt, %160, %161 : vector<62x1xi32>
    %163 = vector.extract_strided_slice %155 {offsets = [0, 0], sizes = [62, 32], strides = [1, 1]} : vector<64x32xf32> to vector<62x32xf32>
    %cst_98 = arith.constant 0.000000e+00 : f32
    %164 = vector.shape_cast %162 : vector<62x1xi1> to vector<62x1xi1>
    %165 = vector.broadcast %164 : vector<62x1xi1> to vector<62x32xi1>
    %166 = vector.broadcast %cst_98 : f32 to vector<62x32xf32>
    %167 = arith.select %165, %166, %163 : vector<62x32xi1>, vector<62x32xf32>
    %c2_99 = arith.constant 2 : index
    %c0_100 = arith.constant 0 : index
    %168 = vector.load %arg16[%c2_99, %c0_100] : memref<64x384xf32, #tpu.memory_space<vmem>>, vector<62x32xf32>
    tpu.vector_store %arg16[%c2_99, %c0_100], %167 {strides = array<i32>} : memref<64x384xf32, #tpu.memory_space<vmem>>, vector<62x32xf32>,
    %cst_101 = arith.constant 0.000000e+00 : f32
    %169 = vector.broadcast %cst_101 : f32 to vector<2x32xf32>
    %c0_102 = arith.constant 0 : index
    %c0_103 = arith.constant 0 : index
    %170 = vector.load %arg16[%c0_102, %c0_103] : memref<64x384xf32, #tpu.memory_space<vmem>>, vector<2x32xf32>
    tpu.vector_store %arg16[%c0_102, %c0_103], %169 {strides = array<i32>} : memref<64x384xf32, #tpu.memory_space<vmem>>, vector<2x32xf32>,
    %171 = vector.extract_strided_slice %16 {offsets = [1, 0], sizes = [63, 1], strides = [1, 1]} : vector<64x1xi32> to vector<63x1xi32>
    %c1_i32_104 = arith.constant 1 : i32
    %172 = vector.broadcast %c1_i32_104 : i32 to vector<63x1xi32>
    %173 = arith.cmpi slt, %171, %172 : vector<63x1xi32>
    %174 = vector.extract_strided_slice %155 {offsets = [0, 0], sizes = [63, 32], strides = [1, 1]} : vector<64x32xf32> to vector<63x32xf32>
    %cst_105 = arith.constant 0.000000e+00 : f32
    %175 = vector.shape_cast %173 : vector<63x1xi1> to vector<63x1xi1>
    %176 = vector.broadcast %175 : vector<63x1xi1> to vector<63x32xi1>
    %177 = vector.broadcast %cst_105 : f32 to vector<63x32xf32>
    %178 = arith.select %176, %177, %174 : vector<63x32xi1>, vector<63x32xf32>
    %c1_106 = arith.constant 1 : index
    %c32_107 = arith.constant 32 : index
    %179 = vector.load %arg16[%c1_106, %c32_107] : memref<64x384xf32, #tpu.memory_space<vmem>>, vector<63x32xf32>
    tpu.vector_store %arg16[%c1_106, %c32_107], %178 {strides = array<i32>} : memref<64x384xf32, #tpu.memory_space<vmem>>, vector<63x32xf32>,
    %cst_108 = arith.constant 0.000000e+00 : f32
    %180 = vector.broadcast %cst_108 : f32 to vector<1x32xf32>
    %c0_109 = arith.constant 0 : index
    %c32_110 = arith.constant 32 : index
    %181 = vector.load %arg16[%c0_109, %c32_110] : memref<64x384xf32, #tpu.memory_space<vmem>>, vector<1x32xf32>
    tpu.vector_store %arg16[%c0_109, %c32_110], %180 {strides = array<i32>} : memref<64x384xf32, #tpu.memory_space<vmem>>, vector<1x32xf32>,
    %c0_111 = arith.constant 0 : index
    %c64_112 = arith.constant 64 : index
    %182 = vector.load %arg16[%c0_111, %c64_112] : memref<64x384xf32, #tpu.memory_space<vmem>>, vector<64x32xf32>
    tpu.vector_store %arg16[%c0_111, %c64_112], %155 {strides = array<i32>} : memref<64x384xf32, #tpu.memory_space<vmem>>, vector<64x32xf32>,
    %c0_113 = arith.constant 0 : index
    %c0_114 = arith.constant 0 : index
    %183 = vector.load %arg16[%c0_113, %c0_114] : memref<64x384xf32, #tpu.memory_space<vmem>>, vector<64x96xf32>
    %184 = arith.truncf %183 : vector<64x96xf32> to vector<64x96xbf16>
    %cst_115 = arith.constant dense<0.000000e+00> : vector<64x32xf32>
    %185 = tpu.matmul %184, %157, %cst_115 {dimension_numbers = #tpu.dot_dimension_numbers<[1], [0], [0], [1], [0, 0, 1, 1], [], []>} : vector<64x96xbf16>, vector<96x32xbf16>, vector<64x32xf32> -> vector<64x32xf32>
    %186 = vector.broadcast %159 : vector<1x32xf32> to vector<64x32xf32>
    %187 = arith.addf %185, %186 : vector<64x32xf32>
    %cst_116 = arith.constant 0.000000e+00 : f32
    %188 = vector.broadcast %cst_116 : f32 to vector<64x32xf32>
    %189 = arith.maximumf %187, %188 : vector<64x32xf32>
    %190 = arith.addf %189, %155 : vector<64x32xf32>
    %c4 = arith.constant 4 : index
    %c0_117 = arith.constant 0 : index
    %c0_118 = arith.constant 0 : index
    %191 = vector.load %arg4[%c4, %c0_117, %c0_118] : memref<9x96x32xbf16, #tpu.memory_space<vmem>>, vector<1x96x32xbf16>
    %192 = vector.shape_cast %191 : vector<1x96x32xbf16> to vector<96x32xbf16>
    %c4_119 = arith.constant 4 : index
    %c0_120 = arith.constant 0 : index
    %c0_121 = arith.constant 0 : index
    %193 = vector.load %arg5[%c4_119, %c0_120, %c0_121] : memref<9x1x32xf32, #tpu.memory_space<vmem>>, vector<1x1x32xf32>
    %194 = vector.shape_cast %193 : vector<1x1x32xf32> to vector<1x32xf32>
    %195 = vector.extract_strided_slice %16 {offsets = [6, 0], sizes = [58, 1], strides = [1, 1]} : vector<64x1xi32> to vector<58x1xi32>
    %c6_i32_122 = arith.constant 6 : i32
    %196 = vector.broadcast %c6_i32_122 : i32 to vector<58x1xi32>
    %197 = arith.cmpi slt, %195, %196 : vector<58x1xi32>
    %198 = vector.extract_strided_slice %190 {offsets = [0, 0], sizes = [58, 32], strides = [1, 1]} : vector<64x32xf32> to vector<58x32xf32>
    %cst_123 = arith.constant 0.000000e+00 : f32
    %199 = vector.shape_cast %197 : vector<58x1xi1> to vector<58x1xi1>
    %200 = vector.broadcast %199 : vector<58x1xi1> to vector<58x32xi1>
    %201 = vector.broadcast %cst_123 : f32 to vector<58x32xf32>
    %202 = arith.select %200, %201, %198 : vector<58x32xi1>, vector<58x32xf32>
    %c6_124 = arith.constant 6 : index
    %c0_125 = arith.constant 0 : index
    %203 = vector.load %arg16[%c6_124, %c0_125] : memref<64x384xf32, #tpu.memory_space<vmem>>, vector<58x32xf32>
    tpu.vector_store %arg16[%c6_124, %c0_125], %202 {strides = array<i32>} : memref<64x384xf32, #tpu.memory_space<vmem>>, vector<58x32xf32>,
    %cst_126 = arith.constant 0.000000e+00 : f32
    %204 = vector.broadcast %cst_126 : f32 to vector<6x32xf32>
    %c0_127 = arith.constant 0 : index
    %c0_128 = arith.constant 0 : index
    %205 = vector.load %arg16[%c0_127, %c0_128] : memref<64x384xf32, #tpu.memory_space<vmem>>, vector<6x32xf32>
    tpu.vector_store %arg16[%c0_127, %c0_128], %204 {strides = array<i32>} : memref<64x384xf32, #tpu.memory_space<vmem>>, vector<6x32xf32>,
    %206 = vector.extract_strided_slice %16 {offsets = [3, 0], sizes = [61, 1], strides = [1, 1]} : vector<64x1xi32> to vector<61x1xi32>
    %c3_i32_129 = arith.constant 3 : i32
    %207 = vector.broadcast %c3_i32_129 : i32 to vector<61x1xi32>
    %208 = arith.cmpi slt, %206, %207 : vector<61x1xi32>
    %209 = vector.extract_strided_slice %190 {offsets = [0, 0], sizes = [61, 32], strides = [1, 1]} : vector<64x32xf32> to vector<61x32xf32>
    %cst_130 = arith.constant 0.000000e+00 : f32
    %210 = vector.shape_cast %208 : vector<61x1xi1> to vector<61x1xi1>
    %211 = vector.broadcast %210 : vector<61x1xi1> to vector<61x32xi1>
    %212 = vector.broadcast %cst_130 : f32 to vector<61x32xf32>
    %213 = arith.select %211, %212, %209 : vector<61x32xi1>, vector<61x32xf32>
    %c3_131 = arith.constant 3 : index
    %c32_132 = arith.constant 32 : index
    %214 = vector.load %arg16[%c3_131, %c32_132] : memref<64x384xf32, #tpu.memory_space<vmem>>, vector<61x32xf32>
    tpu.vector_store %arg16[%c3_131, %c32_132], %213 {strides = array<i32>} : memref<64x384xf32, #tpu.memory_space<vmem>>, vector<61x32xf32>,
    %cst_133 = arith.constant 0.000000e+00 : f32
    %215 = vector.broadcast %cst_133 : f32 to vector<3x32xf32>
    %c0_134 = arith.constant 0 : index
    %c32_135 = arith.constant 32 : index
    %216 = vector.load %arg16[%c0_134, %c32_135] : memref<64x384xf32, #tpu.memory_space<vmem>>, vector<3x32xf32>
    tpu.vector_store %arg16[%c0_134, %c32_135], %215 {strides = array<i32>} : memref<64x384xf32, #tpu.memory_space<vmem>>, vector<3x32xf32>,
    %c0_136 = arith.constant 0 : index
    %c64_137 = arith.constant 64 : index
    %217 = vector.load %arg16[%c0_136, %c64_137] : memref<64x384xf32, #tpu.memory_space<vmem>>, vector<64x32xf32>
    tpu.vector_store %arg16[%c0_136, %c64_137], %190 {strides = array<i32>} : memref<64x384xf32, #tpu.memory_space<vmem>>, vector<64x32xf32>,
    %c0_138 = arith.constant 0 : index
    %c0_139 = arith.constant 0 : index
    %218 = vector.load %arg16[%c0_138, %c0_139] : memref<64x384xf32, #tpu.memory_space<vmem>>, vector<64x96xf32>
    %219 = arith.truncf %218 : vector<64x96xf32> to vector<64x96xbf16>
    %cst_140 = arith.constant dense<0.000000e+00> : vector<64x32xf32>
    %220 = tpu.matmul %219, %192, %cst_140 {dimension_numbers = #tpu.dot_dimension_numbers<[1], [0], [0], [1], [0, 0, 1, 1], [], []>} : vector<64x96xbf16>, vector<96x32xbf16>, vector<64x32xf32> -> vector<64x32xf32>
    %221 = vector.broadcast %194 : vector<1x32xf32> to vector<64x32xf32>
    %222 = arith.addf %220, %221 : vector<64x32xf32>
    %cst_141 = arith.constant 0.000000e+00 : f32
    %223 = vector.broadcast %cst_141 : f32 to vector<64x32xf32>
    %224 = arith.maximumf %222, %223 : vector<64x32xf32>
    %225 = arith.addf %224, %190 : vector<64x32xf32>
    %c5 = arith.constant 5 : index
    %c0_142 = arith.constant 0 : index
    %c0_143 = arith.constant 0 : index
    %226 = vector.load %arg4[%c5, %c0_142, %c0_143] : memref<9x96x32xbf16, #tpu.memory_space<vmem>>, vector<1x96x32xbf16>
    %227 = vector.shape_cast %226 : vector<1x96x32xbf16> to vector<96x32xbf16>
    %c5_144 = arith.constant 5 : index
    %c0_145 = arith.constant 0 : index
    %c0_146 = arith.constant 0 : index
    %228 = vector.load %arg5[%c5_144, %c0_145, %c0_146] : memref<9x1x32xf32, #tpu.memory_space<vmem>>, vector<1x1x32xf32>
    %229 = vector.shape_cast %228 : vector<1x1x32xf32> to vector<1x32xf32>
    %230 = vector.extract_strided_slice %16 {offsets = [18, 0], sizes = [46, 1], strides = [1, 1]} : vector<64x1xi32> to vector<46x1xi32>
    %c18_i32_147 = arith.constant 18 : i32
    %231 = vector.broadcast %c18_i32_147 : i32 to vector<46x1xi32>
    %232 = arith.cmpi slt, %230, %231 : vector<46x1xi32>
    %233 = vector.extract_strided_slice %225 {offsets = [0, 0], sizes = [46, 32], strides = [1, 1]} : vector<64x32xf32> to vector<46x32xf32>
    %cst_148 = arith.constant 0.000000e+00 : f32
    %234 = vector.shape_cast %232 : vector<46x1xi1> to vector<46x1xi1>
    %235 = vector.broadcast %234 : vector<46x1xi1> to vector<46x32xi1>
    %236 = vector.broadcast %cst_148 : f32 to vector<46x32xf32>
    %237 = arith.select %235, %236, %233 : vector<46x32xi1>, vector<46x32xf32>
    %c18_149 = arith.constant 18 : index
    %c0_150 = arith.constant 0 : index
    %238 = vector.load %arg16[%c18_149, %c0_150] : memref<64x384xf32, #tpu.memory_space<vmem>>, vector<46x32xf32>
    tpu.vector_store %arg16[%c18_149, %c0_150], %237 {strides = array<i32>} : memref<64x384xf32, #tpu.memory_space<vmem>>, vector<46x32xf32>,
    %cst_151 = arith.constant 0.000000e+00 : f32
    %239 = vector.broadcast %cst_151 : f32 to vector<18x32xf32>
    %c0_152 = arith.constant 0 : index
    %c0_153 = arith.constant 0 : index
    %240 = vector.load %arg16[%c0_152, %c0_153] : memref<64x384xf32, #tpu.memory_space<vmem>>, vector<18x32xf32>
    tpu.vector_store %arg16[%c0_152, %c0_153], %239 {strides = array<i32>} : memref<64x384xf32, #tpu.memory_space<vmem>>, vector<18x32xf32>,
    %241 = vector.extract_strided_slice %16 {offsets = [9, 0], sizes = [55, 1], strides = [1, 1]} : vector<64x1xi32> to vector<55x1xi32>
    %c9_i32_154 = arith.constant 9 : i32
    %242 = vector.broadcast %c9_i32_154 : i32 to vector<55x1xi32>
    %243 = arith.cmpi slt, %241, %242 : vector<55x1xi32>
    %244 = vector.extract_strided_slice %225 {offsets = [0, 0], sizes = [55, 32], strides = [1, 1]} : vector<64x32xf32> to vector<55x32xf32>
    %cst_155 = arith.constant 0.000000e+00 : f32
    %245 = vector.shape_cast %243 : vector<55x1xi1> to vector<55x1xi1>
    %246 = vector.broadcast %245 : vector<55x1xi1> to vector<55x32xi1>
    %247 = vector.broadcast %cst_155 : f32 to vector<55x32xf32>
    %248 = arith.select %246, %247, %244 : vector<55x32xi1>, vector<55x32xf32>
    %c9_156 = arith.constant 9 : index
    %c32_157 = arith.constant 32 : index
    %249 = vector.load %arg16[%c9_156, %c32_157] : memref<64x384xf32, #tpu.memory_space<vmem>>, vector<55x32xf32>
    tpu.vector_store %arg16[%c9_156, %c32_157], %248 {strides = array<i32>} : memref<64x384xf32, #tpu.memory_space<vmem>>, vector<55x32xf32>,
    %cst_158 = arith.constant 0.000000e+00 : f32
    %250 = vector.broadcast %cst_158 : f32 to vector<9x32xf32>
    %c0_159 = arith.constant 0 : index
    %c32_160 = arith.constant 32 : index
    %251 = vector.load %arg16[%c0_159, %c32_160] : memref<64x384xf32, #tpu.memory_space<vmem>>, vector<9x32xf32>
    tpu.vector_store %arg16[%c0_159, %c32_160], %250 {strides = array<i32>} : memref<64x384xf32, #tpu.memory_space<vmem>>, vector<9x32xf32>,
    %c0_161 = arith.constant 0 : index
    %c64_162 = arith.constant 64 : index
    %252 = vector.load %arg16[%c0_161, %c64_162] : memref<64x384xf32, #tpu.memory_space<vmem>>, vector<64x32xf32>
    tpu.vector_store %arg16[%c0_161, %c64_162], %225 {strides = array<i32>} : memref<64x384xf32, #tpu.memory_space<vmem>>, vector<64x32xf32>,
    %c0_163 = arith.constant 0 : index
    %c0_164 = arith.constant 0 : index
    %253 = vector.load %arg16[%c0_163, %c0_164] : memref<64x384xf32, #tpu.memory_space<vmem>>, vector<64x96xf32>
    %254 = arith.truncf %253 : vector<64x96xf32> to vector<64x96xbf16>
    %cst_165 = arith.constant dense<0.000000e+00> : vector<64x32xf32>
    %255 = tpu.matmul %254, %227, %cst_165 {dimension_numbers = #tpu.dot_dimension_numbers<[1], [0], [0], [1], [0, 0, 1, 1], [], []>} : vector<64x96xbf16>, vector<96x32xbf16>, vector<64x32xf32> -> vector<64x32xf32>
    %256 = vector.broadcast %229 : vector<1x32xf32> to vector<64x32xf32>
    %257 = arith.addf %255, %256 : vector<64x32xf32>
    %cst_166 = arith.constant 0.000000e+00 : f32
    %258 = vector.broadcast %cst_166 : f32 to vector<64x32xf32>
    %259 = arith.maximumf %257, %258 : vector<64x32xf32>
    %260 = arith.addf %259, %225 : vector<64x32xf32>
    %c6_167 = arith.constant 6 : index
    %c0_168 = arith.constant 0 : index
    %c0_169 = arith.constant 0 : index
    %261 = vector.load %arg4[%c6_167, %c0_168, %c0_169] : memref<9x96x32xbf16, #tpu.memory_space<vmem>>, vector<1x96x32xbf16>
    %262 = vector.shape_cast %261 : vector<1x96x32xbf16> to vector<96x32xbf16>
    %c6_170 = arith.constant 6 : index
    %c0_171 = arith.constant 0 : index
    %c0_172 = arith.constant 0 : index
    %263 = vector.load %arg5[%c6_170, %c0_171, %c0_172] : memref<9x1x32xf32, #tpu.memory_space<vmem>>, vector<1x1x32xf32>
    %264 = vector.shape_cast %263 : vector<1x1x32xf32> to vector<1x32xf32>
    %265 = vector.extract_strided_slice %16 {offsets = [2, 0], sizes = [62, 1], strides = [1, 1]} : vector<64x1xi32> to vector<62x1xi32>
    %c2_i32_173 = arith.constant 2 : i32
    %266 = vector.broadcast %c2_i32_173 : i32 to vector<62x1xi32>
    %267 = arith.cmpi slt, %265, %266 : vector<62x1xi32>
    %268 = vector.extract_strided_slice %260 {offsets = [0, 0], sizes = [62, 32], strides = [1, 1]} : vector<64x32xf32> to vector<62x32xf32>
    %cst_174 = arith.constant 0.000000e+00 : f32
    %269 = vector.shape_cast %267 : vector<62x1xi1> to vector<62x1xi1>
    %270 = vector.broadcast %269 : vector<62x1xi1> to vector<62x32xi1>
    %271 = vector.broadcast %cst_174 : f32 to vector<62x32xf32>
    %272 = arith.select %270, %271, %268 : vector<62x32xi1>, vector<62x32xf32>
    %c2_175 = arith.constant 2 : index
    %c0_176 = arith.constant 0 : index
    %273 = vector.load %arg16[%c2_175, %c0_176] : memref<64x384xf32, #tpu.memory_space<vmem>>, vector<62x32xf32>
    tpu.vector_store %arg16[%c2_175, %c0_176], %272 {strides = array<i32>} : memref<64x384xf32, #tpu.memory_space<vmem>>, vector<62x32xf32>,
    %cst_177 = arith.constant 0.000000e+00 : f32
    %274 = vector.broadcast %cst_177 : f32 to vector<2x32xf32>
    %c0_178 = arith.constant 0 : index
    %c0_179 = arith.constant 0 : index
    %275 = vector.load %arg16[%c0_178, %c0_179] : memref<64x384xf32, #tpu.memory_space<vmem>>, vector<2x32xf32>
    tpu.vector_store %arg16[%c0_178, %c0_179], %274 {strides = array<i32>} : memref<64x384xf32, #tpu.memory_space<vmem>>, vector<2x32xf32>,
    %276 = vector.extract_strided_slice %16 {offsets = [1, 0], sizes = [63, 1], strides = [1, 1]} : vector<64x1xi32> to vector<63x1xi32>
    %c1_i32_180 = arith.constant 1 : i32
    %277 = vector.broadcast %c1_i32_180 : i32 to vector<63x1xi32>
    %278 = arith.cmpi slt, %276, %277 : vector<63x1xi32>
    %279 = vector.extract_strided_slice %260 {offsets = [0, 0], sizes = [63, 32], strides = [1, 1]} : vector<64x32xf32> to vector<63x32xf32>
    %cst_181 = arith.constant 0.000000e+00 : f32
    %280 = vector.shape_cast %278 : vector<63x1xi1> to vector<63x1xi1>
    %281 = vector.broadcast %280 : vector<63x1xi1> to vector<63x32xi1>
    %282 = vector.broadcast %cst_181 : f32 to vector<63x32xf32>
    %283 = arith.select %281, %282, %279 : vector<63x32xi1>, vector<63x32xf32>
    %c1_182 = arith.constant 1 : index
    %c32_183 = arith.constant 32 : index
    %284 = vector.load %arg16[%c1_182, %c32_183] : memref<64x384xf32, #tpu.memory_space<vmem>>, vector<63x32xf32>
    tpu.vector_store %arg16[%c1_182, %c32_183], %283 {strides = array<i32>} : memref<64x384xf32, #tpu.memory_space<vmem>>, vector<63x32xf32>,
    %cst_184 = arith.constant 0.000000e+00 : f32
    %285 = vector.broadcast %cst_184 : f32 to vector<1x32xf32>
    %c0_185 = arith.constant 0 : index
    %c32_186 = arith.constant 32 : index
    %286 = vector.load %arg16[%c0_185, %c32_186] : memref<64x384xf32, #tpu.memory_space<vmem>>, vector<1x32xf32>
    tpu.vector_store %arg16[%c0_185, %c32_186], %285 {strides = array<i32>} : memref<64x384xf32, #tpu.memory_space<vmem>>, vector<1x32xf32>,
    %c0_187 = arith.constant 0 : index
    %c64_188 = arith.constant 64 : index
    %287 = vector.load %arg16[%c0_187, %c64_188] : memref<64x384xf32, #tpu.memory_space<vmem>>, vector<64x32xf32>
    tpu.vector_store %arg16[%c0_187, %c64_188], %260 {strides = array<i32>} : memref<64x384xf32, #tpu.memory_space<vmem>>, vector<64x32xf32>,
    %c0_189 = arith.constant 0 : index
    %c0_190 = arith.constant 0 : index
    %288 = vector.load %arg16[%c0_189, %c0_190] : memref<64x384xf32, #tpu.memory_space<vmem>>, vector<64x96xf32>
    %289 = arith.truncf %288 : vector<64x96xf32> to vector<64x96xbf16>
    %cst_191 = arith.constant dense<0.000000e+00> : vector<64x32xf32>
    %290 = tpu.matmul %289, %262, %cst_191 {dimension_numbers = #tpu.dot_dimension_numbers<[1], [0], [0], [1], [0, 0, 1, 1], [], []>} : vector<64x96xbf16>, vector<96x32xbf16>, vector<64x32xf32> -> vector<64x32xf32>
    %291 = vector.broadcast %264 : vector<1x32xf32> to vector<64x32xf32>
    %292 = arith.addf %290, %291 : vector<64x32xf32>
    %cst_192 = arith.constant 0.000000e+00 : f32
    %293 = vector.broadcast %cst_192 : f32 to vector<64x32xf32>
    %294 = arith.maximumf %292, %293 : vector<64x32xf32>
    %295 = arith.addf %294, %260 : vector<64x32xf32>
    %c7 = arith.constant 7 : index
    %c0_193 = arith.constant 0 : index
    %c0_194 = arith.constant 0 : index
    %296 = vector.load %arg4[%c7, %c0_193, %c0_194] : memref<9x96x32xbf16, #tpu.memory_space<vmem>>, vector<1x96x32xbf16>
    %297 = vector.shape_cast %296 : vector<1x96x32xbf16> to vector<96x32xbf16>
    %c7_195 = arith.constant 7 : index
    %c0_196 = arith.constant 0 : index
    %c0_197 = arith.constant 0 : index
    %298 = vector.load %arg5[%c7_195, %c0_196, %c0_197] : memref<9x1x32xf32, #tpu.memory_space<vmem>>, vector<1x1x32xf32>
    %299 = vector.shape_cast %298 : vector<1x1x32xf32> to vector<1x32xf32>
    %300 = vector.extract_strided_slice %16 {offsets = [6, 0], sizes = [58, 1], strides = [1, 1]} : vector<64x1xi32> to vector<58x1xi32>
    %c6_i32_198 = arith.constant 6 : i32
    %301 = vector.broadcast %c6_i32_198 : i32 to vector<58x1xi32>
    %302 = arith.cmpi slt, %300, %301 : vector<58x1xi32>
    %303 = vector.extract_strided_slice %295 {offsets = [0, 0], sizes = [58, 32], strides = [1, 1]} : vector<64x32xf32> to vector<58x32xf32>
    %cst_199 = arith.constant 0.000000e+00 : f32
    %304 = vector.shape_cast %302 : vector<58x1xi1> to vector<58x1xi1>
    %305 = vector.broadcast %304 : vector<58x1xi1> to vector<58x32xi1>
    %306 = vector.broadcast %cst_199 : f32 to vector<58x32xf32>
    %307 = arith.select %305, %306, %303 : vector<58x32xi1>, vector<58x32xf32>
    %c6_200 = arith.constant 6 : index
    %c0_201 = arith.constant 0 : index
    %308 = vector.load %arg16[%c6_200, %c0_201] : memref<64x384xf32, #tpu.memory_space<vmem>>, vector<58x32xf32>
    tpu.vector_store %arg16[%c6_200, %c0_201], %307 {strides = array<i32>} : memref<64x384xf32, #tpu.memory_space<vmem>>, vector<58x32xf32>,
    %cst_202 = arith.constant 0.000000e+00 : f32
    %309 = vector.broadcast %cst_202 : f32 to vector<6x32xf32>
    %c0_203 = arith.constant 0 : index
    %c0_204 = arith.constant 0 : index
    %310 = vector.load %arg16[%c0_203, %c0_204] : memref<64x384xf32, #tpu.memory_space<vmem>>, vector<6x32xf32>
    tpu.vector_store %arg16[%c0_203, %c0_204], %309 {strides = array<i32>} : memref<64x384xf32, #tpu.memory_space<vmem>>, vector<6x32xf32>,
    %311 = vector.extract_strided_slice %16 {offsets = [3, 0], sizes = [61, 1], strides = [1, 1]} : vector<64x1xi32> to vector<61x1xi32>
    %c3_i32_205 = arith.constant 3 : i32
    %312 = vector.broadcast %c3_i32_205 : i32 to vector<61x1xi32>
    %313 = arith.cmpi slt, %311, %312 : vector<61x1xi32>
    %314 = vector.extract_strided_slice %295 {offsets = [0, 0], sizes = [61, 32], strides = [1, 1]} : vector<64x32xf32> to vector<61x32xf32>
    %cst_206 = arith.constant 0.000000e+00 : f32
    %315 = vector.shape_cast %313 : vector<61x1xi1> to vector<61x1xi1>
    %316 = vector.broadcast %315 : vector<61x1xi1> to vector<61x32xi1>
    %317 = vector.broadcast %cst_206 : f32 to vector<61x32xf32>
    %318 = arith.select %316, %317, %314 : vector<61x32xi1>, vector<61x32xf32>
    %c3_207 = arith.constant 3 : index
    %c32_208 = arith.constant 32 : index
    %319 = vector.load %arg16[%c3_207, %c32_208] : memref<64x384xf32, #tpu.memory_space<vmem>>, vector<61x32xf32>
    tpu.vector_store %arg16[%c3_207, %c32_208], %318 {strides = array<i32>} : memref<64x384xf32, #tpu.memory_space<vmem>>, vector<61x32xf32>,
    %cst_209 = arith.constant 0.000000e+00 : f32
    %320 = vector.broadcast %cst_209 : f32 to vector<3x32xf32>
    %c0_210 = arith.constant 0 : index
    %c32_211 = arith.constant 32 : index
    %321 = vector.load %arg16[%c0_210, %c32_211] : memref<64x384xf32, #tpu.memory_space<vmem>>, vector<3x32xf32>
    tpu.vector_store %arg16[%c0_210, %c32_211], %320 {strides = array<i32>} : memref<64x384xf32, #tpu.memory_space<vmem>>, vector<3x32xf32>,
    %c0_212 = arith.constant 0 : index
    %c64_213 = arith.constant 64 : index
    %322 = vector.load %arg16[%c0_212, %c64_213] : memref<64x384xf32, #tpu.memory_space<vmem>>, vector<64x32xf32>
    tpu.vector_store %arg16[%c0_212, %c64_213], %295 {strides = array<i32>} : memref<64x384xf32, #tpu.memory_space<vmem>>, vector<64x32xf32>,
    %c0_214 = arith.constant 0 : index
    %c0_215 = arith.constant 0 : index
    %323 = vector.load %arg16[%c0_214, %c0_215] : memref<64x384xf32, #tpu.memory_space<vmem>>, vector<64x96xf32>
    %324 = arith.truncf %323 : vector<64x96xf32> to vector<64x96xbf16>
    %cst_216 = arith.constant dense<0.000000e+00> : vector<64x32xf32>
    %325 = tpu.matmul %324, %297, %cst_216 {dimension_numbers = #tpu.dot_dimension_numbers<[1], [0], [0], [1], [0, 0, 1, 1], [], []>} : vector<64x96xbf16>, vector<96x32xbf16>, vector<64x32xf32> -> vector<64x32xf32>
    %326 = vector.broadcast %299 : vector<1x32xf32> to vector<64x32xf32>
    %327 = arith.addf %325, %326 : vector<64x32xf32>
    %cst_217 = arith.constant 0.000000e+00 : f32
    %328 = vector.broadcast %cst_217 : f32 to vector<64x32xf32>
    %329 = arith.maximumf %327, %328 : vector<64x32xf32>
    %330 = arith.addf %329, %295 : vector<64x32xf32>
    %c8 = arith.constant 8 : index
    %c0_218 = arith.constant 0 : index
    %c0_219 = arith.constant 0 : index
    %331 = vector.load %arg4[%c8, %c0_218, %c0_219] : memref<9x96x32xbf16, #tpu.memory_space<vmem>>, vector<1x96x32xbf16>
    %332 = vector.shape_cast %331 : vector<1x96x32xbf16> to vector<96x32xbf16>
    %c8_220 = arith.constant 8 : index
    %c0_221 = arith.constant 0 : index
    %c0_222 = arith.constant 0 : index
    %333 = vector.load %arg5[%c8_220, %c0_221, %c0_222] : memref<9x1x32xf32, #tpu.memory_space<vmem>>, vector<1x1x32xf32>
    %334 = vector.shape_cast %333 : vector<1x1x32xf32> to vector<1x32xf32>
    %335 = vector.extract_strided_slice %16 {offsets = [18, 0], sizes = [46, 1], strides = [1, 1]} : vector<64x1xi32> to vector<46x1xi32>
    %c18_i32_223 = arith.constant 18 : i32
    %336 = vector.broadcast %c18_i32_223 : i32 to vector<46x1xi32>
    %337 = arith.cmpi slt, %335, %336 : vector<46x1xi32>
    %338 = vector.extract_strided_slice %330 {offsets = [0, 0], sizes = [46, 32], strides = [1, 1]} : vector<64x32xf32> to vector<46x32xf32>
    %cst_224 = arith.constant 0.000000e+00 : f32
    %339 = vector.shape_cast %337 : vector<46x1xi1> to vector<46x1xi1>
    %340 = vector.broadcast %339 : vector<46x1xi1> to vector<46x32xi1>
    %341 = vector.broadcast %cst_224 : f32 to vector<46x32xf32>
    %342 = arith.select %340, %341, %338 : vector<46x32xi1>, vector<46x32xf32>
    %c18_225 = arith.constant 18 : index
    %c0_226 = arith.constant 0 : index
    %343 = vector.load %arg16[%c18_225, %c0_226] : memref<64x384xf32, #tpu.memory_space<vmem>>, vector<46x32xf32>
    tpu.vector_store %arg16[%c18_225, %c0_226], %342 {strides = array<i32>} : memref<64x384xf32, #tpu.memory_space<vmem>>, vector<46x32xf32>,
    %cst_227 = arith.constant 0.000000e+00 : f32
    %344 = vector.broadcast %cst_227 : f32 to vector<18x32xf32>
    %c0_228 = arith.constant 0 : index
    %c0_229 = arith.constant 0 : index
    %345 = vector.load %arg16[%c0_228, %c0_229] : memref<64x384xf32, #tpu.memory_space<vmem>>, vector<18x32xf32>
    tpu.vector_store %arg16[%c0_228, %c0_229], %344 {strides = array<i32>} : memref<64x384xf32, #tpu.memory_space<vmem>>, vector<18x32xf32>,
    %346 = vector.extract_strided_slice %16 {offsets = [9, 0], sizes = [55, 1], strides = [1, 1]} : vector<64x1xi32> to vector<55x1xi32>
    %c9_i32_230 = arith.constant 9 : i32
    %347 = vector.broadcast %c9_i32_230 : i32 to vector<55x1xi32>
    %348 = arith.cmpi slt, %346, %347 : vector<55x1xi32>
    %349 = vector.extract_strided_slice %330 {offsets = [0, 0], sizes = [55, 32], strides = [1, 1]} : vector<64x32xf32> to vector<55x32xf32>
    %cst_231 = arith.constant 0.000000e+00 : f32
    %350 = vector.shape_cast %348 : vector<55x1xi1> to vector<55x1xi1>
    %351 = vector.broadcast %350 : vector<55x1xi1> to vector<55x32xi1>
    %352 = vector.broadcast %cst_231 : f32 to vector<55x32xf32>
    %353 = arith.select %351, %352, %349 : vector<55x32xi1>, vector<55x32xf32>
    %c9_232 = arith.constant 9 : index
    %c32_233 = arith.constant 32 : index
    %354 = vector.load %arg16[%c9_232, %c32_233] : memref<64x384xf32, #tpu.memory_space<vmem>>, vector<55x32xf32>
    tpu.vector_store %arg16[%c9_232, %c32_233], %353 {strides = array<i32>} : memref<64x384xf32, #tpu.memory_space<vmem>>, vector<55x32xf32>,
    %cst_234 = arith.constant 0.000000e+00 : f32
    %355 = vector.broadcast %cst_234 : f32 to vector<9x32xf32>
    %c0_235 = arith.constant 0 : index
    %c32_236 = arith.constant 32 : index
    %356 = vector.load %arg16[%c0_235, %c32_236] : memref<64x384xf32, #tpu.memory_space<vmem>>, vector<9x32xf32>
    tpu.vector_store %arg16[%c0_235, %c32_236], %355 {strides = array<i32>} : memref<64x384xf32, #tpu.memory_space<vmem>>, vector<9x32xf32>,
    %c0_237 = arith.constant 0 : index
    %c64_238 = arith.constant 64 : index
    %357 = vector.load %arg16[%c0_237, %c64_238] : memref<64x384xf32, #tpu.memory_space<vmem>>, vector<64x32xf32>
    tpu.vector_store %arg16[%c0_237, %c64_238], %330 {strides = array<i32>} : memref<64x384xf32, #tpu.memory_space<vmem>>, vector<64x32xf32>,
    %c0_239 = arith.constant 0 : index
    %c0_240 = arith.constant 0 : index
    %358 = vector.load %arg16[%c0_239, %c0_240] : memref<64x384xf32, #tpu.memory_space<vmem>>, vector<64x96xf32>
    %359 = arith.truncf %358 : vector<64x96xf32> to vector<64x96xbf16>
    %cst_241 = arith.constant dense<0.000000e+00> : vector<64x32xf32>
    %360 = tpu.matmul %359, %332, %cst_241 {dimension_numbers = #tpu.dot_dimension_numbers<[1], [0], [0], [1], [0, 0, 1, 1], [], []>} : vector<64x96xbf16>, vector<96x32xbf16>, vector<64x32xf32> -> vector<64x32xf32>
    %361 = vector.broadcast %334 : vector<1x32xf32> to vector<64x32xf32>
    %362 = arith.addf %360, %361 : vector<64x32xf32>
    %cst_242 = arith.constant 0.000000e+00 : f32
    %363 = vector.broadcast %cst_242 : f32 to vector<64x32xf32>
    %364 = arith.maximumf %362, %363 : vector<64x32xf32>
    %365 = arith.addf %364, %330 : vector<64x32xf32>
    %c0_243 = arith.constant 0 : index
    %c0_244 = arith.constant 0 : index
    %366 = vector.load %arg6[%c0_243, %c0_244] : memref<96x32xbf16, #tpu.memory_space<vmem>>, vector<96x32xbf16>
    %c0_245 = arith.constant 0 : index
    %c0_246 = arith.constant 0 : index
    %367 = vector.load %arg7[%c0_245, %c0_246] : memref<1x32xf32, #tpu.memory_space<vmem>>, vector<1x32xf32>
    %368 = vector.extract_strided_slice %16 {offsets = [2, 0], sizes = [62, 1], strides = [1, 1]} : vector<64x1xi32> to vector<62x1xi32>
    %c2_i32_247 = arith.constant 2 : i32
    %369 = vector.broadcast %c2_i32_247 : i32 to vector<62x1xi32>
    %370 = arith.cmpi slt, %368, %369 : vector<62x1xi32>
    %371 = vector.extract_strided_slice %365 {offsets = [0, 0], sizes = [62, 32], strides = [1, 1]} : vector<64x32xf32> to vector<62x32xf32>
    %cst_248 = arith.constant 0.000000e+00 : f32
    %372 = vector.shape_cast %370 : vector<62x1xi1> to vector<62x1xi1>
    %373 = vector.broadcast %372 : vector<62x1xi1> to vector<62x32xi1>
    %374 = vector.broadcast %cst_248 : f32 to vector<62x32xf32>
    %375 = arith.select %373, %374, %371 : vector<62x32xi1>, vector<62x32xf32>
    %c2_249 = arith.constant 2 : index
    %c0_250 = arith.constant 0 : index
    %376 = vector.load %arg16[%c2_249, %c0_250] : memref<64x384xf32, #tpu.memory_space<vmem>>, vector<62x32xf32>
    tpu.vector_store %arg16[%c2_249, %c0_250], %375 {strides = array<i32>} : memref<64x384xf32, #tpu.memory_space<vmem>>, vector<62x32xf32>,
    %cst_251 = arith.constant 0.000000e+00 : f32
    %377 = vector.broadcast %cst_251 : f32 to vector<2x32xf32>
    %c0_252 = arith.constant 0 : index
    %c0_253 = arith.constant 0 : index
    %378 = vector.load %arg16[%c0_252, %c0_253] : memref<64x384xf32, #tpu.memory_space<vmem>>, vector<2x32xf32>
    tpu.vector_store %arg16[%c0_252, %c0_253], %377 {strides = array<i32>} : memref<64x384xf32, #tpu.memory_space<vmem>>, vector<2x32xf32>,
    %379 = vector.extract_strided_slice %16 {offsets = [1, 0], sizes = [63, 1], strides = [1, 1]} : vector<64x1xi32> to vector<63x1xi32>
    %c1_i32_254 = arith.constant 1 : i32
    %380 = vector.broadcast %c1_i32_254 : i32 to vector<63x1xi32>
    %381 = arith.cmpi slt, %379, %380 : vector<63x1xi32>
    %382 = vector.extract_strided_slice %365 {offsets = [0, 0], sizes = [63, 32], strides = [1, 1]} : vector<64x32xf32> to vector<63x32xf32>
    %cst_255 = arith.constant 0.000000e+00 : f32
    %383 = vector.shape_cast %381 : vector<63x1xi1> to vector<63x1xi1>
    %384 = vector.broadcast %383 : vector<63x1xi1> to vector<63x32xi1>
    %385 = vector.broadcast %cst_255 : f32 to vector<63x32xf32>
    %386 = arith.select %384, %385, %382 : vector<63x32xi1>, vector<63x32xf32>
    %c1_256 = arith.constant 1 : index
    %c32_257 = arith.constant 32 : index
    %387 = vector.load %arg16[%c1_256, %c32_257] : memref<64x384xf32, #tpu.memory_space<vmem>>, vector<63x32xf32>
    tpu.vector_store %arg16[%c1_256, %c32_257], %386 {strides = array<i32>} : memref<64x384xf32, #tpu.memory_space<vmem>>, vector<63x32xf32>,
    %cst_258 = arith.constant 0.000000e+00 : f32
    %388 = vector.broadcast %cst_258 : f32 to vector<1x32xf32>
    %c0_259 = arith.constant 0 : index
    %c32_260 = arith.constant 32 : index
    %389 = vector.load %arg16[%c0_259, %c32_260] : memref<64x384xf32, #tpu.memory_space<vmem>>, vector<1x32xf32>
    tpu.vector_store %arg16[%c0_259, %c32_260], %388 {strides = array<i32>} : memref<64x384xf32, #tpu.memory_space<vmem>>, vector<1x32xf32>,
    %c0_261 = arith.constant 0 : index
    %c64_262 = arith.constant 64 : index
    %390 = vector.load %arg16[%c0_261, %c64_262] : memref<64x384xf32, #tpu.memory_space<vmem>>, vector<64x32xf32>
    tpu.vector_store %arg16[%c0_261, %c64_262], %365 {strides = array<i32>} : memref<64x384xf32, #tpu.memory_space<vmem>>, vector<64x32xf32>,
    %c0_263 = arith.constant 0 : index
    %c0_264 = arith.constant 0 : index
    %391 = vector.load %arg16[%c0_263, %c0_264] : memref<64x384xf32, #tpu.memory_space<vmem>>, vector<64x96xf32>
    %392 = arith.truncf %391 : vector<64x96xf32> to vector<64x96xbf16>
    %cst_265 = arith.constant dense<0.000000e+00> : vector<64x32xf32>
    %393 = tpu.matmul %392, %366, %cst_265 {dimension_numbers = #tpu.dot_dimension_numbers<[1], [0], [0], [1], [0, 0, 1, 1], [], []>} : vector<64x96xbf16>, vector<96x32xbf16>, vector<64x32xf32> -> vector<64x32xf32>
    %394 = vector.broadcast %367 : vector<1x32xf32> to vector<64x32xf32>
    %395 = arith.addf %393, %394 : vector<64x32xf32>
    %396 = arith.truncf %395 : vector<64x32xf32> to vector<64x32xbf16>
    %c0_266 = arith.constant 0 : index
    %c0_267 = arith.constant 0 : index
    %397 = vector.load %arg8[%c0_266, %c0_267] : memref<32x96xbf16, #tpu.memory_space<vmem>>, vector<32x96xbf16>
    %cst_268 = arith.constant dense<0.000000e+00> : vector<64x96xf32>
    %398 = tpu.matmul %396, %397, %cst_268 {dimension_numbers = #tpu.dot_dimension_numbers<[1], [0], [0], [1], [0, 0, 1, 1], [], []>} : vector<64x32xbf16>, vector<32x96xbf16>, vector<64x96xf32> -> vector<64x96xf32>
    %c0_269 = arith.constant 0 : index
    %c0_270 = arith.constant 0 : index
    %399 = vector.load %arg9[%c0_269, %c0_270] : memref<1x96xf32, #tpu.memory_space<vmem>>, vector<1x96xf32>
    %400 = vector.broadcast %399 : vector<1x96xf32> to vector<64x96xf32>
    %401 = arith.addf %398, %400 : vector<64x96xf32>
    %cst_271 = arith.constant 0.000000e+00 : f32
    %402 = vector.broadcast %cst_271 : f32 to vector<64x96xf32>
    %403 = arith.maximumf %401, %402 : vector<64x96xf32>
    %404 = arith.truncf %403 : vector<64x96xf32> to vector<64x96xbf16>
    %c0_272 = arith.constant 0 : index
    %c0_273 = arith.constant 0 : index
    %c0_274 = arith.constant 0 : index
    %405 = vector.load %arg10[%c0_272, %c0_273, %c0_274] : memref<1x96x96xbf16, #tpu.memory_space<vmem>>, vector<1x96x96xbf16>
    %406 = vector.shape_cast %405 : vector<1x96x96xbf16> to vector<96x96xbf16>
    %cst_275 = arith.constant dense<0.000000e+00> : vector<64x96xf32>
    %407 = tpu.matmul %404, %406, %cst_275 {dimension_numbers = #tpu.dot_dimension_numbers<[1], [0], [0], [1], [0, 0, 1, 1], [], []>} : vector<64x96xbf16>, vector<96x96xbf16>, vector<64x96xf32> -> vector<64x96xf32>
    %c0_276 = arith.constant 0 : index
    %c0_277 = arith.constant 0 : index
    %c0_278 = arith.constant 0 : index
    %408 = vector.load %arg11[%c0_276, %c0_277, %c0_278] : memref<1x1x96xf32, #tpu.memory_space<vmem>>, vector<1x1x96xf32>
    %409 = vector.shape_cast %408 : vector<1x1x96xf32> to vector<1x96xf32>
    %410 = vector.broadcast %409 : vector<1x96xf32> to vector<64x96xf32>
    %411 = arith.addf %407, %410 : vector<64x96xf32>
    %cst_279 = arith.constant 0.000000e+00 : f32
    %412 = vector.broadcast %cst_279 : f32 to vector<64x96xf32>
    %413 = arith.maximumf %411, %412 : vector<64x96xf32>
    %414 = arith.truncf %413 : vector<64x96xf32> to vector<64x96xbf16>
    %c0_280 = arith.constant 0 : index
    %c0_281 = arith.constant 0 : index
    %415 = vector.load %arg12[%c0_280, %c0_281] : memref<96x130xbf16, #tpu.memory_space<vmem>>, vector<96x130xbf16>
    %cst_282 = arith.constant dense<0.000000e+00> : vector<64x130xf32>
    %416 = tpu.matmul %414, %415, %cst_282 {dimension_numbers = #tpu.dot_dimension_numbers<[1], [0], [0], [1], [0, 0, 1, 1], [], []>} : vector<64x96xbf16>, vector<96x130xbf16>, vector<64x130xf32> -> vector<64x130xf32>
    %c0_283 = arith.constant 0 : index
    %c0_284 = arith.constant 0 : index
    %417 = vector.load %arg13[%c0_283, %c0_284] : memref<1x130xf32, #tpu.memory_space<vmem>>, vector<1x130xf32>
    %418 = vector.broadcast %417 : vector<1x130xf32> to vector<64x130xf32>
    %419 = arith.addf %416, %418 : vector<64x130xf32>
    %420 = vector.extract_strided_slice %419 {offsets = [0, 0], sizes = [64, 128], strides = [1, 1]} : vector<64x130xf32> to vector<64x128xf32>
    %421 = vector.shape_cast %420 : vector<64x128xf32> to vector<2x32x128xf32>
    %c0_285 = arith.constant 0 : index
    %c0_286 = arith.constant 0 : index
    %c0_287 = arith.constant 0 : index
    %422 = vector.load %arg14[%c0_285, %c0_286, %c0_287] : memref<2x32x128xf32, #tpu.memory_space<vmem>>, vector<2x32x128xf32>
    tpu.vector_store %arg14[%c0_285, %c0_286, %c0_287], %421 {strides = array<i32>} : memref<2x32x128xf32, #tpu.memory_space<vmem>>, vector<2x32x128xf32>,
    %423 = vector.extract_strided_slice %419 {offsets = [0, 128], sizes = [64, 1], strides = [1, 1]} : vector<64x130xf32> to vector<64x1xf32>
    %424 = arith.negf %423 : vector<64x1xf32>
    %425 = math.exp %424 : vector<64x1xf32>
    %cst_288 = arith.constant 1.000000e+00 : f32
    %426 = vector.broadcast %cst_288 : f32 to vector<64x1xf32>
    %427 = arith.addf %426, %425 : vector<64x1xf32>
    %428 = arith.divf %426, %427 : vector<64x1xf32>
    %429 = vector.extract_strided_slice %419 {offsets = [0, 129], sizes = [64, 1], strides = [1, 1]} : vector<64x130xf32> to vector<64x1xf32>
    %430 = arith.negf %429 : vector<64x1xf32>
    %431 = math.exp %430 : vector<64x1xf32>
    %cst_289 = arith.constant 1.000000e+00 : f32
    %432 = vector.broadcast %cst_289 : f32 to vector<64x1xf32>
    %433 = arith.addf %432, %431 : vector<64x1xf32>
    %434 = arith.divf %432, %433 : vector<64x1xf32>
    %cst_290 = arith.constant 8.000000e+00 : f32
    %435 = vector.broadcast %cst_290 : f32 to vector<64x1xf32>
    %436 = arith.mulf %435, %434 : vector<64x1xf32>
    %cst_291 = arith.constant 0.000000e+00 : f32
    %437 = vector.broadcast %cst_291 : f32 to vector<64x6xf32>
    %438 = tpu.concatenate %428, %436, %437 in 1 : vector<64x1xf32>, vector<64x1xf32>, vector<64x6xf32> -> vector<64x8xf32>
    %439 = tpu.iota {dimensions = array<i32: 0>} : vector<8x8xi32>
    %440 = tpu.iota {dimensions = array<i32: 1>} : vector<8x8xi32>
    %441 = arith.cmpi eq, %439, %440 : vector<8x8xi32>
    %442 = arith.extui %441 : vector<8x8xi1> to vector<8x8xi32>
    %443 = arith.sitofp %442 : vector<8x8xi32> to vector<8x8xf32>
    %444 = vector.extract_strided_slice %438 {offsets = [0, 0], sizes = [32, 8], strides = [1, 1]} : vector<64x8xf32> to vector<32x8xf32>
    %cst_292 = arith.constant dense<0.000000e+00> : vector<8x32xf32>
    %445 = tpu.matmul %443, %444, %cst_292 {dimension_numbers = #tpu.dot_dimension_numbers<[1], [1], [0], [0], [0, 0, 1, 0], [], []>} : vector<8x8xf32>, vector<32x8xf32>, vector<8x32xf32> -> vector<8x32xf32>
    %c0_293 = arith.constant 0 : index
    %c0_294 = arith.constant 0 : index
    %c0_295 = arith.constant 0 : index
    %446 = vector.load %arg15[%c0_293, %c0_294, %c0_295] : memref<2x8x32xf32, #tpu.memory_space<vmem>>, vector<1x8x32xf32>
    %447 = vector.shape_cast %446 : vector<1x8x32xf32> to vector<8x32xf32>
    %448 = vector.shape_cast %445 : vector<8x32xf32> to vector<1x8x32xf32>
    tpu.vector_store %arg15[%c0_293, %c0_294, %c0_295], %448 {strides = array<i32>} : memref<2x8x32xf32, #tpu.memory_space<vmem>>, vector<1x8x32xf32>,
    %449 = vector.extract_strided_slice %438 {offsets = [32, 0], sizes = [32, 8], strides = [1, 1]} : vector<64x8xf32> to vector<32x8xf32>
    %cst_296 = arith.constant dense<0.000000e+00> : vector<8x32xf32>
    %450 = tpu.matmul %443, %449, %cst_296 {dimension_numbers = #tpu.dot_dimension_numbers<[1], [1], [0], [0], [0, 0, 1, 0], [], []>} : vector<8x8xf32>, vector<32x8xf32>, vector<8x32xf32> -> vector<8x32xf32>
    %c1_297 = arith.constant 1 : index
    %c0_298 = arith.constant 0 : index
    %c0_299 = arith.constant 0 : index
    %451 = vector.load %arg15[%c1_297, %c0_298, %c0_299] : memref<2x8x32xf32, #tpu.memory_space<vmem>>, vector<1x8x32xf32>
    %452 = vector.shape_cast %451 : vector<1x8x32xf32> to vector<8x32xf32>
    %453 = vector.shape_cast %450 : vector<8x32xf32> to vector<1x8x32xf32>
    tpu.vector_store %arg15[%c1_297, %c0_298, %c0_299], %453 {strides = array<i32>} : memref<2x8x32xf32, #tpu.memory_space<vmem>>, vector<1x8x32xf32>,
    return
  }
  func.func @transform_0(%arg0: i32) -> (i32, i32, i32) {
    %c0_i32 = arith.constant 0 : i32
    %c0_i32_0 = arith.constant 0 : i32
    %c0_i32_1 = arith.constant 0 : i32
    return %arg0, %c0_i32, %c0_i32_0 : i32, i32, i32
  }
  func.func @transform_1(%arg0: i32) -> (i32, i32) {
    %c0_i32 = arith.constant 0 : i32
    %c0_i32_0 = arith.constant 0 : i32
    %c0_i32_1 = arith.constant 0 : i32
    return %c0_i32, %c0_i32_0 : i32, i32
  }
  func.func @transform_2(%arg0: i32) -> (i32, i32) {
    %c0_i32 = arith.constant 0 : i32
    %c0_i32_0 = arith.constant 0 : i32
    %c0_i32_1 = arith.constant 0 : i32
    return %c0_i32, %c0_i32_0 : i32, i32
  }
  func.func @transform_3(%arg0: i32) -> (i32, i32, i32) {
    %c0_i32 = arith.constant 0 : i32
    %c0_i32_0 = arith.constant 0 : i32
    %c0_i32_1 = arith.constant 0 : i32
    %c0_i32_2 = arith.constant 0 : i32
    return %c0_i32, %c0_i32_0, %c0_i32_1 : i32, i32, i32
  }
  func.func @transform_4(%arg0: i32) -> (i32, i32, i32) {
    %c0_i32 = arith.constant 0 : i32
    %c0_i32_0 = arith.constant 0 : i32
    %c0_i32_1 = arith.constant 0 : i32
    %c0_i32_2 = arith.constant 0 : i32
    return %c0_i32, %c0_i32_0, %c0_i32_1 : i32, i32, i32
  }
  func.func @transform_5(%arg0: i32) -> (i32, i32) {
    %c0_i32 = arith.constant 0 : i32
    %c0_i32_0 = arith.constant 0 : i32
    %c0_i32_1 = arith.constant 0 : i32
    return %c0_i32, %c0_i32_0 : i32, i32
  }
  func.func @transform_6(%arg0: i32) -> (i32, i32) {
    %c0_i32 = arith.constant 0 : i32
    %c0_i32_0 = arith.constant 0 : i32
    %c0_i32_1 = arith.constant 0 : i32
    return %c0_i32, %c0_i32_0 : i32, i32
  }
  func.func @transform_7(%arg0: i32) -> (i32, i32) {
    %c0_i32 = arith.constant 0 : i32
    %c0_i32_0 = arith.constant 0 : i32
    %c0_i32_1 = arith.constant 0 : i32
    return %c0_i32, %c0_i32_0 : i32, i32
  }
  func.func @transform_8(%arg0: i32) -> (i32, i32) {
    %c0_i32 = arith.constant 0 : i32
    %c0_i32_0 = arith.constant 0 : i32
    %c0_i32_1 = arith.constant 0 : i32
    return %c0_i32, %c0_i32_0 : i32, i32
  }
  func.func @transform_9(%arg0: i32) -> (i32, i32, i32) {
    %c0_i32 = arith.constant 0 : i32
    %c0_i32_0 = arith.constant 0 : i32
    %c0_i32_1 = arith.constant 0 : i32
    %c0_i32_2 = arith.constant 0 : i32
    return %c0_i32, %c0_i32_0, %c0_i32_1 : i32, i32, i32
  }
  func.func @transform_10(%arg0: i32) -> (i32, i32, i32) {
    %c0_i32 = arith.constant 0 : i32
    %c0_i32_0 = arith.constant 0 : i32
    %c0_i32_1 = arith.constant 0 : i32
    %c0_i32_2 = arith.constant 0 : i32
    return %c0_i32, %c0_i32_0, %c0_i32_1 : i32, i32, i32
  }
  func.func @transform_11(%arg0: i32) -> (i32, i32) {
    %c0_i32 = arith.constant 0 : i32
    %c0_i32_0 = arith.constant 0 : i32
    %c0_i32_1 = arith.constant 0 : i32
    return %c0_i32, %c0_i32_0 : i32, i32
  }
  func.func @transform_12(%arg0: i32) -> (i32, i32) {
    %c0_i32 = arith.constant 0 : i32
    %c0_i32_0 = arith.constant 0 : i32
    %c0_i32_1 = arith.constant 0 : i32
    return %c0_i32, %c0_i32_0 : i32, i32
  }
  func.func @transform_13(%arg0: i32) -> (i32, i32, i32) {
    %c0_i32 = arith.constant 0 : i32
    %c0_i32_0 = arith.constant 0 : i32
    %c0_i32_1 = arith.constant 0 : i32
    return %arg0, %c0_i32, %c0_i32_0 : i32, i32, i32
  }
  func.func @transform_14(%arg0: i32) -> (i32, i32, i32) {
    %c0_i32 = arith.constant 0 : i32
    %c0_i32_0 = arith.constant 0 : i32
    %c0_i32_1 = arith.constant 0 : i32
    return %arg0, %c0_i32, %c0_i32_0 : i32, i32, i32
  }
}

</mosaic_0001>

<llo_original>
// kernel: rt_pitch_tracker_forward.1
$region0: #{rt_pitch_tracker_forward.1}
  #allocation0 [shape = 'u32[]', space=smem, size = 0x4, offset = 0x4, fixed_abs, tag = 'smem constant byte address 0x4 - core index']
  #allocation1 [shape = 'u32[72,128]{1,0:T(1,128)}', space=vmem, size = 0x9000, scoped, tag = 'internal scratch']
  #allocation2 [shape = 'f32[64,384]{1,0:T(8,128)}', space=vmem, size = 0x18000, scoped, tag = 'scratch operand']
  %s0 = inlined_call_operand.vmem [shape: f32[4,32,128], index: 0, kind: input, shape index: {}]
  %s1 = inlined_call_operand.vmem [shape: bf16[384,32], index: 1, kind: input, shape index: {}]
  %s2 = inlined_call_operand.vmem [shape: f32[1,32], index: 2, kind: input, shape index: {}]
  %s3 = inlined_call_operand.vmem [shape: bf16[9,96,32], index: 3, kind: input, shape index: {}]
  %s4 = inlined_call_operand.vmem [shape: f32[9,1,32], index: 4, kind: input, shape index: {}]
  %s5 = inlined_call_operand.vmem [shape: bf16[96,32], index: 5, kind: input, shape index: {}]
  %s6 = inlined_call_operand.vmem [shape: f32[1,32], index: 6, kind: input, shape index: {}]
  %s7 = inlined_call_operand.vmem [shape: bf16[32,96], index: 7, kind: input, shape index: {}]
  %s8 = inlined_call_operand.vmem [shape: f32[1,96], index: 8, kind: input, shape index: {}]
  %s9 = inlined_call_operand.vmem [shape: bf16[1,96,96], index: 9, kind: input, shape index: {}]
  %s10 = inlined_call_operand.vmem [shape: f32[1,1,96], index: 10, kind: input, shape index: {}]
  %s11 = inlined_call_operand.vmem [shape: bf16[96,130], index: 11, kind: input, shape index: {}]
  %s12 = inlined_call_operand.vmem [shape: f32[1,130], index: 12, kind: input, shape index: {}]
  %s13 = inlined_call_operand.hbm [shape: f32[4,32,128], index: 13, kind: output, shape index: {0}]
  %s14 = inlined_call_operand.vmem [shape: f32[4,8,32], index: 14, kind: output, shape index: {1}]
  %15 = xla_tuple %s13, %s14
  %s16 = sld [smem:[#allocation0]]
  $region93: #{rt_pitch_tracker_forward.1} parent=0
    _
  %s18 = ssub.s32 1, %s16
  %s19 = scalar_select 0, %s18, %s16
  $region1: #{rt_pitch_tracker_forward.1} parent=0
    #allocation3 [shape = 'u8[65536]{0}', space=vmem, size = 0x10000, scoped, tag = 'output window, operand 0']
    #allocation4 [shape = 's32[2]{0}', space=sflag, size = 0x8, scoped, tag = 'scoped memory for rt_pitch_tracker_forward.1']
    %20 = vsyncpa [#allocation4], 0
    %s21 = scalar_lea.sflag [#allocation4], 1
    %22 = vsyncpa %s21, 0
    loop: start=0, step=1, limit=4
    $region2: #{rt_pitch_tracker_forward.1} parent=1 // loop_pre_header
      _
    $region3: #{rt_pitch_tracker_forward.1} parent=1 // loop_header
      %s24 = sphi 0, %s28
      %p25 = scmp.ge.s32.totalorder %s24, 4
      %s34 = sphi 0, %s36
      %s37 = sphi 0, %s34
      %s38 = sphi 0, %s37
      %s54 = sphi 0, %s38
      %s58 = sphi 0, %s58
      %s60 = sphi 0, %s58
      %s61 = sphi 0, %s60
      %s75 = sphi 0, %s61
      %s79 = sphi 0, %s79
      %s81 = sphi 0, %s79
      %s82 = sphi 0, %s81
      %s96 = sphi 0, %s82
      %s100 = sphi 0, %s100
      %s102 = sphi 0, %s100
      %s103 = sphi 0, %s102
      %s117 = sphi 0, %s103
      %s121 = sphi 0, %s121
      %s123 = sphi 0, %s121
      %s124 = sphi 0, %s123
      %s138 = sphi 0, %s124
      %s142 = sphi 0, %s142
      %s144 = sphi 0, %s142
      %s145 = sphi 0, %s144
      %s159 = sphi 0, %s145
      %s163 = sphi 0, %s163
      %s165 = sphi 0, %s163
      %s166 = sphi 0, %s165
      %s180 = sphi 0, %s166
      %s184 = sphi 0, %s184
      %s186 = sphi 0, %s184
      %s187 = sphi 0, %s186
      %s201 = sphi 0, %s187
      %s205 = sphi 0, %s205
      %s207 = sphi 0, %s205
      %s208 = sphi 0, %s207
      %s222 = sphi 0, %s208
      %s226 = sphi 0, %s226
      %s228 = sphi 0, %s226
      %s229 = sphi 0, %s228
      %s243 = sphi 0, %s229
      %s247 = sphi 0, %s247
      %s249 = sphi 0, %s247
      %s250 = sphi 0, %s249
      %s264 = sphi 0, %s250
      %s268 = sphi 0, %s268
      %s270 = sphi 0, %s268
      %s271 = sphi 0, %s270
      %s285 = sphi 0, %s271
      %s289 = sphi 0, %s289
      %s291 = sphi 0, %s289
      %s292 = sphi 0, %s291
      %s306 = sphi 0, %s292
      %s312 = sphi 0, %s314
      %s315 = sphi 0, %s312
      %s316 = sphi 0, %s315
      %s332 = sphi 0, %s316
      %s338 = sphi 0, %s340
      %s341 = sphi 0, %s338
      %s342 = sphi 0, %s341
      %s358 = sphi 0, %s342
    $region4: #{rt_pitch_tracker_forward.1} parent=1 // loop_header_branch
      %27 = sbr.rel (%p25) target = $region8
    $region5: #{rt_pitch_tracker_forward.1} parent=1 // loop_body
      %s29 = ssub.s32 %s24, 1
      %s30 = ssub.s32 %s24, 2
      %s31 = sadd.s32 %s24, 1
      %s32 = ssub.s32 %s24, %s31
      %p33 = scmp.eq.s32.totalorder %s32, 0
      %s35 = sadd.s32 %s34, 1
      %s36 = scalar_select %p33, %s34, %s35
      %p39 = pneg %p33
      %p40 = scmp.eq.s32.totalorder %s24, 1
      %p41 = por %p39, %p40
      %p42 = scmp.ne.s32.totalorder %s34, %s37
      %p43 = scmp.eq.s32.totalorder %s24, 0
      %p44 = por %p42, %p43
      %p45 = scmp.ne.s32.totalorder %s34, %s37
      %p46 = scmp.eq.s32.totalorder %s29, 1
      %p47 = por %p45, %p46
      %p48 = scmp.ne.s32.totalorder %s37, %s38
      %p49 = scmp.eq.s32.totalorder %s29, 0
      %p50 = por %p48, %p49
      %p51 = scmp.ne.s32.totalorder %s37, %s38
      %p52 = scmp.eq.s32.totalorder %s30, 1
      %p53 = por %p51, %p52
      %p55 = scmp.ne.s32.totalorder %s38, %s54
      %p56 = scmp.eq.s32.totalorder %s30, 0
      %p57 = por %p55, %p56
      %s59 = sadd.s32 %s58, 1
      %p62 = scmp.eq.s32.totalorder %s24, 1
      %p63 = scmp.ne.s32.totalorder %s58, %s60
      %p64 = scmp.eq.s32.totalorder %s24, 0
      %p65 = por %p63, %p64
      %p66 = scmp.ne.s32.totalorder %s58, %s60
      %p67 = scmp.eq.s32.totalorder %s29, 1
      %p68 = por %p66, %p67
      %p69 = scmp.ne.s32.totalorder %s60, %s61
      %p70 = scmp.eq.s32.totalorder %s29, 0
      %p71 = por %p69, %p70
      %p72 = scmp.ne.s32.totalorder %s60, %s61
      %p73 = scmp.eq.s32.totalorder %s30, 1
      %p74 = por %p72, %p73
      %p76 = scmp.ne.s32.totalorder %s61, %s75
      %p77 = scmp.eq.s32.totalorder %s30, 0
      %p78 = por %p76, %p77
      %s80 = sadd.s32 %s79, 1
      %p83 = scmp.eq.s32.totalorder %s24, 1
      %p84 = scmp.ne.s32.totalorder %s79, %s81
      %p85 = scmp.eq.s32.totalorder %s24, 0
      %p86 = por %p84, %p85
      %p87 = scmp.ne.s32.totalorder %s79, %s81
      %p88 = scmp.eq.s32.totalorder %s29, 1
      %p89 = por %p87, %p88
      %p90 = scmp.ne.s32.totalorder %s81, %s82
      %p91 = scmp.eq.s32.totalorder %s29, 0
      %p92 = por %p90, %p91
      %p93 = scmp.ne.s32.totalorder %s81, %s82
      %p94 = scmp.eq.s32.totalorder %s30, 1
      %p95 = por %p93, %p94
      %p97 = scmp.ne.s32.totalorder %s82, %s96
      %p98 = scmp.eq.s32.totalorder %s30, 0
      %p99 = por %p97, %p98
      %s101 = sadd.s32 %s100, 1
      %p104 = scmp.eq.s32.totalorder %s24, 1
      %p105 = scmp.ne.s32.totalorder %s100, %s102
      %p106 = scmp.eq.s32.totalorder %s24, 0
      %p107 = por %p105, %p106
      %p108 = scmp.ne.s32.totalorder %s100, %s102
      %p109 = scmp.eq.s32.totalorder %s29, 1
      %p110 = por %p108, %p109
      %p111 = scmp.ne.s32.totalorder %s102, %s103
      %p112 = scmp.eq.s32.totalorder %s29, 0
      %p113 = por %p111, %p112
      %p114 = scmp.ne.s32.totalorder %s102, %s103
      %p115 = scmp.eq.s32.totalorder %s30, 1
      %p116 = por %p114, %p115
      %p118 = scmp.ne.s32.totalorder %s103, %s117
      %p119 = scmp.eq.s32.totalorder %s30, 0
      %p120 = por %p118, %p119
      %s122 = sadd.s32 %s121, 1
      %p125 = scmp.eq.s32.totalorder %s24, 1
      %p126 = scmp.ne.s32.totalorder %s121, %s123
      %p127 = scmp.eq.s32.totalorder %s24, 0
      %p128 = por %p126, %p127
      %p129 = scmp.ne.s32.totalorder %s121, %s123
      %p130 = scmp.eq.s32.totalorder %s29, 1
      %p131 = por %p129, %p130
      %p132 = scmp.ne.s32.totalorder %s123, %s124
      %p133 = scmp.eq.s32.totalorder %s29, 0
      %p134 = por %p132, %p133
      %p135 = scmp.ne.s32.totalorder %s123, %s124
      %p136 = scmp.eq.s32.totalorder %s30, 1
      %p137 = por %p135, %p136
      %p139 = scmp.ne.s32.totalorder %s124, %s138
      %p140 = scmp.eq.s32.totalorder %s30, 0
      %p141 = por %p139, %p140
      %s143 = sadd.s32 %s142, 1
      %p146 = scmp.eq.s32.totalorder %s24, 1
      %p147 = scmp.ne.s32.totalorder %s142, %s144
      %p148 = scmp.eq.s32.totalorder %s24, 0
      %p149 = por %p147, %p148
      %p150 = scmp.ne.s32.totalorder %s142, %s144
      %p151 = scmp.eq.s32.totalorder %s29, 1
      %p152 = por %p150, %p151
      %p153 = scmp.ne.s32.totalorder %s144, %s145
      %p154 = scmp.eq.s32.totalorder %s29, 0
      %p155 = por %p153, %p154
      %p156 = scmp.ne.s32.totalorder %s144, %s145
      %p157 = scmp.eq.s32.totalorder %s30, 1
      %p158 = por %p156, %p157
      %p160 = scmp.ne.s32.totalorder %s145, %s159
      %p161 = scmp.eq.s32.totalorder %s30, 0
      %p162 = por %p160, %p161
      %s164 = sadd.s32 %s163, 1
      %p167 = scmp.eq.s32.totalorder %s24, 1
      %p168 = scmp.ne.s32.totalorder %s163, %s165
      %p169 = scmp.eq.s32.totalorder %s24, 0
      %p170 = por %p168, %p169
      %p171 = scmp.ne.s32.totalorder %s163, %s165
      %p172 = scmp.eq.s32.totalorder %s29, 1
      %p173 = por %p171, %p172
      %p174 = scmp.ne.s32.totalorder %s165, %s166
      %p175 = scmp.eq.s32.totalorder %s29, 0
      %p176 = por %p174, %p175
      %p177 = scmp.ne.s32.totalorder %s165, %s166
      %p178 = scmp.eq.s32.totalorder %s30, 1
      %p179 = por %p177, %p178
      %p181 = scmp.ne.s32.totalorder %s166, %s180
      %p182 = scmp.eq.s32.totalorder %s30, 0
      %p183 = por %p181, %p182
      %s185 = sadd.s32 %s184, 1
      %p188 = scmp.eq.s32.totalorder %s24, 1
      %p189 = scmp.ne.s32.totalorder %s184, %s186
      %p190 = scmp.eq.s32.totalorder %s24, 0
      %p191 = por %p189, %p190
      %p192 = scmp.ne.s32.totalorder %s184, %s186
      %p193 = scmp.eq.s32.totalorder %s29, 1
      %p194 = por %p192, %p193
      %p195 = scmp.ne.s32.totalorder %s186, %s187
      %p196 = scmp.eq.s32.totalorder %s29, 0
      %p197 = por %p195, %p196
      %p198 = scmp.ne.s32.totalorder %s186, %s187
      %p199 = scmp.eq.s32.totalorder %s30, 1
      %p200 = por %p198, %p199
      %p202 = scmp.ne.s32.totalorder %s187, %s201
      %p203 = scmp.eq.s32.totalorder %s30, 0
      %p204 = por %p202, %p203
      %s206 = sadd.s32 %s205, 1
      %p209 = scmp.eq.s32.totalorder %s24, 1
      %p210 = scmp.ne.s32.totalorder %s205, %s207
      %p211 = scmp.eq.s32.totalorder %s24, 0
      %p212 = por %p210, %p211
      %p213 = scmp.ne.s32.totalorder %s205, %s207
      %p214 = scmp.eq.s32.totalorder %s29, 1
      %p215 = por %p213, %p214
      %p216 = scmp.ne.s32.totalorder %s207, %s208
      %p217 = scmp.eq.s32.totalorder %s29, 0
      %p218 = por %p216, %p217
      %p219 = scmp.ne.s32.totalorder %s207, %s208
      %p220 = scmp.eq.s32.totalorder %s30, 1
      %p221 = por %p219, %p220
      %p223 = scmp.ne.s32.totalorder %s208, %s222
      %p224 = scmp.eq.s32.totalorder %s30, 0
      %p225 = por %p223, %p224
      %s227 = sadd.s32 %s226, 1
      %p230 = scmp.eq.s32.totalorder %s24, 1
      %p231 = scmp.ne.s32.totalorder %s226, %s228
      %p232 = scmp.eq.s32.totalorder %s24, 0
      %p233 = por %p231, %p232
      %p234 = scmp.ne.s32.totalorder %s226, %s228
      %p235 = scmp.eq.s32.totalorder %s29, 1
      %p236 = por %p234, %p235
      %p237 = scmp.ne.s32.totalorder %s228, %s229
      %p238 = scmp.eq.s32.totalorder %s29, 0
      %p239 = por %p237, %p238
      %p240 = scmp.ne.s32.totalorder %s228, %s229
      %p241 = scmp.eq.s32.totalorder %s30, 1
      %p242 = por %p240, %p241
      %p244 = scmp.ne.s32.totalorder %s229, %s243
      %p245 = scmp.eq.s32.totalorder %s30, 0
      %p246 = por %p244, %p245
      %s248 = sadd.s32 %s247, 1
      %p251 = scmp.eq.s32.totalorder %s24, 1
      %p252 = scmp.ne.s32.totalorder %s247, %s249
      %p253 = scmp.eq.s32.totalorder %s24, 0
      %p254 = por %p252, %p253
      %p255 = scmp.ne.s32.totalorder %s247, %s249
      %p256 = scmp.eq.s32.totalorder %s29, 1
      %p257 = por %p255, %p256
      %p258 = scmp.ne.s32.totalorder %s249, %s250
      %p259 = scmp.eq.s32.totalorder %s29, 0
      %p260 = por %p258, %p259
      %p261 = scmp.ne.s32.totalorder %s249, %s250
      %p262 = scmp.eq.s32.totalorder %s30, 1
      %p263 = por %p261, %p262
      %p265 = scmp.ne.s32.totalorder %s250, %s264
      %p266 = scmp.eq.s32.totalorder %s30, 0
      %p267 = por %p265, %p266
      %s269 = sadd.s32 %s268, 1
      %p272 = scmp.eq.s32.totalorder %s24, 1
      %p273 = scmp.ne.s32.totalorder %s268, %s270
      %p274 = scmp.eq.s32.totalorder %s24, 0
      %p275 = por %p273, %p274
      %p276 = scmp.ne.s32.totalorder %s268, %s270
      %p277 = scmp.eq.s32.totalorder %s29, 1
      %p278 = por %p276, %p277
      %p279 = scmp.ne.s32.totalorder %s270, %s271
      %p280 = scmp.eq.s32.totalorder %s29, 0
      %p281 = por %p279, %p280
      %p282 = scmp.ne.s32.totalorder %s270, %s271
      %p283 = scmp.eq.s32.totalorder %s30, 1
      %p284 = por %p282, %p283
      %p286 = scmp.ne.s32.totalorder %s271, %s285
      %p287 = scmp.eq.s32.totalorder %s30, 0
      %p288 = por %p286, %p287
      %s290 = sadd.s32 %s289, 1
      %p293 = scmp.eq.s32.totalorder %s24, 1
      %p294 = scmp.ne.s32.totalorder %s289, %s291
      %p295 = scmp.eq.s32.totalorder %s24, 0
      %p296 = por %p294, %p295
      %p297 = scmp.ne.s32.totalorder %s289, %s291
      %p298 = scmp.eq.s32.totalorder %s29, 1
      %p299 = por %p297, %p298
      %p300 = scmp.ne.s32.totalorder %s291, %s292
      %p301 = scmp.eq.s32.totalorder %s29, 0
      %p302 = por %p300, %p301
      %p303 = scmp.ne.s32.totalorder %s291, %s292
      %p304 = scmp.eq.s32.totalorder %s30, 1
      %p305 = por %p303, %p304
      %p307 = scmp.ne.s32.totalorder %s292, %s306
      %p308 = scmp.eq.s32.totalorder %s30, 0
      %p309 = por %p307, %p308
      %s310 = ssub.s32 %s24, %s31
      %p311 = scmp.eq.s32.totalorder %s310, 0
      %s313 = sadd.s32 %s312, 1
      %s314 = scalar_select %p311, %s312, %s313
      %p317 = pneg %p311
      %p318 = scmp.eq.s32.totalorder %s24, 1
      %p319 = por %p317, %p318
      %p320 = scmp.ne.s32.totalorder %s312, %s315
      %p321 = scmp.eq.s32.totalorder %s24, 0
      %p322 = por %p320, %p321
      %p323 = scmp.ne.s32.totalorder %s312, %s315
      %p324 = scmp.eq.s32.totalorder %s29, 1
      %p325 = por %p323, %p324
      %p326 = scmp.ne.s32.totalorder %s315, %s316
      %p327 = scmp.eq.s32.totalorder %s29, 0
      %p328 = por %p326, %p327
      %p329 = scmp.ne.s32.totalorder %s315, %s316
      %p330 = scmp.eq.s32.totalorder %s30, 1
      %p331 = por %p329, %p330
      %p333 = scmp.ne.s32.totalorder %s316, %s332
      %p334 = scmp.eq.s32.totalorder %s30, 0
      %p335 = por %p333, %p334
      %s336 = ssub.s32 %s24, %s31
      %p337 = scmp.eq.s32.totalorder %s336, 0
      %s339 = sadd.s32 %s338, 1
      %s340 = scalar_select %p337, %s338, %s339
      %p343 = pneg %p337
      %p344 = scmp.eq.s32.totalorder %s24, 1
      %p345 = por %p343, %p344
      %p346 = scmp.ne.s32.totalorder %s338, %s341
      %p347 = scmp.eq.s32.totalorder %s24, 0
      %p348 = por %p346, %p347
      %p349 = scmp.ne.s32.totalorder %s338, %s341
      %p350 = scmp.eq.s32.totalorder %s29, 1
      %p351 = por %p349, %p350
      %p352 = scmp.ne.s32.totalorder %s341, %s342
      %p353 = scmp.eq.s32.totalorder %s29, 0
      %p354 = por %p352, %p353
      %p355 = scmp.ne.s32.totalorder %s341, %s342
      %p356 = scmp.eq.s32.totalorder %s30, 1
      %p357 = por %p355, %p356
      %p359 = scmp.ne.s32.totalorder %s342, %s358
      %p360 = scmp.eq.s32.totalorder %s30, 0
      %p361 = por %p359, %p360
      %p362 = scmp.le.s32.totalorder 1, %s24
      %p363 = scmp.lt.s32.totalorder %s24, 3
      %p364 = pnand %p362, %p363
      %p365 = pneg %p364
      // Predicated region
      $region9: #{rt_pitch_tracker_forward.1} parent=5 // pred_check
        _
      $region10: #{rt_pitch_tracker_forward.1} parent=5 // pred_check_branch
        %367 = sbr.rel (%p364) target = $region12
      $region11: #{rt_pitch_tracker_forward.1} parent=5 // pred_region
        %s368 = ssub.s32 %s24, 1
        // Predicated region
        $region13: #{rt_pitch_tracker_forward.1} parent=11 // pred_check
          %p369 = pneg %p71
        $region14: #{rt_pitch_tracker_forward.1} parent=11 // pred_check_branch
          %371 = sbr.rel (%p369) target = $region16
        $region15: #{rt_pitch_tracker_forward.1} parent=11 // pred_region
          _
        $region16: #{rt_pitch_tracker_forward.1} parent=11 // pred_fallthru
          _
        // Predicated region
        $region17: #{rt_pitch_tracker_forward.1} parent=11 // pred_check
          %p372 = pneg %p92
        $region18: #{rt_pitch_tracker_forward.1} parent=11 // pred_check_branch
          %374 = sbr.rel (%p372) target = $region20
        $region19: #{rt_pitch_tracker_forward.1} parent=11 // pred_region
          _
        $region20: #{rt_pitch_tracker_forward.1} parent=11 // pred_fallthru
          _
        // Predicated region
        $region21: #{rt_pitch_tracker_forward.1} parent=11 // pred_check
          %p375 = pneg %p113
        $region22: #{rt_pitch_tracker_forward.1} parent=11 // pred_check_branch
          %377 = sbr.rel (%p375) target = $region24
        $region23: #{rt_pitch_tracker_forward.1} parent=11 // pred_region
          _
        $region24: #{rt_pitch_tracker_forward.1} parent=11 // pred_fallthru
          _
        // Predicated region
        $region25: #{rt_pitch_tracker_forward.1} parent=11 // pred_check
          %p378 = pneg %p134
        $region26: #{rt_pitch_tracker_forward.1} parent=11 // pred_check_branch
          %380 = sbr.rel (%p378) target = $region28
        $region27: #{rt_pitch_tracker_forward.1} parent=11 // pred_region
          _
        $region28: #{rt_pitch_tracker_forward.1} parent=11 // pred_fallthru
          _
        // Predicated region
        $region29: #{rt_pitch_tracker_forward.1} parent=11 // pred_check
          %p381 = pneg %p155
        $region30: #{rt_pitch_tracker_forward.1} parent=11 // pred_check_branch
          %383 = sbr.rel (%p381) target = $region32
        $region31: #{rt_pitch_tracker_forward.1} parent=11 // pred_region
          _
        $region32: #{rt_pitch_tracker_forward.1} parent=11 // pred_fallthru
          _
        // Predicated region
        $region33: #{rt_pitch_tracker_forward.1} parent=11 // pred_check
          %p384 = pneg %p176
        $region34: #{rt_pitch_tracker_forward.1} parent=11 // pred_check_branch
          %386 = sbr.rel (%p384) target = $region36
        $region35: #{rt_pitch_tracker_forward.1} parent=11 // pred_region
          _
        $region36: #{rt_pitch_tracker_forward.1} parent=11 // pred_fallthru
          _
        // Predicated region
        $region37: #{rt_pitch_tracker_forward.1} parent=11 // pred_check
          %p387 = pneg %p197
        $region38: #{rt_pitch_tracker_forward.1} parent=11 // pred_check_branch
          %389 = sbr.rel (%p387) target = $region40
        $region39: #{rt_pitch_tracker_forward.1} parent=11 // pred_region
          _
        $region40: #{rt_pitch_tracker_forward.1} parent=11 // pred_fallthru
          _
        // Predicated region
        $region41: #{rt_pitch_tracker_forward.1} parent=11 // pred_check
          %p390 = pneg %p218
        $region42: #{rt_pitch_tracker_forward.1} parent=11 // pred_check_branch
          %392 = sbr.rel (%p390) target = $region44
        $region43: #{rt_pitch_tracker_forward.1} parent=11 // pred_region
          _
        $region44: #{rt_pitch_tracker_forward.1} parent=11 // pred_fallthru
          _
        // Predicated region
        $region45: #{rt_pitch_tracker_forward.1} parent=11 // pred_check
          %p393 = pneg %p239
        $region46: #{rt_pitch_tracker_forward.1} parent=11 // pred_check_branch
          %395 = sbr.rel (%p393) target = $region48
        $region47: #{rt_pitch_tracker_forward.1} parent=11 // pred_region
          _
        $region48: #{rt_pitch_tracker_forward.1} parent=11 // pred_fallthru
          _
        // Predicated region
        $region49: #{rt_pitch_tracker_forward.1} parent=11 // pred_check
          %p396 = pneg %p260
        $region50: #{rt_pitch_tracker_forward.1} parent=11 // pred_check_branch
          %398 = sbr.rel (%p396) target = $region52
        $region51: #{rt_pitch_tracker_forward.1} parent=11 // pred_region
          _
        $region52: #{rt_pitch_tracker_forward.1} parent=11 // pred_fallthru
          _
        // Predicated region
        $region53: #{rt_pitch_tracker_forward.1} parent=11 // pred_check
          %p399 = pneg %p281
        $region54: #{rt_pitch_tracker_forward.1} parent=11 // pred_check_branch
          %401 = sbr.rel (%p399) target = $region56
        $region55: #{rt_pitch_tracker_forward.1} parent=11 // pred_region
          _
        $region56: #{rt_pitch_tracker_forward.1} parent=11 // pred_fallthru
          _
        // Predicated region
        $region57: #{rt_pitch_tracker_forward.1} parent=11 // pred_check
          %p402 = pneg %p302
        $region58: #{rt_pitch_tracker_forward.1} parent=11 // pred_check_branch
          %404 = sbr.rel (%p402) target = $region60
        $region59: #{rt_pitch_tracker_forward.1} parent=11 // pred_region
          _
        $region60: #{rt_pitch_tracker_forward.1} parent=11 // pred_fallthru
          _
      $region12: #{rt_pitch_tracker_forward.1} parent=5 // pred_fallthru
        _
      %p405 = scmp.lt.s32.totalorder %s24, 2
      // Predicated region
      $region61: #{rt_pitch_tracker_forward.1} parent=5 // pred_check
        %p406 = pneg %p405
      $region62: #{rt_pitch_tracker_forward.1} parent=5 // pred_check_branch
        %408 = sbr.rel (%p406) target = $region64
      $region63: #{rt_pitch_tracker_forward.1} parent=5 // pred_region
        // Predicated region
        $region65: #{rt_pitch_tracker_forward.1} parent=63 // pred_check
          %p409 = pneg %p44
        $region66: #{rt_pitch_tracker_forward.1} parent=63 // pred_check_branch
          %411 = sbr.rel (%p409) target = $region68
        $region67: #{rt_pitch_tracker_forward.1} parent=63 // pred_region
          %s412 = smul.u32 2, %s24
          %p413 = scmp.lt.s32.totalorder %s412, 3
          %s414 = scalar_select %p413, %s412, 3
          %s415 = smul.addr %s414, 4
          %s416 = smul.addr %s415, 8
          %s417 = scalar_lea.vmem %s0, %s416
          %s418 = smul.u32 2, %s24
        $region68: #{rt_pitch_tracker_forward.1} parent=63 // pred_fallthru
          _
      $region64: #{rt_pitch_tracker_forward.1} parent=5 // pred_fallthru
        _
      %p419 = scmp.le.s32.totalorder 1, %s24
      %p420 = scmp.lt.s32.totalorder %s24, 3
      %p421 = pnand %p419, %p420
      %p422 = pneg %p421
      // Predicated region
      $region69: #{rt_pitch_tracker_forward.1} parent=5 // pred_check
        _
      $region70: #{rt_pitch_tracker_forward.1} parent=5 // pred_check_branch
        %424 = sbr.rel (%p421) target = $region72
      $region71: #{rt_pitch_tracker_forward.1} parent=5 // pred_region
        %s425 = ssub.s32 %s24, 1
        %s426 = smul.u32 2, %s29
        %p427 = scmp.lt.s32.totalorder %s426, 3
        %s428 = scalar_select %p427, %s426, 3
        %s429 = smul.addr %s428, 4
        %s430 = smul.addr %s429, 8
        %s431 = scalar_lea.vmem %s0, %s430
        %p432 = pneg %p50
        %p433 = pneg %p47
        %p434 = pneg %p71
        %p435 = pneg %p68
        %p436 = pneg %p92
        %p437 = pneg %p89
        %p438 = pneg %p113
        %p439 = pneg %p110
        %p440 = pneg %p134
        %p441 = pneg %p131
        %p442 = pneg %p155
        %p443 = pneg %p152
        %p444 = pneg %p176
        %p445 = pneg %p173
        %p446 = pneg %p197
        %p447 = pneg %p194
        %p448 = pneg %p218
        %p449 = pneg %p215
        %p450 = pneg %p239
        %p451 = pneg %p236
        %p452 = pneg %p260
        %p453 = pneg %p257
        %p454 = pneg %p281
        %p455 = pneg %p278
        %p456 = pneg %p302
        %p457 = pneg %p299
        %p458 = pneg %p328
        %p459 = pneg %p325
        %s460 = sand.u32 %s315, 1
        %s461 = scalar_lea.sflag [#allocation4], %s460
        %s462 = sand.u32 %s315, 1
        %s463 = smul.addr %s462, 64
        %s464 = scalar_lea.vmem [#allocation3], %s463
        %p465 = pneg %p354
        %p466 = pneg %p351
        %s467 = smul.u32 2, %s29
        %p468 = scmp.lt.s32.totalorder %s467, 3
        %s469 = scalar_select %p468, %s467, 3
        %s470 = smul.addr %s469, 8
        %s471 = scalar_lea.vmem %s14, %s470
        %s472 = smul.u32 2, %s29
        %p473 = scmp.lt.s32.totalorder %s472, 3
        %s474 = scalar_select %p473, %s472, 3
        %s475 = smul.addr %s474, 4
        %s476 = smul.addr %s475, 8
        %s477 = scalar_lea.vmem %s0, %s476
        %s478 = smul.u32 2, %s29
        %s479 = smul.u32 2, %s29
        %s480 = smul.u32 2, %s29
        %p481 = scmp.lt.s32.totalorder %s480, 3
        %s482 = scalar_select %p481, %s480, 3
        %s483 = smul.addr %s482, 8
        %s484 = scalar_lea.vmem %s14, %s483
        %s485 = smul.u32 2, %s29
        %v487 = vlaneseq
        %v488 = vshrl.u32 %v487, 7
        %v489 = vadd.s32 %v488, 8
        %v490 = vadd.s32 %v488, 16
        %v491 = vadd.s32 %v488, 24
        %v492 = vadd.s32 %v488, 32
        %v493 = vadd.s32 %v488, 40
        %v494 = vadd.s32 %v488, 48
        %v495 = vadd.s32 %v488, 56
        %vm496 = vcmp.lt.s32.totalorder %v488, 0
        %v497 = vsub.s32 0, %v488
        %v498 = vsel %vm496, %v497, %v488
        %v499 = vshrl.u32 %v498, 5
        %v500 = vand.u32 %v498, 31
        %v501 = vsub.s32 0, %v500
        %v502 = vsel %vm496, %v501, %v500
        %vm503 = vcmp.lt.s32.totalorder %v489, 0
        %v504 = vsub.s32 0, %v489
        %v505 = vsel %vm503, %v504, %v489
        %v506 = vshrl.u32 %v505, 5
        %v507 = vand.u32 %v505, 31
        %v508 = vsub.s32 0, %v507
        %v509 = vsel %vm503, %v508, %v507
        %vm510 = vcmp.lt.s32.totalorder %v490, 0
        %v511 = vsub.s32 0, %v490
        %v512 = vsel %vm510, %v511, %v490
        %v513 = vshrl.u32 %v512, 5
        %v514 = vand.u32 %v512, 31
        %v515 = vsub.s32 0, %v514
        %v516 = vsel %vm510, %v515, %v514
        %vm517 = vcmp.lt.s32.totalorder %v491, 0
        %v518 = vsub.s32 0, %v491
        %v519 = vsel %vm517, %v518, %v491
        %v520 = vshrl.u32 %v519, 5
        %v521 = vand.u32 %v519, 31
        %v522 = vsub.s32 0, %v521
        %v523 = vsel %vm517, %v522, %v521
        %vm524 = vcmp.lt.s32.totalorder %v492, 0
        %v525 = vsub.s32 0, %v492
        %v526 = vsel %vm524, %v525, %v492
        %v527 = vshrl.u32 %v526, 5
        %v528 = vand.u32 %v526, 31
        %v529 = vsub.s32 0, %v528
        %v530 = vsel %vm524, %v529, %v528
        %vm531 = vcmp.lt.s32.totalorder %v493, 0
        %v532 = vsub.s32 0, %v493
        %v533 = vsel %vm531, %v532, %v493
        %v534 = vshrl.u32 %v533, 5
        %v535 = vand.u32 %v533, 31
        %v536 = vsub.s32 0, %v535
        %v537 = vsel %vm531, %v536, %v535
        %vm538 = vcmp.lt.s32.totalorder %v494, 0
        %v539 = vsub.s32 0, %v494
        %v540 = vsel %vm538, %v539, %v494
        %v541 = vshrl.u32 %v540, 5
        %v542 = vand.u32 %v540, 31
        %v543 = vsub.s32 0, %v542
        %v544 = vsel %vm538, %v543, %v542
        %vm545 = vcmp.lt.s32.totalorder %v495, 0
        %v546 = vsub.s32 0, %v495
        %v547 = vsel %vm545, %v546, %v495
        %v548 = vshrl.u32 %v547, 5
        %v549 = vand.u32 %v547, 31
        %v550 = vsub.s32 0, %v549
        %v551 = vsel %vm545, %v550, %v549
        %vm552 = vcmp.ne.s32.totalorder %v502, 0
        %vm553 = vcmp.ne.s32.totalorder %v509, 0
        %vm554 = vcmp.ne.s32.totalorder %v516, 0
        %vm555 = vcmp.ne.s32.totalorder %v523, 0
        %vm556 = vcmp.ne.s32.totalorder %v530, 0
        %vm557 = vcmp.ne.s32.totalorder %v537, 0
        %vm558 = vcmp.ne.s32.totalorder %v544, 0
        %vm559 = vcmp.ne.s32.totalorder %v551, 0
        %vm560 = vcmp.lt.s32.totalorder %v502, 0
        %vm561 = vcmp.lt.s32.totalorder %v509, 0
        %vm562 = vcmp.lt.s32.totalorder %v516, 0
        %vm563 = vcmp.lt.s32.totalorder %v523, 0
        %vm564 = vcmp.lt.s32.totalorder %v530, 0
        %vm565 = vcmp.lt.s32.totalorder %v537, 0
        %vm566 = vcmp.lt.s32.totalorder %v544, 0
        %vm567 = vcmp.lt.s32.totalorder %v551, 0
        %vm568 = vmand %vm560, %vm552
        %vm569 = vmand %vm561, %vm553
        %vm570 = vmand %vm562, %vm554
        %vm571 = vmand %vm563, %vm555
        %vm572 = vmand %vm564, %vm556
        %vm573 = vmand %vm565, %vm557
        %vm574 = vmand %vm566, %vm558
        %vm575 = vmand %vm567, %vm559
        %v576 = vadd.s32 %v502, 32
        %v577 = vadd.s32 %v509, 32
        %v578 = vadd.s32 %v516, 32
        %v579 = vadd.s32 %v523, 32
        %v580 = vadd.s32 %v530, 32
        %v581 = vadd.s32 %v537, 32
        %v582 = vadd.s32 %v544, 32
        %v583 = vadd.s32 %v551, 32
        %v584 = vsel %vm568, %v576, %v502
        %v585 = vsel %vm569, %v577, %v509
        %v586 = vsel %vm570, %v578, %v516
        %v587 = vsel %vm571, %v579, %v523
        %v588 = vsel %vm572, %v580, %v530
        %v589 = vsel %vm573, %v581, %v537
        %v590 = vsel %vm574, %v582, %v544
        %v591 = vsel %vm575, %v583, %v551
        %v592 = vld [vmem:[%s477] sm:$0xff]
        %v593 = vld [vmem:[%s477 + $0x8] sm:$0xff]
        %v594 = vld [vmem:[%s477 + $0x10] sm:$0xff]
        %v595 = vld [vmem:[%s477 + $0x18] sm:$0xff]
        %v596 = vld [vmem:[%s477 + $0x20] sm:$0xff]
        %v597 = vld [vmem:[%s477 + $0x28] sm:$0xff]
        %v598 = vld [vmem:[%s477 + $0x30] sm:$0xff]
        %v599 = vld [vmem:[%s477 + $0x38] sm:$0xff]
        %v600 = vld [vmem:[%s1] sm:$0xf]
        %v601 = vld [vmem:[%s1 + $0x4] sm:$0xf]
        %v602 = vld [vmem:[%s1 + $0x8] sm:$0xf]
        %v603 = vld [vmem:[%s1 + $0xc] sm:$0xf]
        %v604 = vld [vmem:[%s1 + $0x10] sm:$0xf]
        %v605 = vld [vmem:[%s1 + $0x14] sm:$0xf]
        %v606 = vld [vmem:[%s1 + $0x18] sm:$0xf]
        %v607 = vld [vmem:[%s1 + $0x1c] sm:$0xf]
        %v608 = vld [vmem:[%s1 + $0x20] sm:$0xf]
        %v609 = vld [vmem:[%s1 + $0x24] sm:$0xf]
        %v610 = vld [vmem:[%s1 + $0x28] sm:$0xf]
        %v611 = vld [vmem:[%s1 + $0x2c] sm:$0xf]
        %v612 = vld [vmem:[%s1 + $0x30] sm:$0xf]
        %v613 = vld [vmem:[%s1 + $0x34] sm:$0xf]
        %v614 = vld [vmem:[%s1 + $0x38] sm:$0xf]
        %v615 = vld [vmem:[%s1 + $0x3c] sm:$0xf]
        %v616 = vld [vmem:[%s1 + $0x40] sm:$0xf]
        %v617 = vld [vmem:[%s1 + $0x44] sm:$0xf]
        %v618 = vld [vmem:[%s1 + $0x48] sm:$0xf]
        %v619 = vld [vmem:[%s1 + $0x4c] sm:$0xf]
        %v620 = vld [vmem:[%s1 + $0x50] sm:$0xf]
        %v621 = vld [vmem:[%s1 + $0x54] sm:$0xf]
        %v622 = vld [vmem:[%s1 + $0x58] sm:$0xf]
        %v623 = vld [vmem:[%s1 + $0x5c] sm:$0xf]
        %v624 = vld [vmem:[%s1 + $0x60] sm:$0xf]
        %v625 = vld [vmem:[%s1 + $0x64] sm:$0xf]
        %v626 = vld [vmem:[%s1 + $0x68] sm:$0xf]
        %v627 = vld [vmem:[%s1 + $0x6c] sm:$0xf]
        %v628 = vld [vmem:[%s1 + $0x70] sm:$0xf]
        %v629 = vld [vmem:[%s1 + $0x74] sm:$0xf]
        %v630 = vld [vmem:[%s1 + $0x78] sm:$0xf]
        %v631 = vld [vmem:[%s1 + $0x7c] sm:$0xf]
        %v632 = vld [vmem:[%s1 + $0x80] sm:$0xf]
        %v633 = vld [vmem:[%s1 + $0x84] sm:$0xf]
        %v634 = vld [vmem:[%s1 + $0x88] sm:$0xf]
        %v635 = vld [vmem:[%s1 + $0x8c] sm:$0xf]
        %v636 = vld [vmem:[%s1 + $0x90] sm:$0xf]
        %v637 = vld [vmem:[%s1 + $0x94] sm:$0xf]
        %v638 = vld [vmem:[%s1 + $0x98] sm:$0xf]
        %v639 = vld [vmem:[%s1 + $0x9c] sm:$0xf]
        %v640 = vld [vmem:[%s1 + $0xa0] sm:$0xf]
        %v641 = vld [vmem:[%s1 + $0xa4] sm:$0xf]
        %v642 = vld [vmem:[%s1 + $0xa8] sm:$0xf]
        %v643 = vld [vmem:[%s1 + $0xac] sm:$0xf]
        %v644 = vld [vmem:[%s1 + $0xb0] sm:$0xf]
        %v645 = vld [vmem:[%s1 + $0xb4] sm:$0xf]
        %v646 = vld [vmem:[%s1 + $0xb8] sm:$0xf]
        %v647 = vld [vmem:[%s1 + $0xbc] sm:$0xf]
        %v648 = vld [vmem:[%s2] sm:$0x1]
        %vm649 = vcmp.lt.s32.totalorder %v584, 2
        %vm650 = vcmp.lt.s32.totalorder %v585, 2
        %vm651 = vcmp.lt.s32.totalorder %v586, 2
        %vm652 = vcmp.lt.s32.totalorder %v587, 2
        %vm653 = vcmp.lt.s32.totalorder %v588, 2
        %vm654 = vcmp.lt.s32.totalorder %v589, 2
        %vm655 = vcmp.lt.s32.totalorder %v590, 2
        %vm656 = vcmp.lt.s32.totalorder %v591, 2
        %v657 = vsel %vm649, 1, 0
        %v658 = vsel %vm650, 1, 0
        %v659 = vsel %vm651, 1, 0
        %v660 = vsel %vm652, 1, 0
        %v661 = vsel %vm653, 1, 0
        %v662 = vsel %vm654, 1, 0
        %v663 = vsel %vm655, 1, 0
        %v664 = vsel %vm656, 1, 0
        %vm665 = vcmp.eq.s32.totalorder %v657, 1
        %vm666 = vcmp.eq.s32.totalorder %v658, 1
        %vm667 = vcmp.eq.s32.totalorder %v659, 1
        %vm668 = vcmp.eq.s32.totalorder %v660, 1
        %vm669 = vcmp.eq.s32.totalorder %v661, 1
        %vm670 = vcmp.eq.s32.totalorder %v662, 1
        %vm671 = vcmp.eq.s32.totalorder %v663, 1
        %vm672 = vcmp.eq.s32.totalorder %v664, 1
        %vm681 = vcmask 1041408
        %v682 = vrot.slane %v592, 6
        %v683 = vrot.slane %v593, 6
        %v684 = vsel %vm681, %v682, %v683
        %v685 = vrot.slane %v594, 6
        %v686 = vsel %vm681, %v683, %v685
        %v687 = vrot.slane %v595, 6
        %v688 = vsel %vm681, %v685, %v687
        %v689 = vrot.slane %v596, 6
        %v690 = vsel %vm681, %v687, %v689
        %v691 = vrot.slane %v597, 6
        %v692 = vsel %vm681, %v689, %v691
        %v693 = vrot.slane %v598, 6
        %v694 = vsel %vm681, %v691, %v693
        %v695 = vrot.slane %v599, 6
        %v696 = vsel %vm681, %v693, %v695
        %v705 = vsel %vm665, 0.0, %v682
        %v706 = vsel %vm666, 0.0, %v684
        %v707 = vsel %vm667, 0.0, %v686
        %v708 = vsel %vm668, 0.0, %v688
        %v709 = vsel %vm669, 0.0, %v690
        %v710 = vsel %vm670, 0.0, %v692
        %v711 = vsel %vm671, 0.0, %v694
        %v712 = vsel %vm672, 0.0, %v696
        %713 = vst [vmem:[#allocation2] sm:$0xfc] %v705
        %714 = vst [vmem:[#allocation2 + $0x18] sm:$0xff] %v706
        %715 = vst [vmem:[#allocation2 + $0x30] sm:$0xff] %v707
        %716 = vst [vmem:[#allocation2 + $0x48] sm:$0xff] %v708
        %717 = vst [vmem:[#allocation2 + $0x60] sm:$0xff] %v709
        %718 = vst [vmem:[#allocation2 + $0x78] sm:$0xff] %v710
        %719 = vst [vmem:[#allocation2 + $0x90] sm:$0xff] %v711
        %720 = vst [vmem:[#allocation2 + $0xa8] sm:$0xff] %v712
        %721 = vst [vmem:[#allocation2] sm:$0x3] 0.0
        %vm722 = vcmp.lt.s32.totalorder %v584, 1
        %vm723 = vcmp.lt.s32.totalorder %v585, 1
        %vm724 = vcmp.lt.s32.totalorder %v586, 1
        %vm725 = vcmp.lt.s32.totalorder %v587, 1
        %vm726 = vcmp.lt.s32.totalorder %v588, 1
        %vm727 = vcmp.lt.s32.totalorder %v589, 1
        %vm728 = vcmp.lt.s32.totalorder %v590, 1
        %vm729 = vcmp.lt.s32.totalorder %v591, 1
        %v730 = vsel %vm722, 1, 0
        %v731 = vsel %vm723, 1, 0
        %v732 = vsel %vm724, 1, 0
        %v733 = vsel %vm725, 1, 0
        %v734 = vsel %vm726, 1, 0
        %v735 = vsel %vm727, 1, 0
        %v736 = vsel %vm728, 1, 0
        %v737 = vsel %vm729, 1, 0
        %vm738 = vcmp.eq.s32.totalorder %v730, 1
        %vm739 = vcmp.eq.s32.totalorder %v731, 1
        %vm740 = vcmp.eq.s32.totalorder %v732, 1
        %vm741 = vcmp.eq.s32.totalorder %v733, 1
        %vm742 = vcmp.eq.s32.totalorder %v734, 1
        %vm743 = vcmp.eq.s32.totalorder %v735, 1
        %vm744 = vcmp.eq.s32.totalorder %v736, 1
        %vm745 = vcmp.eq.s32.totalorder %v737, 1
        %vm746 = vcmask 1040384
        %v747 = vrot.slane %v592, 7
        %v748 = vrot.slane %v593, 7
        %v749 = vsel %vm746, %v747, %v748
        %v750 = vrot.slane %v594, 7
        %v751 = vsel %vm746, %v748, %v750
        %v752 = vrot.slane %v595, 7
        %v753 = vsel %vm746, %v750, %v752
        %v754 = vrot.slane %v596, 7
        %v755 = vsel %vm746, %v752, %v754
        %v756 = vrot.slane %v597, 7
        %v757 = vsel %vm746, %v754, %v756
        %v758 = vrot.slane %v598, 7
        %v759 = vsel %vm746, %v756, %v758
        %v760 = vrot.slane %v599, 7
        %v761 = vsel %vm746, %v758, %v760
        %v770 = vsel %vm738, 0.0, %v747
        %v771 = vsel %vm739, 0.0, %v749
        %v772 = vsel %vm740, 0.0, %v751
        %v773 = vsel %vm741, 0.0, %v753
        %v774 = vsel %vm742, 0.0, %v755
        %v775 = vsel %vm743, 0.0, %v757
        %v776 = vsel %vm744, 0.0, %v759
        %v777 = vsel %vm745, 0.0, %v761
        %778 = vst [vmem:[#allocation2 + $0x8] sm:$0xfe] %v770
        %779 = vst [vmem:[#allocation2 + $0x20] sm:$0xff] %v771
        %780 = vst [vmem:[#allocation2 + $0x38] sm:$0xff] %v772
        %781 = vst [vmem:[#allocation2 + $0x50] sm:$0xff] %v773
        %782 = vst [vmem:[#allocation2 + $0x68] sm:$0xff] %v774
        %783 = vst [vmem:[#allocation2 + $0x80] sm:$0xff] %v775
        %784 = vst [vmem:[#allocation2 + $0x98] sm:$0xff] %v776
        %785 = vst [vmem:[#allocation2 + $0xb0] sm:$0xff] %v777
        %786 = vst [vmem:[#allocation2 + $0x8] sm:$0x1] 0.0
        %787 = vst [vmem:[#allocation2 + $0x10] sm:$0xff] %v592
        %788 = vst [vmem:[#allocation2 + $0x28] sm:$0xff] %v593
        %789 = vst [vmem:[#allocation2 + $0x40] sm:$0xff] %v594
        %790 = vst [vmem:[#allocation2 + $0x58] sm:$0xff] %v595
        %791 = vst [vmem:[#allocation2 + $0x70] sm:$0xff] %v596
        %792 = vst [vmem:[#allocation2 + $0x88] sm:$0xff] %v597
        %793 = vst [vmem:[#allocation2 + $0xa0] sm:$0xff] %v598
        %794 = vst [vmem:[#allocation2 + $0xb8] sm:$0xff] %v599
        %v795 = vld [vmem:[#allocation2] sm:$0xff]
        %v796 = vld [vmem:[#allocation2 + $0x8] sm:$0xff]
        %v797 = vld [vmem:[#allocation2 + $0x10] sm:$0xff]
        %v798 = vld [vmem:[#allocation2 + $0x18] sm:$0xff]
        %v799 = vld [vmem:[#allocation2 + $0x20] sm:$0xff]
        %v800 = vld [vmem:[#allocation2 + $0x28] sm:$0xff]
        %v801 = vld [vmem:[#allocation2 + $0x30] sm:$0xff]
        %v802 = vld [vmem:[#allocation2 + $0x38] sm:$0xff]
        %v803 = vld [vmem:[#allocation2 + $0x40] sm:$0xff]
        %v804 = vld [vmem:[#allocation2 + $0x48] sm:$0xff]
        %v805 = vld [vmem:[#allocation2 + $0x50] sm:$0xff]
        %v806 = vld [vmem:[#allocation2 + $0x58] sm:$0xff]
        %v807 = vld [vmem:[#allocation2 + $0x60] sm:$0xff]
        %v808 = vld [vmem:[#allocation2 + $0x68] sm:$0xff]
        %v809 = vld [vmem:[#allocation2 + $0x70] sm:$0xff]
        %v810 = vld [vmem:[#allocation2 + $0x78] sm:$0xff]
        %v811 = vld [vmem:[#allocation2 + $0x80] sm:$0xff]
        %v812 = vld [vmem:[#allocation2 + $0x88] sm:$0xff]
        %v813 = vld [vmem:[#allocation2 + $0x90] sm:$0xff]
        %v814 = vld [vmem:[#allocation2 + $0x98] sm:$0xff]
        %v815 = vld [vmem:[#allocation2 + $0xa0] sm:$0xff]
        %v816 = vld [vmem:[#allocation2 + $0xa8] sm:$0xff]
        %v817 = vld [vmem:[#allocation2 + $0xb0] sm:$0xff]
        %v818 = vld [vmem:[#allocation2 + $0xb8] sm:$0xff]
        %v819 = vpack.c.bf16 %v798, %v795
        %v820 = vpack.c.bf16 %v799, %v796
        %v821 = vpack.c.bf16 %v800, %v797
        %v822 = vpack.c.bf16 %v804, %v801
        %v823 = vpack.c.bf16 %v805, %v802
        %v824 = vpack.c.bf16 %v806, %v803
        %v825 = vpack.c.bf16 %v810, %v807
        %v826 = vpack.c.bf16 %v811, %v808
        %v827 = vpack.c.bf16 %v812, %v809
        %v828 = vpack.c.bf16 %v816, %v813
        %v829 = vpack.c.bf16 %v817, %v814
        %v830 = vpack.c.bf16 %v818, %v815
        %v832 = vperm.slane %v648, 0
        %v882 = vunpack.c.l.b16 %v600
        %v883 = vunpack.c.l.b16 %v601
        %v884 = vunpack.c.l.b16 %v602
        %v885 = vunpack.c.l.b16 %v603
        %v886 = vunpack.c.l.b16 %v604
        %v887 = vunpack.c.l.b16 %v605
        %v888 = vunpack.c.l.b16 %v606
        %v889 = vunpack.c.l.b16 %v607
        %v890 = vunpack.c.l.b16 %v608
        %v891 = vunpack.c.l.b16 %v609
        %v892 = vunpack.c.l.b16 %v610
        %v893 = vunpack.c.l.b16 %v611
        %v894 = vunpack.c.l.b16 %v612
        %v895 = vunpack.c.l.b16 %v613
        %v896 = vunpack.c.l.b16 %v614
        %v897 = vunpack.c.l.b16 %v615
        %v898 = vunpack.c.l.b16 %v616
        %v899 = vunpack.c.l.b16 %v617
        %v900 = vunpack.c.l.b16 %v618
        %v901 = vunpack.c.l.b16 %v619
        %v902 = vunpack.c.l.b16 %v620
        %v903 = vunpack.c.l.b16 %v621
        %v904 = vunpack.c.l.b16 %v622
        %v905 = vunpack.c.l.b16 %v623
        %v906 = vunpack.c.l.b16 %v624
        %v907 = vunpack.c.l.b16 %v625
        %v908 = vunpack.c.l.b16 %v626
        %v909 = vunpack.c.l.b16 %v627
        %v910 = vunpack.c.l.b16 %v628
        %v911 = vunpack.c.l.b16 %v629
        %v912 = vunpack.c.l.b16 %v630
        %v913 = vunpack.c.l.b16 %v631
        %v914 = vunpack.c.l.b16 %v632
        %v915 = vunpack.c.l.b16 %v633
        %v916 = vunpack.c.l.b16 %v634
        %v917 = vunpack.c.l.b16 %v635
        %v918 = vunpack.c.l.b16 %v636
        %v919 = vunpack.c.l.b16 %v637
        %v920 = vunpack.c.l.b16 %v638
        %v921 = vunpack.c.l.b16 %v639
        %v922 = vunpack.c.l.b16 %v640
        %v923 = vunpack.c.l.b16 %v641
        %v924 = vunpack.c.l.b16 %v642
        %v925 = vunpack.c.l.b16 %v643
        %v926 = vunpack.c.l.b16 %v644
        %v927 = vunpack.c.l.b16 %v645
        %v928 = vunpack.c.l.b16 %v646
        %v929 = vunpack.c.l.b16 %v647
        %v930 = vpack.c.b16 %v883, %v882
        %v931 = vpack.c.b16 %v885, %v884
        %v932 = vpack.c.b16 %v887, %v886
        %v933 = vpack.c.b16 %v889, %v888
        %v934 = vpack.c.b16 %v891, %v890
        %v935 = vpack.c.b16 %v893, %v892
        %v936 = vpack.c.b16 %v895, %v894
        %v937 = vpack.c.b16 %v897, %v896
        %v938 = vpack.c.b16 %v899, %v898
        %v939 = vpack.c.b16 %v901, %v900
        %v940 = vpack.c.b16 %v903, %v902
        %v941 = vpack.c.b16 %v905, %v904
        %v942 = vpack.c.b16 %v907, %v906
        %v943 = vpack.c.b16 %v909, %v908
        %v944 = vpack.c.b16 %v911, %v910
        %v945 = vpack.c.b16 %v913, %v912
        %v946 = vpack.c.b16 %v915, %v914
        %v947 = vpack.c.b16 %v917, %v916
        %v948 = vpack.c.b16 %v919, %v918
        %v949 = vpack.c.b16 %v921, %v920
        %v950 = vpack.c.b16 %v923, %v922
        %v951 = vpack.c.b16 %v925, %v924
        %v952 = vpack.c.b16 %v927, %v926
        %v953 = vpack.c.b16 %v929, %v928
        %978 = vmatpush.bf16.msra.mxu0 %v937
        %979 = vmatpush.bf16.msra.mxu0 %v936
        %980 = vmatpush.bf16.msra.mxu0 %v935
        %981 = vmatpush.bf16.msra.mxu0 %v934
        %982 = vmatpush.bf16.msra.mxu0 %v933
        %983 = vmatpush.bf16.msra.mxu0 %v932
        %984 = vmatpush.bf16.msra.mxu0 %v931
        %985 = vmatpush.bf16.msra.mxu0 %v930
        %986 = vmatmul.bf16.gmra.mxu0 %v819
        %v987 = vpop.f32.mrf.mxu0
        %v988 = vadd.f32 %v832, %v987
        %v989 = vpop.f32.mrf.mxu0
        %v990 = vadd.f32 %v832, %v989
        %991 = vmatmul.bf16.gmra.mxu0 %v822
        %v992 = vpop.f32.mrf.mxu0
        %v993 = vadd.f32 %v832, %v992
        %v994 = vpop.f32.mrf.mxu0
        %v995 = vadd.f32 %v832, %v994
        %996 = vmatmul.bf16.gmra.mxu0 %v825
        %v997 = vpop.f32.mrf.mxu0
        %v998 = vadd.f32 %v832, %v997
        %v999 = vpop.f32.mrf.mxu0
        %v1000 = vadd.f32 %v832, %v999
        %1001 = vmatmul.bf16.gmra.mxu0 %v828
        %v1002 = vpop.f32.mrf.mxu0
        %v1003 = vadd.f32 %v832, %v1002
        %v1004 = vpop.f32.mrf.mxu0
        %v1005 = vadd.f32 %v832, %v1004
        %1006 = vdwg.mxu0
        %1007 = vmatpush.bf16.msra.mxu0 %v945
        %1008 = vmatpush.bf16.msra.mxu0 %v944
        %1009 = vmatpush.bf16.msra.mxu0 %v943
        %1010 = vmatpush.bf16.msra.mxu0 %v942
        %1011 = vmatpush.bf16.msra.mxu0 %v941
        %1012 = vmatpush.bf16.msra.mxu0 %v940
        %1013 = vmatpush.bf16.msra.mxu0 %v939
        %1014 = vmatpush.bf16.msra.mxu0 %v938
        %1015 = vmatmul.bf16.gmra.mxu0 %v820
        %v1016 = vpop.f32.mrf.mxu0
        %v1017 = vadd.f32 %v988, %v1016
        %v1018 = vpop.f32.mrf.mxu0
        %v1019 = vadd.f32 %v990, %v1018
        %1020 = vmatmul.bf16.gmra.mxu0 %v823
        %v1021 = vpop.f32.mrf.mxu0
        %v1022 = vadd.f32 %v993, %v1021
        %v1023 = vpop.f32.mrf.mxu0
        %v1024 = vadd.f32 %v995, %v1023
        %1025 = vmatmul.bf16.gmra.mxu0 %v826
        %v1026 = vpop.f32.mrf.mxu0
        %v1027 = vadd.f32 %v998, %v1026
        %v1028 = vpop.f32.mrf.mxu0
        %v1029 = vadd.f32 %v1000, %v1028
        %1030 = vmatmul.bf16.gmra.mxu0 %v829
        %v1031 = vpop.f32.mrf.mxu0
        %v1032 = vadd.f32 %v1003, %v1031
        %v1033 = vpop.f32.mrf.mxu0
        %v1034 = vadd.f32 %v1005, %v1033
        %1035 = vdwg.mxu0
        %1036 = vmatpush.bf16.msra.mxu0 %v953
        %1037 = vmatpush.bf16.msra.mxu0 %v952
        %1038 = vmatpush.bf16.msra.mxu0 %v951
        %1039 = vmatpush.bf16.msra.mxu0 %v950
        %1040 = vmatpush.bf16.msra.mxu0 %v949
        %1041 = vmatpush.bf16.msra.mxu0 %v948
        %1042 = vmatpush.bf16.msra.mxu0 %v947
        %1043 = vmatpush.bf16.msra.mxu0 %v946
        %1044 = vmatmul.bf16.gmra.mxu0 %v821
        %v1045 = vpop.f32.mrf.mxu0
        %v1046 = vadd.f32 %v1017, %v1045
        %v1047 = vpop.f32.mrf.mxu0
        %v1048 = vadd.f32 %v1019, %v1047
        %1049 = vmatmul.bf16.gmra.mxu0 %v824
        %v1050 = vpop.f32.mrf.mxu0
        %v1051 = vadd.f32 %v1022, %v1050
        %v1052 = vpop.f32.mrf.mxu0
        %v1053 = vadd.f32 %v1024, %v1052
        %1054 = vmatmul.bf16.gmra.mxu0 %v827
        %v1055 = vpop.f32.mrf.mxu0
        %v1056 = vadd.f32 %v1027, %v1055
        %v1057 = vpop.f32.mrf.mxu0
        %v1058 = vadd.f32 %v1029, %v1057
        %1059 = vmatmul.bf16.gmra.mxu0 %v830
        %v1060 = vpop.f32.mrf.mxu0
        %v1061 = vadd.f32 %v1032, %v1060
        %v1062 = vpop.f32.mrf.mxu0
        %v1063 = vadd.f32 %v1034, %v1062
        %1064 = vdwg.mxu0
        %v1065 = vmax.f32 %v1046, 0.0
        %v1066 = vmax.f32 %v1048, 0.0
        %v1067 = vmax.f32 %v1051, 0.0
        %v1068 = vmax.f32 %v1053, 0.0
        %v1069 = vmax.f32 %v1056, 0.0
        %v1070 = vmax.f32 %v1058, 0.0
        %v1071 = vmax.f32 %v1061, 0.0
        %v1072 = vmax.f32 %v1063, 0.0
        %v1073 = vld [vmem:[%s3] sm:$0xf]
        %v1074 = vld [vmem:[%s3 + $0x4] sm:$0xf]
        %v1075 = vld [vmem:[%s3 + $0x8] sm:$0xf]
        %v1076 = vld [vmem:[%s3 + $0xc] sm:$0xf]
        %v1077 = vld [vmem:[%s3 + $0x10] sm:$0xf]
        %v1078 = vld [vmem:[%s3 + $0x14] sm:$0xf]
        %v1079 = vld [vmem:[%s3 + $0x18] sm:$0xf]
        %v1080 = vld [vmem:[%s3 + $0x1c] sm:$0xf]
        %v1081 = vld [vmem:[%s3 + $0x20] sm:$0xf]
        %v1082 = vld [vmem:[%s3 + $0x24] sm:$0xf]
        %v1083 = vld [vmem:[%s3 + $0x28] sm:$0xf]
        %v1084 = vld [vmem:[%s3 + $0x2c] sm:$0xf]
        %v1085 = vld [vmem:[%s4] sm:$0x1]
        %v1094 = vrot.slane %v1065, 6
        %v1095 = vrot.slane %v1066, 6
        %v1096 = vsel %vm681, %v1094, %v1095
        %v1097 = vrot.slane %v1067, 6
        %v1098 = vsel %vm681, %v1095, %v1097
        %v1099 = vrot.slane %v1068, 6
        %v1100 = vsel %vm681, %v1097, %v1099
        %v1101 = vrot.slane %v1069, 6
        %v1102 = vsel %vm681, %v1099, %v1101
        %v1103 = vrot.slane %v1070, 6
        %v1104 = vsel %vm681, %v1101, %v1103
        %v1105 = vrot.slane %v1071, 6
        %v1106 = vsel %vm681, %v1103, %v1105
        %v1107 = vrot.slane %v1072, 6
        %v1108 = vsel %vm681, %v1105, %v1107
        %v1117 = vsel %vm665, 0.0, %v1094
        %v1118 = vsel %vm666, 0.0, %v1096
        %v1119 = vsel %vm667, 0.0, %v1098
        %v1120 = vsel %vm668, 0.0, %v1100
        %v1121 = vsel %vm669, 0.0, %v1102
        %v1122 = vsel %vm670, 0.0, %v1104
        %v1123 = vsel %vm671, 0.0, %v1106
        %v1124 = vsel %vm672, 0.0, %v1108
        %vm1125 = vcmask 261122
        %1126 = vst.msk [vmem:[#allocation2] sm:$0xfc] %vm1125, %v1117
        %vm1127 = vcmask 261120
        %1128 = vst.msk [vmem:[#allocation2 + $0x18] sm:$0xff] %vm1127, %v1118
        %1129 = vst.msk [vmem:[#allocation2 + $0x30] sm:$0xff] %vm1127, %v1119
        %1130 = vst.msk [vmem:[#allocation2 + $0x48] sm:$0xff] %vm1127, %v1120
        %1131 = vst.msk [vmem:[#allocation2 + $0x60] sm:$0xff] %vm1127, %v1121
        %1132 = vst.msk [vmem:[#allocation2 + $0x78] sm:$0xff] %vm1127, %v1122
        %1133 = vst.msk [vmem:[#allocation2 + $0x90] sm:$0xff] %vm1127, %v1123
        %1134 = vst.msk [vmem:[#allocation2 + $0xa8] sm:$0xff] %vm1127, %v1124
        %vm1135 = vcmask 254976
        %1136 = vst.msk [vmem:[#allocation2] sm:$0x3] %vm1135, 0.0
        %v1137 = vrot.slane %v1065, 7
        %v1138 = vrot.slane %v1066, 7
        %v1139 = vsel %vm746, %v1137, %v1138
        %v1140 = vrot.slane %v1067, 7
        %v1141 = vsel %vm746, %v1138, %v1140
        %v1142 = vrot.slane %v1068, 7
        %v1143 = vsel %vm746, %v1140, %v1142
        %v1144 = vrot.slane %v1069, 7
        %v1145 = vsel %vm746, %v1142, %v1144
        %v1146 = vrot.slane %v1070, 7
        %v1147 = vsel %vm746, %v1144, %v1146
        %v1148 = vrot.slane %v1071, 7
        %v1149 = vsel %vm746, %v1146, %v1148
        %v1150 = vrot.slane %v1072, 7
        %v1151 = vsel %vm746, %v1148, %v1150
        %v1160 = vsel %vm738, 0.0, %v1137
        %v1161 = vsel %vm739, 0.0, %v1139
        %v1162 = vsel %vm740, 0.0, %v1141
        %v1163 = vsel %vm741, 0.0, %v1143
        %v1164 = vsel %vm742, 0.0, %v1145
        %v1165 = vsel %vm743, 0.0, %v1147
        %v1166 = vsel %vm744, 0.0, %v1149
        %v1167 = vsel %vm745, 0.0, %v1151
        %1176 = vrot.lane.b32.xlu0 %v1160, 32
        %v1177 = vpop.permute.xlu0 %1176
        %1178 = vrot.lane.b32.xlu0 %v1161, 32
        %v1179 = vpop.permute.xlu0 %1178
        %1180 = vrot.lane.b32.xlu0 %v1162, 32
        %v1181 = vpop.permute.xlu0 %1180
        %1182 = vrot.lane.b32.xlu0 %v1163, 32
        %v1183 = vpop.permute.xlu0 %1182
        %1184 = vrot.lane.b32.xlu0 %v1164, 32
        %v1185 = vpop.permute.xlu0 %1184
        %1186 = vrot.lane.b32.xlu0 %v1165, 32
        %v1187 = vpop.permute.xlu0 %1186
        %1188 = vrot.lane.b32.xlu0 %v1166, 32
        %v1189 = vpop.permute.xlu0 %1188
        %1190 = vrot.lane.b32.xlu0 %v1167, 32
        %v1191 = vpop.permute.xlu0 %1190
        %vm1200 = vcmask 523521
        %1201 = vst.msk [vmem:[#allocation2] sm:$0xfe] %vm1200, %v1177
        %vm1202 = vcmask 523520
        %1203 = vst.msk [vmem:[#allocation2 + $0x18] sm:$0xff] %vm1202, %v1179
        %1204 = vst.msk [vmem:[#allocation2 + $0x30] sm:$0xff] %vm1202, %v1181
        %1205 = vst.msk [vmem:[#allocation2 + $0x48] sm:$0xff] %vm1202, %v1183
        %1206 = vst.msk [vmem:[#allocation2 + $0x60] sm:$0xff] %vm1202, %v1185
        %1207 = vst.msk [vmem:[#allocation2 + $0x78] sm:$0xff] %vm1202, %v1187
        %1208 = vst.msk [vmem:[#allocation2 + $0x90] sm:$0xff] %vm1202, %v1189
        %1209 = vst.msk [vmem:[#allocation2 + $0xa8] sm:$0xff] %vm1202, %v1191
        %vm1210 = vcmask 516352
        %1211 = vst.msk [vmem:[#allocation2] sm:$0x1] %vm1210, 0.0
        %1212 = vrot.lane.b32.xlu0 %v1065, 64
        %v1213 = vpop.permute.xlu0 %1212
        %1214 = vrot.lane.b32.xlu0 %v1066, 64
        %v1215 = vpop.permute.xlu0 %1214
        %1216 = vrot.lane.b32.xlu0 %v1067, 64
        %v1217 = vpop.permute.xlu0 %1216
        %1218 = vrot.lane.b32.xlu0 %v1068, 64
        %v1219 = vpop.permute.xlu0 %1218
        %1220 = vrot.lane.b32.xlu0 %v1069, 64
        %v1221 = vpop.permute.xlu0 %1220
        %1222 = vrot.lane.b32.xlu0 %v1070, 64
        %v1223 = vpop.permute.xlu0 %1222
        %1224 = vrot.lane.b32.xlu0 %v1071, 64
        %v1225 = vpop.permute.xlu0 %1224
        %1226 = vrot.lane.b32.xlu0 %v1072, 64
        %v1227 = vpop.permute.xlu0 %1226
        %vm1236 = vcmask 785920
        %1237 = vst.msk [vmem:[#allocation2] sm:$0xff] %vm1236, %v1213
        %1238 = vst.msk [vmem:[#allocation2 + $0x18] sm:$0xff] %vm1236, %v1215
        %1239 = vst.msk [vmem:[#allocation2 + $0x30] sm:$0xff] %vm1236, %v1217
        %1240 = vst.msk [vmem:[#allocation2 + $0x48] sm:$0xff] %vm1236, %v1219
        %1241 = vst.msk [vmem:[#allocation2 + $0x60] sm:$0xff] %vm1236, %v1221
        %1242 = vst.msk [vmem:[#allocation2 + $0x78] sm:$0xff] %vm1236, %v1223
        %1243 = vst.msk [vmem:[#allocation2 + $0x90] sm:$0xff] %vm1236, %v1225
        %1244 = vst.msk [vmem:[#allocation2 + $0xa8] sm:$0xff] %vm1236, %v1227
        %v1245 = vld [vmem:[#allocation2] sm:$0xff]
        %v1246 = vld [vmem:[#allocation2 + $0x18] sm:$0xff]
        %v1247 = vld [vmem:[#allocation2 + $0x30] sm:$0xff]
        %v1248 = vld [vmem:[#allocation2 + $0x48] sm:$0xff]
        %v1249 = vld [vmem:[#allocation2 + $0x60] sm:$0xff]
        %v1250 = vld [vmem:[#allocation2 + $0x78] sm:$0xff]
        %v1251 = vld [vmem:[#allocation2 + $0x90] sm:$0xff]
        %v1252 = vld [vmem:[#allocation2 + $0xa8] sm:$0xff]
        %v1253 = vpack.c.bf16 %v1246, %v1245
        %v1254 = vpack.c.bf16 %v1248, %v1247
        %v1255 = vpack.c.bf16 %v1250, %v1249
        %v1256 = vpack.c.bf16 %v1252, %v1251
        %v1258 = vperm.slane %v1085, 0
        %v1272 = vunpack.c.l.b16 %v1073
        %v1273 = vunpack.c.l.b16 %v1074
        %v1274 = vunpack.c.l.b16 %v1075
        %v1275 = vunpack.c.l.b16 %v1076
        %v1276 = vunpack.c.l.b16 %v1077
        %v1277 = vunpack.c.l.b16 %v1078
        %v1278 = vunpack.c.l.b16 %v1079
        %v1279 = vunpack.c.l.b16 %v1080
        %v1280 = vunpack.c.l.b16 %v1081
        %v1281 = vunpack.c.l.b16 %v1082
        %v1282 = vunpack.c.l.b16 %v1083
        %v1283 = vunpack.c.l.b16 %v1084
        %v1284 = vpack.c.b16 %v1273, %v1272
        %v1285 = vpack.c.b16 %v1275, %v1274
        %v1286 = vpack.c.b16 %v1277, %v1276
        %v1287 = vpack.c.b16 %v1279, %v1278
        %v1288 = vpack.c.b16 %v1281, %v1280
        %v1289 = vpack.c.b16 %v1283, %v1282
        %vm1296 = vcmask 785408
        %v1298 = vsel %vm1296, %v1253, 0
        %v1301 = vsel %vm1296, %v1254, 0
        %v1304 = vsel %vm1296, %v1255, 0
        %v1307 = vsel %vm1296, %v1256, 0
        %1309 = vmatpush.bf16.msra.mxu0 0
        %1310 = vmatpush.bf16.msra.mxu0 0
        %1311 = vmatpush.bf16.msra.mxu0 %v1289
        %1312 = vmatpush.bf16.msra.mxu0 %v1288
        %1313 = vmatpush.bf16.msra.mxu0 %v1287
        %1314 = vmatpush.bf16.msra.mxu0 %v1286
        %1315 = vmatpush.bf16.msra.mxu0 %v1285
        %1316 = vmatpush.bf16.msra.mxu0 %v1284
        %1317 = vmatmul.bf16.gmra.mxu0 %v1298
        %v1318 = vpop.f32.mrf.mxu0
        %v1319 = vadd.f32 %v1258, %v1318
        %v1320 = vpop.f32.mrf.mxu0
        %v1321 = vadd.f32 %v1258, %v1320
        %1322 = vmatmul.bf16.gmra.mxu0 %v1301
        %v1323 = vpop.f32.mrf.mxu0
        %v1324 = vadd.f32 %v1258, %v1323
        %v1325 = vpop.f32.mrf.mxu0
        %v1326 = vadd.f32 %v1258, %v1325
        %1327 = vmatmul.bf16.gmra.mxu0 %v1304
        %v1328 = vpop.f32.mrf.mxu0
        %v1329 = vadd.f32 %v1258, %v1328
        %v1330 = vpop.f32.mrf.mxu0
        %v1331 = vadd.f32 %v1258, %v1330
        %1332 = vmatmul.bf16.gmra.mxu0 %v1307
        %v1333 = vpop.f32.mrf.mxu0
        %v1334 = vadd.f32 %v1258, %v1333
        %v1335 = vpop.f32.mrf.mxu0
        %v1336 = vadd.f32 %v1258, %v1335
        %1337 = vdwg.mxu0
        %v1338 = vmax.f32 %v1319, 0.0
        %v1339 = vmax.f32 %v1321, 0.0
        %v1340 = vmax.f32 %v1324, 0.0
        %v1341 = vmax.f32 %v1326, 0.0
        %v1342 = vmax.f32 %v1329, 0.0
        %v1343 = vmax.f32 %v1331, 0.0
        %v1344 = vmax.f32 %v1334, 0.0
        %v1345 = vmax.f32 %v1336, 0.0
        %v1346 = vadd.f32 %v1338, %v1065
        %v1347 = vadd.f32 %v1339, %v1066
        %v1348 = vadd.f32 %v1340, %v1067
        %v1349 = vadd.f32 %v1341, %v1068
        %v1350 = vadd.f32 %v1342, %v1069
        %v1351 = vadd.f32 %v1343, %v1070
        %v1352 = vadd.f32 %v1344, %v1071
        %v1353 = vadd.f32 %v1345, %v1072
        %s1354 = scalar_lea.vmem %s3, 48
        %v1355 = vld [vmem:[%s1354] sm:$0xf]
        %v1356 = vld [vmem:[%s1354 + $0x4] sm:$0xf]
        %v1357 = vld [vmem:[%s1354 + $0x8] sm:$0xf]
        %v1358 = vld [vmem:[%s1354 + $0xc] sm:$0xf]
        %v1359 = vld [vmem:[%s1354 + $0x10] sm:$0xf]
        %v1360 = vld [vmem:[%s1354 + $0x14] sm:$0xf]
        %v1361 = vld [vmem:[%s1354 + $0x18] sm:$0xf]
        %v1362 = vld [vmem:[%s1354 + $0x1c] sm:$0xf]
        %v1363 = vld [vmem:[%s1354 + $0x20] sm:$0xf]
        %v1364 = vld [vmem:[%s1354 + $0x24] sm:$0xf]
        %v1365 = vld [vmem:[%s1354 + $0x28] sm:$0xf]
        %v1366 = vld [vmem:[%s1354 + $0x2c] sm:$0xf]
        %s1367 = scalar_lea.vmem %s4, 1
        %v1368 = vld [vmem:[%s1367] sm:$0x1]
        %vm1369 = vcmp.lt.s32.totalorder %v584, 6
        %vm1370 = vcmp.lt.s32.totalorder %v585, 6
        %vm1371 = vcmp.lt.s32.totalorder %v586, 6
        %vm1372 = vcmp.lt.s32.totalorder %v587, 6
        %vm1373 = vcmp.lt.s32.totalorder %v588, 6
        %vm1374 = vcmp.lt.s32.totalorder %v589, 6
        %vm1375 = vcmp.lt.s32.totalorder %v590, 6
        %vm1376 = vcmp.lt.s32.totalorder %v591, 6
        %v1377 = vsel %vm1369, 1, 0
        %v1378 = vsel %vm1370, 1, 0
        %v1379 = vsel %vm1371, 1, 0
        %v1380 = vsel %vm1372, 1, 0
        %v1381 = vsel %vm1373, 1, 0
        %v1382 = vsel %vm1374, 1, 0
        %v1383 = vsel %vm1375, 1, 0
        %v1384 = vsel %vm1376, 1, 0
        %vm1385 = vcmp.eq.s32.totalorder %v1377, 1
        %vm1386 = vcmp.eq.s32.totalorder %v1378, 1
        %vm1387 = vcmp.eq.s32.totalorder %v1379, 1
        %vm1388 = vcmp.eq.s32.totalorder %v1380, 1
        %vm1389 = vcmp.eq.s32.totalorder %v1381, 1
        %vm1390 = vcmp.eq.s32.totalorder %v1382, 1
        %vm1391 = vcmp.eq.s32.totalorder %v1383, 1
        %vm1392 = vcmp.eq.s32.totalorder %v1384, 1
        %vm1401 = vcmask 1045504
        %v1402 = vrot.slane %v1346, 2
        %v1403 = vrot.slane %v1347, 2
        %v1404 = vsel %vm1401, %v1402, %v1403
        %v1405 = vrot.slane %v1348, 2
        %v1406 = vsel %vm1401, %v1403, %v1405
        %v1407 = vrot.slane %v1349, 2
        %v1408 = vsel %vm1401, %v1405, %v1407
        %v1409 = vrot.slane %v1350, 2
        %v1410 = vsel %vm1401, %v1407, %v1409
        %v1411 = vrot.slane %v1351, 2
        %v1412 = vsel %vm1401, %v1409, %v1411
        %v1413 = vrot.slane %v1352, 2
        %v1414 = vsel %vm1401, %v1411, %v1413
        %v1415 = vrot.slane %v1353, 2
        %v1416 = vsel %vm1401, %v1413, %v1415
        %v1425 = vsel %vm1385, 0.0, %v1402
        %v1426 = vsel %vm1386, 0.0, %v1404
        %v1427 = vsel %vm1387, 0.0, %v1406
        %v1428 = vsel %vm1388, 0.0, %v1408
        %v1429 = vsel %vm1389, 0.0, %v1410
        %v1430 = vsel %vm1390, 0.0, %v1412
        %v1431 = vsel %vm1391, 0.0, %v1414
        %v1432 = vsel %vm1392, 0.0, %v1416
        %vm1433 = vcmask 261126
        %1434 = vst.msk [vmem:[#allocation2] sm:$0xc0] %vm1433, %v1425
        %1435 = vst.msk [vmem:[#allocation2 + $0x18] sm:$0xff] %vm1127, %v1426
        %1436 = vst.msk [vmem:[#allocation2 + $0x30] sm:$0xff] %vm1127, %v1427
        %1437 = vst.msk [vmem:[#allocation2 + $0x48] sm:$0xff] %vm1127, %v1428
        %1438 = vst.msk [vmem:[#allocation2 + $0x60] sm:$0xff] %vm1127, %v1429
        %1439 = vst.msk [vmem:[#allocation2 + $0x78] sm:$0xff] %vm1127, %v1430
        %1440 = vst.msk [vmem:[#allocation2 + $0x90] sm:$0xff] %vm1127, %v1431
        %1441 = vst.msk [vmem:[#allocation2 + $0xa8] sm:$0xff] %vm1127, %v1432
        %vm1442 = vcmask 259072
        %1443 = vst.msk [vmem:[#allocation2] sm:$0x3f] %vm1442, 0.0
        %vm1444 = vcmp.lt.s32.totalorder %v584, 3
        %vm1445 = vcmp.lt.s32.totalorder %v585, 3
        %vm1446 = vcmp.lt.s32.totalorder %v586, 3
        %vm1447 = vcmp.lt.s32.totalorder %v587, 3
        %vm1448 = vcmp.lt.s32.totalorder %v588, 3
        %vm1449 = vcmp.lt.s32.totalorder %v589, 3
        %vm1450 = vcmp.lt.s32.totalorder %v590, 3
        %vm1451 = vcmp.lt.s32.totalorder %v591, 3
        %v1452 = vsel %vm1444, 1, 0
        %v1453 = vsel %vm1445, 1, 0
        %v1454 = vsel %vm1446, 1, 0
        %v1455 = vsel %vm1447, 1, 0
        %v1456 = vsel %vm1448, 1, 0
        %v1457 = vsel %vm1449, 1, 0
        %v1458 = vsel %vm1450, 1, 0
        %v1459 = vsel %vm1451, 1, 0
        %vm1460 = vcmp.eq.s32.totalorder %v1452, 1
        %vm1461 = vcmp.eq.s32.totalorder %v1453, 1
        %vm1462 = vcmp.eq.s32.totalorder %v1454, 1
        %vm1463 = vcmp.eq.s32.totalorder %v1455, 1
        %vm1464 = vcmp.eq.s32.totalorder %v1456, 1
        %vm1465 = vcmp.eq.s32.totalorder %v1457, 1
        %vm1466 = vcmp.eq.s32.totalorder %v1458, 1
        %vm1467 = vcmp.eq.s32.totalorder %v1459, 1
        %vm1468 = vcmask 1042432
        %v1469 = vrot.slane %v1346, 5
        %v1470 = vrot.slane %v1347, 5
        %v1471 = vsel %vm1468, %v1469, %v1470
        %v1472 = vrot.slane %v1348, 5
        %v1473 = vsel %vm1468, %v1470, %v1472
        %v1474 = vrot.slane %v1349, 5
        %v1475 = vsel %vm1468, %v1472, %v1474
        %v1476 = vrot.slane %v1350, 5
        %v1477 = vsel %vm1468, %v1474, %v1476
        %v1478 = vrot.slane %v1351, 5
        %v1479 = vsel %vm1468, %v1476, %v1478
        %v1480 = vrot.slane %v1352, 5
        %v1481 = vsel %vm1468, %v1478, %v1480
        %v1482 = vrot.slane %v1353, 5
        %v1483 = vsel %vm1468, %v1480, %v1482
        %v1492 = vsel %vm1460, 0.0, %v1469
        %v1493 = vsel %vm1461, 0.0, %v1471
        %v1494 = vsel %vm1462, 0.0, %v1473
        %v1495 = vsel %vm1463, 0.0, %v1475
        %v1496 = vsel %vm1464, 0.0, %v1477
        %v1497 = vsel %vm1465, 0.0, %v1479
        %v1498 = vsel %vm1466, 0.0, %v1481
        %v1499 = vsel %vm1467, 0.0, %v1483
        %1508 = vrot.lane.b32.xlu0 %v1492, 32
        %v1509 = vpop.permute.xlu0 %1508
        %1510 = vrot.lane.b32.xlu0 %v1493, 32
        %v1511 = vpop.permute.xlu0 %1510
        %1512 = vrot.lane.b32.xlu0 %v1494, 32
        %v1513 = vpop.permute.xlu0 %1512
        %1514 = vrot.lane.b32.xlu0 %v1495, 32
        %v1515 = vpop.permute.xlu0 %1514
        %1516 = vrot.lane.b32.xlu0 %v1496, 32
        %v1517 = vpop.permute.xlu0 %1516
        %1518 = vrot.lane.b32.xlu0 %v1497, 32
        %v1519 = vpop.permute.xlu0 %1518
        %1520 = vrot.lane.b32.xlu0 %v1498, 32
        %v1521 = vpop.permute.xlu0 %1520
        %1522 = vrot.lane.b32.xlu0 %v1499, 32
        %v1523 = vpop.permute.xlu0 %1522
        %vm1532 = vcmask 523523
        %1533 = vst.msk [vmem:[#allocation2] sm:$0xf8] %vm1532, %v1509
        %1534 = vst.msk [vmem:[#allocation2 + $0x18] sm:$0xff] %vm1202, %v1511
        %1535 = vst.msk [vmem:[#allocation2 + $0x30] sm:$0xff] %vm1202, %v1513
        %1536 = vst.msk [vmem:[#allocation2 + $0x48] sm:$0xff] %vm1202, %v1515
        %1537 = vst.msk [vmem:[#allocation2 + $0x60] sm:$0xff] %vm1202, %v1517
        %1538 = vst.msk [vmem:[#allocation2 + $0x78] sm:$0xff] %vm1202, %v1519
        %1539 = vst.msk [vmem:[#allocation2 + $0x90] sm:$0xff] %vm1202, %v1521
        %1540 = vst.msk [vmem:[#allocation2 + $0xa8] sm:$0xff] %vm1202, %v1523
        %vm1541 = vcmask 518400
        %1542 = vst.msk [vmem:[#allocation2] sm:$0x7] %vm1541, 0.0
        %1543 = vrot.lane.b32.xlu0 %v1346, 64
        %v1544 = vpop.permute.xlu0 %1543
        %1545 = vrot.lane.b32.xlu0 %v1347, 64
        %v1546 = vpop.permute.xlu0 %1545
        %1547 = vrot.lane.b32.xlu0 %v1348, 64
        %v1548 = vpop.permute.xlu0 %1547
        %1549 = vrot.lane.b32.xlu0 %v1349, 64
        %v1550 = vpop.permute.xlu0 %1549
        %1551 = vrot.lane.b32.xlu0 %v1350, 64
        %v1552 = vpop.permute.xlu0 %1551
        %1553 = vrot.lane.b32.xlu0 %v1351, 64
        %v1554 = vpop.permute.xlu0 %1553
        %1555 = vrot.lane.b32.xlu0 %v1352, 64
        %v1556 = vpop.permute.xlu0 %1555
        %1557 = vrot.lane.b32.xlu0 %v1353, 64
        %v1558 = vpop.permute.xlu0 %1557
        %1567 = vst.msk [vmem:[#allocation2] sm:$0xff] %vm1236, %v1544
        %1568 = vst.msk [vmem:[#allocation2 + $0x18] sm:$0xff] %vm1236, %v1546
        %1569 = vst.msk [vmem:[#allocation2 + $0x30] sm:$0xff] %vm1236, %v1548
        %1570 = vst.msk [vmem:[#allocation2 + $0x48] sm:$0xff] %vm1236, %v1550
        %1571 = vst.msk [vmem:[#allocation2 + $0x60] sm:$0xff] %vm1236, %v1552
        %1572 = vst.msk [vmem:[#allocation2 + $0x78] sm:$0xff] %vm1236, %v1554
        %1573 = vst.msk [vmem:[#allocation2 + $0x90] sm:$0xff] %vm1236, %v1556
        %1574 = vst.msk [vmem:[#allocation2 + $0xa8] sm:$0xff] %vm1236, %v1558
        %v1575 = vld [vmem:[#allocation2] sm:$0xff]
        %v1576 = vld [vmem:[#allocation2 + $0x18] sm:$0xff]
        %v1577 = vld [vmem:[#allocation2 + $0x30] sm:$0xff]
        %v1578 = vld [vmem:[#allocation2 + $0x48] sm:$0xff]
        %v1579 = vld [vmem:[#allocation2 + $0x60] sm:$0xff]
        %v1580 = vld [vmem:[#allocation2 + $0x78] sm:$0xff]
        %v1581 = vld [vmem:[#allocation2 + $0x90] sm:$0xff]
        %v1582 = vld [vmem:[#allocation2 + $0xa8] sm:$0xff]
        %v1583 = vpack.c.bf16 %v1576, %v1575
        %v1584 = vpack.c.bf16 %v1578, %v1577
        %v1585 = vpack.c.bf16 %v1580, %v1579
        %v1586 = vpack.c.bf16 %v1582, %v1581
        %v1588 = vperm.slane %v1368, 0
        %v1602 = vunpack.c.l.b16 %v1355
        %v1603 = vunpack.c.l.b16 %v1356
        %v1604 = vunpack.c.l.b16 %v1357
        %v1605 = vunpack.c.l.b16 %v1358
        %v1606 = vunpack.c.l.b16 %v1359
        %v1607 = vunpack.c.l.b16 %v1360
        %v1608 = vunpack.c.l.b16 %v1361
        %v1609 = vunpack.c.l.b16 %v1362
        %v1610 = vunpack.c.l.b16 %v1363
        %v1611 = vunpack.c.l.b16 %v1364
        %v1612 = vunpack.c.l.b16 %v1365
        %v1613 = vunpack.c.l.b16 %v1366
        %v1614 = vpack.c.b16 %v1603, %v1602
        %v1615 = vpack.c.b16 %v1605, %v1604
        %v1616 = vpack.c.b16 %v1607, %v1606
        %v1617 = vpack.c.b16 %v1609, %v1608
        %v1618 = vpack.c.b16 %v1611, %v1610
        %v1619 = vpack.c.b16 %v1613, %v1612
        %v1627 = vsel %vm1296, %v1583, 0
        %v1630 = vsel %vm1296, %v1584, 0
        %v1633 = vsel %vm1296, %v1585, 0
        %v1636 = vsel %vm1296, %v1586, 0
        %1638 = vmatpush.bf16.msra.mxu0 0
        %1639 = vmatpush.bf16.msra.mxu0 0
        %1640 = vmatpush.bf16.msra.mxu0 %v1619
        %1641 = vmatpush.bf16.msra.mxu0 %v1618
        %1642 = vmatpush.bf16.msra.mxu0 %v1617
        %1643 = vmatpush.bf16.msra.mxu0 %v1616
        %1644 = vmatpush.bf16.msra.mxu0 %v1615
        %1645 = vmatpush.bf16.msra.mxu0 %v1614
        %1646 = vmatmul.bf16.gmra.mxu0 %v1627
        %v1647 = vpop.f32.mrf.mxu0
        %v1648 = vadd.f32 %v1588, %v1647
        %v1649 = vpop.f32.mrf.mxu0
        %v1650 = vadd.f32 %v1588, %v1649
        %1651 = vmatmul.bf16.gmra.mxu0 %v1630
        %v1652 = vpop.f32.mrf.mxu0
        %v1653 = vadd.f32 %v1588, %v1652
        %v1654 = vpop.f32.mrf.mxu0
        %v1655 = vadd.f32 %v1588, %v1654
        %1656 = vmatmul.bf16.gmra.mxu0 %v1633
        %v1657 = vpop.f32.mrf.mxu0
        %v1658 = vadd.f32 %v1588, %v1657
        %v1659 = vpop.f32.mrf.mxu0
        %v1660 = vadd.f32 %v1588, %v1659
        %1661 = vmatmul.bf16.gmra.mxu0 %v1636
        %v1662 = vpop.f32.mrf.mxu0
        %v1663 = vadd.f32 %v1588, %v1662
        %v1664 = vpop.f32.mrf.mxu0
        %v1665 = vadd.f32 %v1588, %v1664
        %1666 = vdwg.mxu0
        %v1667 = vmax.f32 %v1648, 0.0
        %v1668 = vmax.f32 %v1650, 0.0
        %v1669 = vmax.f32 %v1653, 0.0
        %v1670 = vmax.f32 %v1655, 0.0
        %v1671 = vmax.f32 %v1658, 0.0
        %v1672 = vmax.f32 %v1660, 0.0
        %v1673 = vmax.f32 %v1663, 0.0
        %v1674 = vmax.f32 %v1665, 0.0
        %v1675 = vadd.f32 %v1667, %v1346
        %v1676 = vadd.f32 %v1668, %v1347
        %v1677 = vadd.f32 %v1669, %v1348
        %v1678 = vadd.f32 %v1670, %v1349
        %v1679 = vadd.f32 %v1671, %v1350
        %v1680 = vadd.f32 %v1672, %v1351
        %v1681 = vadd.f32 %v1673, %v1352
        %v1682 = vadd.f32 %v1674, %v1353
        %s1683 = scalar_lea.vmem %s3, 96
        %v1684 = vld [vmem:[%s1683] sm:$0xf]
        %v1685 = vld [vmem:[%s1683 + $0x4] sm:$0xf]
        %v1686 = vld [vmem:[%s1683 + $0x8] sm:$0xf]
        %v1687 = vld [vmem:[%s1683 + $0xc] sm:$0xf]
        %v1688 = vld [vmem:[%s1683 + $0x10] sm:$0xf]
        %v1689 = vld [vmem:[%s1683 + $0x14] sm:$0xf]
        %v1690 = vld [vmem:[%s1683 + $0x18] sm:$0xf]
        %v1691 = vld [vmem:[%s1683 + $0x1c] sm:$0xf]
        %v1692 = vld [vmem:[%s1683 + $0x20] sm:$0xf]
        %v1693 = vld [vmem:[%s1683 + $0x24] sm:$0xf]
        %v1694 = vld [vmem:[%s1683 + $0x28] sm:$0xf]
        %v1695 = vld [vmem:[%s1683 + $0x2c] sm:$0xf]
        %s1696 = scalar_lea.vmem %s4, 2
        %v1697 = vld [vmem:[%s1696] sm:$0x1]
        %vm1698 = vcmp.lt.s32.totalorder %v586, 18
        %vm1699 = vcmp.lt.s32.totalorder %v587, 18
        %vm1700 = vcmp.lt.s32.totalorder %v588, 18
        %vm1701 = vcmp.lt.s32.totalorder %v589, 18
        %vm1702 = vcmp.lt.s32.totalorder %v590, 18
        %vm1703 = vcmp.lt.s32.totalorder %v591, 18
        %v1704 = vsel %vm1698, 1, 0
        %v1705 = vsel %vm1699, 1, 0
        %v1706 = vsel %vm1700, 1, 0
        %v1707 = vsel %vm1701, 1, 0
        %v1708 = vsel %vm1702, 1, 0
        %v1709 = vsel %vm1703, 1, 0
        %vm1710 = vcmp.eq.s32.totalorder %v1704, 1
        %vm1711 = vcmp.eq.s32.totalorder %v1705, 1
        %vm1712 = vcmp.eq.s32.totalorder %v1706, 1
        %vm1713 = vcmp.eq.s32.totalorder %v1707, 1
        %vm1714 = vcmp.eq.s32.totalorder %v1708, 1
        %vm1715 = vcmp.eq.s32.totalorder %v1709, 1
        %v1722 = vrot.slane %v1675, 6
        %v1723 = vrot.slane %v1676, 6
        %v1724 = vsel %vm681, %v1722, %v1723
        %v1725 = vrot.slane %v1677, 6
        %v1726 = vsel %vm681, %v1723, %v1725
        %v1727 = vrot.slane %v1678, 6
        %v1728 = vsel %vm681, %v1725, %v1727
        %v1729 = vrot.slane %v1679, 6
        %v1730 = vsel %vm681, %v1727, %v1729
        %v1731 = vrot.slane %v1680, 6
        %v1732 = vsel %vm681, %v1729, %v1731
        %v1739 = vsel %vm1710, 0.0, %v1722
        %v1740 = vsel %vm1711, 0.0, %v1724
        %v1741 = vsel %vm1712, 0.0, %v1726
        %v1742 = vsel %vm1713, 0.0, %v1728
        %v1743 = vsel %vm1714, 0.0, %v1730
        %v1744 = vsel %vm1715, 0.0, %v1732
        %1745 = vst.msk [vmem:[#allocation2 + $0x30] sm:$0xfc] %vm1125, %v1739
        %1746 = vst.msk [vmem:[#allocation2 + $0x48] sm:$0xff] %vm1127, %v1740
        %1747 = vst.msk [vmem:[#allocation2 + $0x60] sm:$0xff] %vm1127, %v1741
        %1748 = vst.msk [vmem:[#allocation2 + $0x78] sm:$0xff] %vm1127, %v1742
        %1749 = vst.msk [vmem:[#allocation2 + $0x90] sm:$0xff] %vm1127, %v1743
        %1750 = vst.msk [vmem:[#allocation2 + $0xa8] sm:$0xff] %vm1127, %v1744
        %1751 = vst.msk [vmem:[#allocation2] sm:$0xff] %vm1127, 0.0
        %1752 = vst.msk [vmem:[#allocation2 + $0x18] sm:$0xff] %vm1127, 0.0
        %1753 = vst.msk [vmem:[#allocation2 + $0x30] sm:$0x3] %vm1135, 0.0
        %vm1754 = vcmp.lt.s32.totalorder %v585, 9
        %vm1755 = vcmp.lt.s32.totalorder %v586, 9
        %vm1756 = vcmp.lt.s32.totalorder %v587, 9
        %vm1757 = vcmp.lt.s32.totalorder %v588, 9
        %vm1758 = vcmp.lt.s32.totalorder %v589, 9
        %vm1759 = vcmp.lt.s32.totalorder %v590, 9
        %vm1760 = vcmp.lt.s32.totalorder %v591, 9
        %v1761 = vsel %vm1754, 1, 0
        %v1762 = vsel %vm1755, 1, 0
        %v1763 = vsel %vm1756, 1, 0
        %v1764 = vsel %vm1757, 1, 0
        %v1765 = vsel %vm1758, 1, 0
        %v1766 = vsel %vm1759, 1, 0
        %v1767 = vsel %vm1760, 1, 0
        %vm1768 = vcmp.eq.s32.totalorder %v1761, 1
        %vm1769 = vcmp.eq.s32.totalorder %v1762, 1
        %vm1770 = vcmp.eq.s32.totalorder %v1763, 1
        %vm1771 = vcmp.eq.s32.totalorder %v1764, 1
        %vm1772 = vcmp.eq.s32.totalorder %v1765, 1
        %vm1773 = vcmp.eq.s32.totalorder %v1766, 1
        %vm1774 = vcmp.eq.s32.totalorder %v1767, 1
        %v1776 = vrot.slane %v1675, 7
        %v1777 = vrot.slane %v1676, 7
        %v1778 = vsel %vm746, %v1776, %v1777
        %v1779 = vrot.slane %v1677, 7
        %v1780 = vsel %vm746, %v1777, %v1779
        %v1781 = vrot.slane %v1678, 7
        %v1782 = vsel %vm746, %v1779, %v1781
        %v1783 = vrot.slane %v1679, 7
        %v1784 = vsel %vm746, %v1781, %v1783
        %v1785 = vrot.slane %v1680, 7
        %v1786 = vsel %vm746, %v1783, %v1785
        %v1787 = vrot.slane %v1681, 7
        %v1788 = vsel %vm746, %v1785, %v1787
        %v1796 = vsel %vm1768, 0.0, %v1776
        %v1797 = vsel %vm1769, 0.0, %v1778
        %v1798 = vsel %vm1770, 0.0, %v1780
        %v1799 = vsel %vm1771, 0.0, %v1782
        %v1800 = vsel %vm1772, 0.0, %v1784
        %v1801 = vsel %vm1773, 0.0, %v1786
        %v1802 = vsel %vm1774, 0.0, %v1788
        %1810 = vrot.lane.b32.xlu0 %v1796, 32
        %v1811 = vpop.permute.xlu0 %1810
        %1812 = vrot.lane.b32.xlu0 %v1797, 32
        %v1813 = vpop.permute.xlu0 %1812
        %1814 = vrot.lane.b32.xlu0 %v1798, 32
        %v1815 = vpop.permute.xlu0 %1814
        %1816 = vrot.lane.b32.xlu0 %v1799, 32
        %v1817 = vpop.permute.xlu0 %1816
        %1818 = vrot.lane.b32.xlu0 %v1800, 32
        %v1819 = vpop.permute.xlu0 %1818
        %1820 = vrot.lane.b32.xlu0 %v1801, 32
        %v1821 = vpop.permute.xlu0 %1820
        %1822 = vrot.lane.b32.xlu0 %v1802, 32
        %v1823 = vpop.permute.xlu0 %1822
        %1831 = vst.msk [vmem:[#allocation2 + $0x18] sm:$0xfe] %vm1200, %v1811
        %1832 = vst.msk [vmem:[#allocation2 + $0x30] sm:$0xff] %vm1202, %v1813
        %1833 = vst.msk [vmem:[#allocation2 + $0x48] sm:$0xff] %vm1202, %v1815
        %1834 = vst.msk [vmem:[#allocation2 + $0x60] sm:$0xff] %vm1202, %v1817
        %1835 = vst.msk [vmem:[#allocation2 + $0x78] sm:$0xff] %vm1202, %v1819
        %1836 = vst.msk [vmem:[#allocation2 + $0x90] sm:$0xff] %vm1202, %v1821
        %1837 = vst.msk [vmem:[#allocation2 + $0xa8] sm:$0xff] %vm1202, %v1823
        %1838 = vst.msk [vmem:[#allocation2] sm:$0xff] %vm1202, 0.0
        %1839 = vst.msk [vmem:[#allocation2 + $0x18] sm:$0x1] %vm1210, 0.0
        %1841 = vrot.lane.b32.xlu0 %v1675, 64
        %v1842 = vpop.permute.xlu0 %1841
        %1843 = vrot.lane.b32.xlu0 %v1676, 64
        %v1844 = vpop.permute.xlu0 %1843
        %1845 = vrot.lane.b32.xlu0 %v1677, 64
        %v1846 = vpop.permute.xlu0 %1845
        %1847 = vrot.lane.b32.xlu0 %v1678, 64
        %v1848 = vpop.permute.xlu0 %1847
        %1849 = vrot.lane.b32.xlu0 %v1679, 64
        %v1850 = vpop.permute.xlu0 %1849
        %1851 = vrot.lane.b32.xlu0 %v1680, 64
        %v1852 = vpop.permute.xlu0 %1851
        %1853 = vrot.lane.b32.xlu0 %v1681, 64
        %v1854 = vpop.permute.xlu0 %1853
        %1855 = vrot.lane.b32.xlu0 %v1682, 64
        %v1856 = vpop.permute.xlu0 %1855
        %1865 = vst.msk [vmem:[#allocation2] sm:$0xff] %vm1236, %v1842
        %1866 = vst.msk [vmem:[#allocation2 + $0x18] sm:$0xff] %vm1236, %v1844
        %1867 = vst.msk [vmem:[#allocation2 + $0x30] sm:$0xff] %vm1236, %v1846
        %1868 = vst.msk [vmem:[#allocation2 + $0x48] sm:$0xff] %vm1236, %v1848
        %1869 = vst.msk [vmem:[#allocation2 + $0x60] sm:$0xff] %vm1236, %v1850
        %1870 = vst.msk [vmem:[#allocation2 + $0x78] sm:$0xff] %vm1236, %v1852
        %1871 = vst.msk [vmem:[#allocation2 + $0x90] sm:$0xff] %vm1236, %v1854
        %1872 = vst.msk [vmem:[#allocation2 + $0xa8] sm:$0xff] %vm1236, %v1856
        %v1873 = vld [vmem:[#allocation2] sm:$0xff]
        %v1874 = vld [vmem:[#allocation2 + $0x18] sm:$0xff]
        %v1875 = vld [vmem:[#allocation2 + $0x30] sm:$0xff]
        %v1876 = vld [vmem:[#allocation2 + $0x48] sm:$0xff]
        %v1877 = vld [vmem:[#allocation2 + $0x60] sm:$0xff]
        %v1878 = vld [vmem:[#allocation2 + $0x78] sm:$0xff]
        %v1879 = vld [vmem:[#allocation2 + $0x90] sm:$0xff]
        %v1880 = vld [vmem:[#allocation2 + $0xa8] sm:$0xff]
        %v1881 = vpack.c.bf16 %v1874, %v1873
        %v1882 = vpack.c.bf16 %v1876, %v1875
        %v1883 = vpack.c.bf16 %v1878, %v1877
        %v1884 = vpack.c.bf16 %v1880, %v1879
        %v1886 = vperm.slane %v1697, 0
        %v1900 = vunpack.c.l.b16 %v1684
        %v1901 = vunpack.c.l.b16 %v1685
        %v1902 = vunpack.c.l.b16 %v1686
        %v1903 = vunpack.c.l.b16 %v1687
        %v1904 = vunpack.c.l.b16 %v1688
        %v1905 = vunpack.c.l.b16 %v1689
        %v1906 = vunpack.c.l.b16 %v1690
        %v1907 = vunpack.c.l.b16 %v1691
        %v1908 = vunpack.c.l.b16 %v1692
        %v1909 = vunpack.c.l.b16 %v1693
        %v1910 = vunpack.c.l.b16 %v1694
        %v1911 = vunpack.c.l.b16 %v1695
        %v1912 = vpack.c.b16 %v1901, %v1900
        %v1913 = vpack.c.b16 %v1903, %v1902
        %v1914 = vpack.c.b16 %v1905, %v1904
        %v1915 = vpack.c.b16 %v1907, %v1906
        %v1916 = vpack.c.b16 %v1909, %v1908
        %v1917 = vpack.c.b16 %v1911, %v1910
        %v1925 = vsel %vm1296, %v1881, 0
        %v1928 = vsel %vm1296, %v1882, 0
        %v1931 = vsel %vm1296, %v1883, 0
        %v1934 = vsel %vm1296, %v1884, 0
        %1936 = vmatpush.bf16.msra.mxu0 0
        %1937 = vmatpush.bf16.msra.mxu0 0
        %1938 = vmatpush.bf16.msra.mxu0 %v1917
        %1939 = vmatpush.bf16.msra.mxu0 %v1916
        %1940 = vmatpush.bf16.msra.mxu0 %v1915
        %1941 = vmatpush.bf16.msra.mxu0 %v1914
        %1942 = vmatpush.bf16.msra.mxu0 %v1913
        %1943 = vmatpush.bf16.msra.mxu0 %v1912
        %1944 = vmatmul.bf16.gmra.mxu0 %v1925
        %v1945 = vpop.f32.mrf.mxu0
        %v1946 = vadd.f32 %v1886, %v1945
        %v1947 = vpop.f32.mrf.mxu0
        %v1948 = vadd.f32 %v1886, %v1947
        %1949 = vmatmul.bf16.gmra.mxu0 %v1928
        %v1950 = vpop.f32.mrf.mxu0
        %v1951 = vadd.f32 %v1886, %v1950
        %v1952 = vpop.f32.mrf.mxu0
        %v1953 = vadd.f32 %v1886, %v1952
        %1954 = vmatmul.bf16.gmra.mxu0 %v1931
        %v1955 = vpop.f32.mrf.mxu0
        %v1956 = vadd.f32 %v1886, %v1955
        %v1957 = vpop.f32.mrf.mxu0
        %v1958 = vadd.f32 %v1886, %v1957
        %1959 = vmatmul.bf16.gmra.mxu0 %v1934
        %v1960 = vpop.f32.mrf.mxu0
        %v1961 = vadd.f32 %v1886, %v1960
        %v1962 = vpop.f32.mrf.mxu0
        %v1963 = vadd.f32 %v1886, %v1962
        %1964 = vdwg.mxu0
        %v1965 = vmax.f32 %v1946, 0.0
        %v1966 = vmax.f32 %v1948, 0.0
        %v1967 = vmax.f32 %v1951, 0.0
        %v1968 = vmax.f32 %v1953, 0.0
        %v1969 = vmax.f32 %v1956, 0.0
        %v1970 = vmax.f32 %v1958, 0.0
        %v1971 = vmax.f32 %v1961, 0.0
        %v1972 = vmax.f32 %v1963, 0.0
        %v1973 = vadd.f32 %v1965, %v1675
        %v1974 = vadd.f32 %v1966, %v1676
        %v1975 = vadd.f32 %v1967, %v1677
        %v1976 = vadd.f32 %v1968, %v1678
        %v1977 = vadd.f32 %v1969, %v1679
        %v1978 = vadd.f32 %v1970, %v1680
        %v1979 = vadd.f32 %v1971, %v1681
        %v1980 = vadd.f32 %v1972, %v1682
        %s1981 = scalar_lea.vmem %s3, 144
        %v1982 = vld [vmem:[%s1981] sm:$0xf]
        %v1983 = vld [vmem:[%s1981 + $0x4] sm:$0xf]
        %v1984 = vld [vmem:[%s1981 + $0x8] sm:$0xf]
        %v1985 = vld [vmem:[%s1981 + $0xc] sm:$0xf]
        %v1986 = vld [vmem:[%s1981 + $0x10] sm:$0xf]
        %v1987 = vld [vmem:[%s1981 + $0x14] sm:$0xf]
        %v1988 = vld [vmem:[%s1981 + $0x18] sm:$0xf]
        %v1989 = vld [vmem:[%s1981 + $0x1c] sm:$0xf]
        %v1990 = vld [vmem:[%s1981 + $0x20] sm:$0xf]
        %v1991 = vld [vmem:[%s1981 + $0x24] sm:$0xf]
        %v1992 = vld [vmem:[%s1981 + $0x28] sm:$0xf]
        %v1993 = vld [vmem:[%s1981 + $0x2c] sm:$0xf]
        %s1994 = scalar_lea.vmem %s4, 3
        %v1995 = vld [vmem:[%s1994] sm:$0x1]
        %v2004 = vrot.slane %v1973, 6
        %v2005 = vrot.slane %v1974, 6
        %v2006 = vsel %vm681, %v2004, %v2005
        %v2007 = vrot.slane %v1975, 6
        %v2008 = vsel %vm681, %v2005, %v2007
        %v2009 = vrot.slane %v1976, 6
        %v2010 = vsel %vm681, %v2007, %v2009
        %v2011 = vrot.slane %v1977, 6
        %v2012 = vsel %vm681, %v2009, %v2011
        %v2013 = vrot.slane %v1978, 6
        %v2014 = vsel %vm681, %v2011, %v2013
        %v2015 = vrot.slane %v1979, 6
        %v2016 = vsel %vm681, %v2013, %v2015
        %v2017 = vrot.slane %v1980, 6
        %v2018 = vsel %vm681, %v2015, %v2017
        %v2027 = vsel %vm665, 0.0, %v2004
        %v2028 = vsel %vm666, 0.0, %v2006
        %v2029 = vsel %vm667, 0.0, %v2008
        %v2030 = vsel %vm668, 0.0, %v2010
        %v2031 = vsel %vm669, 0.0, %v2012
        %v2032 = vsel %vm670, 0.0, %v2014
        %v2033 = vsel %vm671, 0.0, %v2016
        %v2034 = vsel %vm672, 0.0, %v2018
        %2035 = vst.msk [vmem:[#allocation2] sm:$0xfc] %vm1125, %v2027
        %2036 = vst.msk [vmem:[#allocation2 + $0x18] sm:$0xff] %vm1127, %v2028
        %2037 = vst.msk [vmem:[#allocation2 + $0x30] sm:$0xff] %vm1127, %v2029
        %2038 = vst.msk [vmem:[#allocation2 + $0x48] sm:$0xff] %vm1127, %v2030
        %2039 = vst.msk [vmem:[#allocation2 + $0x60] sm:$0xff] %vm1127, %v2031
        %2040 = vst.msk [vmem:[#allocation2 + $0x78] sm:$0xff] %vm1127, %v2032
        %2041 = vst.msk [vmem:[#allocation2 + $0x90] sm:$0xff] %vm1127, %v2033
        %2042 = vst.msk [vmem:[#allocation2 + $0xa8] sm:$0xff] %vm1127, %v2034
        %2043 = vst.msk [vmem:[#allocation2] sm:$0x3] %vm1135, 0.0
        %v2044 = vrot.slane %v1973, 7
        %v2045 = vrot.slane %v1974, 7
        %v2046 = vsel %vm746, %v2044, %v2045
        %v2047 = vrot.slane %v1975, 7
        %v2048 = vsel %vm746, %v2045, %v2047
        %v2049 = vrot.slane %v1976, 7
        %v2050 = vsel %vm746, %v2047, %v2049
        %v2051 = vrot.slane %v1977, 7
        %v2052 = vsel %vm746, %v2049, %v2051
        %v2053 = vrot.slane %v1978, 7
        %v2054 = vsel %vm746, %v2051, %v2053
        %v2055 = vrot.slane %v1979, 7
        %v2056 = vsel %vm746, %v2053, %v2055
        %v2057 = vrot.slane %v1980, 7
        %v2058 = vsel %vm746, %v2055, %v2057
        %v2067 = vsel %vm738, 0.0, %v2044
        %v2068 = vsel %vm739, 0.0, %v2046
        %v2069 = vsel %vm740, 0.0, %v2048
        %v2070 = vsel %vm741, 0.0, %v2050
        %v2071 = vsel %vm742, 0.0, %v2052
        %v2072 = vsel %vm743, 0.0, %v2054
        %v2073 = vsel %vm744, 0.0, %v2056
        %v2074 = vsel %vm745, 0.0, %v2058
        %2083 = vrot.lane.b32.xlu0 %v2067, 32
        %v2084 = vpop.permute.xlu0 %2083
        %2085 = vrot.lane.b32.xlu0 %v2068, 32
        %v2086 = vpop.permute.xlu0 %2085
        %2087 = vrot.lane.b32.xlu0 %v2069, 32
        %v2088 = vpop.permute.xlu0 %2087
        %2089 = vrot.lane.b32.xlu0 %v2070, 32
        %v2090 = vpop.permute.xlu0 %2089
        %2091 = vrot.lane.b32.xlu0 %v2071, 32
        %v2092 = vpop.permute.xlu0 %2091
        %2093 = vrot.lane.b32.xlu0 %v2072, 32
        %v2094 = vpop.permute.xlu0 %2093
        %2095 = vrot.lane.b32.xlu0 %v2073, 32
        %v2096 = vpop.permute.xlu0 %2095
        %2097 = vrot.lane.b32.xlu0 %v2074, 32
        %v2098 = vpop.permute.xlu0 %2097
        %2107 = vst.msk [vmem:[#allocation2] sm:$0xfe] %vm1200, %v2084
        %2108 = vst.msk [vmem:[#allocation2 + $0x18] sm:$0xff] %vm1202, %v2086
        %2109 = vst.msk [vmem:[#allocation2 + $0x30] sm:$0xff] %vm1202, %v2088
        %2110 = vst.msk [vmem:[#allocation2 + $0x48] sm:$0xff] %vm1202, %v2090
        %2111 = vst.msk [vmem:[#allocation2 + $0x60] sm:$0xff] %vm1202, %v2092
        %2112 = vst.msk [vmem:[#allocation2 + $0x78] sm:$0xff] %vm1202, %v2094
        %2113 = vst.msk [vmem:[#allocation2 + $0x90] sm:$0xff] %vm1202, %v2096
        %2114 = vst.msk [vmem:[#allocation2 + $0xa8] sm:$0xff] %vm1202, %v2098
        %2115 = vst.msk [vmem:[#allocation2] sm:$0x1] %vm1210, 0.0
        %2116 = vrot.lane.b32.xlu0 %v1973, 64
        %v2117 = vpop.permute.xlu0 %2116
        %2118 = vrot.lane.b32.xlu0 %v1974, 64
        %v2119 = vpop.permute.xlu0 %2118
        %2120 = vrot.lane.b32.xlu0 %v1975, 64
        %v2121 = vpop.permute.xlu0 %2120
        %2122 = vrot.lane.b32.xlu0 %v1976, 64
        %v2123 = vpop.permute.xlu0 %2122
        %2124 = vrot.lane.b32.xlu0 %v1977, 64
        %v2125 = vpop.permute.xlu0 %2124
        %2126 = vrot.lane.b32.xlu0 %v1978, 64
        %v2127 = vpop.permute.xlu0 %2126
        %2128 = vrot.lane.b32.xlu0 %v1979, 64
        %v2129 = vpop.permute.xlu0 %2128
        %2130 = vrot.lane.b32.xlu0 %v1980, 64
        %v2131 = vpop.permute.xlu0 %2130
        %2140 = vst.msk [vmem:[#allocation2] sm:$0xff] %vm1236, %v2117
        %2141 = vst.msk [vmem:[#allocation2 + $0x18] sm:$0xff] %vm1236, %v2119
        %2142 = vst.msk [vmem:[#allocation2 + $0x30] sm:$0xff] %vm1236, %v2121
        %2143 = vst.msk [vmem:[#allocation2 + $0x48] sm:$0xff] %vm1236, %v2123
        %2144 = vst.msk [vmem:[#allocation2 + $0x60] sm:$0xff] %vm1236, %v2125
        %2145 = vst.msk [vmem:[#allocation2 + $0x78] sm:$0xff] %vm1236, %v2127
        %2146 = vst.msk [vmem:[#allocation2 + $0x90] sm:$0xff] %vm1236, %v2129
        %2147 = vst.msk [vmem:[#allocation2 + $0xa8] sm:$0xff] %vm1236, %v2131
        %v2148 = vld [vmem:[#allocation2] sm:$0xff]
        %v2149 = vld [vmem:[#allocation2 + $0x18] sm:$0xff]
        %v2150 = vld [vmem:[#allocation2 + $0x30] sm:$0xff]
        %v2151 = vld [vmem:[#allocation2 + $0x48] sm:$0xff]
        %v2152 = vld [vmem:[#allocation2 + $0x60] sm:$0xff]
        %v2153 = vld [vmem:[#allocation2 + $0x78] sm:$0xff]
        %v2154 = vld [vmem:[#allocation2 + $0x90] sm:$0xff]
        %v2155 = vld [vmem:[#allocation2 + $0xa8] sm:$0xff]
        %v2156 = vpack.c.bf16 %v2149, %v2148
        %v2157 = vpack.c.bf16 %v2151, %v2150
        %v2158 = vpack.c.bf16 %v2153, %v2152
        %v2159 = vpack.c.bf16 %v2155, %v2154
        %v2161 = vperm.slane %v1995, 0
        %v2175 = vunpack.c.l.b16 %v1982
        %v2176 = vunpack.c.l.b16 %v1983
        %v2177 = vunpack.c.l.b16 %v1984
        %v2178 = vunpack.c.l.b16 %v1985
        %v2179 = vunpack.c.l.b16 %v1986
        %v2180 = vunpack.c.l.b16 %v1987
        %v2181 = vunpack.c.l.b16 %v1988
        %v2182 = vunpack.c.l.b16 %v1989
        %v2183 = vunpack.c.l.b16 %v1990
        %v2184 = vunpack.c.l.b16 %v1991
        %v2185 = vunpack.c.l.b16 %v1992
        %v2186 = vunpack.c.l.b16 %v1993
        %v2187 = vpack.c.b16 %v2176, %v2175
        %v2188 = vpack.c.b16 %v2178, %v2177
        %v2189 = vpack.c.b16 %v2180, %v2179
        %v2190 = vpack.c.b16 %v2182, %v2181
        %v2191 = vpack.c.b16 %v2184, %v2183
        %v2192 = vpack.c.b16 %v2186, %v2185
        %v2200 = vsel %vm1296, %v2156, 0
        %v2203 = vsel %vm1296, %v2157, 0
        %v2206 = vsel %vm1296, %v2158, 0
        %v2209 = vsel %vm1296, %v2159, 0
        %2211 = vmatpush.bf16.msra.mxu0 0
        %2212 = vmatpush.bf16.msra.mxu0 0
        %2213 = vmatpush.bf16.msra.mxu0 %v2192
        %2214 = vmatpush.bf16.msra.mxu0 %v2191
        %2215 = vmatpush.bf16.msra.mxu0 %v2190
        %2216 = vmatpush.bf16.msra.mxu0 %v2189
        %2217 = vmatpush.bf16.msra.mxu0 %v2188
        %2218 = vmatpush.bf16.msra.mxu0 %v2187
        %2219 = vmatmul.bf16.gmra.mxu0 %v2200
        %v2220 = vpop.f32.mrf.mxu0
        %v2221 = vadd.f32 %v2161, %v2220
        %v2222 = vpop.f32.mrf.mxu0
        %v2223 = vadd.f32 %v2161, %v2222
        %2224 = vmatmul.bf16.gmra.mxu0 %v2203
        %v2225 = vpop.f32.mrf.mxu0
        %v2226 = vadd.f32 %v2161, %v2225
        %v2227 = vpop.f32.mrf.mxu0
        %v2228 = vadd.f32 %v2161, %v2227
        %2229 = vmatmul.bf16.gmra.mxu0 %v2206
        %v2230 = vpop.f32.mrf.mxu0
        %v2231 = vadd.f32 %v2161, %v2230
        %v2232 = vpop.f32.mrf.mxu0
        %v2233 = vadd.f32 %v2161, %v2232
        %2234 = vmatmul.bf16.gmra.mxu0 %v2209
        %v2235 = vpop.f32.mrf.mxu0
        %v2236 = vadd.f32 %v2161, %v2235
        %v2237 = vpop.f32.mrf.mxu0
        %v2238 = vadd.f32 %v2161, %v2237
        %2239 = vdwg.mxu0
        %v2240 = vmax.f32 %v2221, 0.0
        %v2241 = vmax.f32 %v2223, 0.0
        %v2242 = vmax.f32 %v2226, 0.0
        %v2243 = vmax.f32 %v2228, 0.0
        %v2244 = vmax.f32 %v2231, 0.0
        %v2245 = vmax.f32 %v2233, 0.0
        %v2246 = vmax.f32 %v2236, 0.0
        %v2247 = vmax.f32 %v2238, 0.0
        %v2248 = vadd.f32 %v2240, %v1973
        %v2249 = vadd.f32 %v2241, %v1974
        %v2250 = vadd.f32 %v2242, %v1975
        %v2251 = vadd.f32 %v2243, %v1976
        %v2252 = vadd.f32 %v2244, %v1977
        %v2253 = vadd.f32 %v2245, %v1978
        %v2254 = vadd.f32 %v2246, %v1979
        %v2255 = vadd.f32 %v2247, %v1980
        %s2256 = scalar_lea.vmem %s3, 192
        %v2257 = vld [vmem:[%s2256] sm:$0xf]
        %v2258 = vld [vmem:[%s2256 + $0x4] sm:$0xf]
        %v2259 = vld [vmem:[%s2256 + $0x8] sm:$0xf]
        %v2260 = vld [vmem:[%s2256 + $0xc] sm:$0xf]
        %v2261 = vld [vmem:[%s2256 + $0x10] sm:$0xf]
        %v2262 = vld [vmem:[%s2256 + $0x14] sm:$0xf]
        %v2263 = vld [vmem:[%s2256 + $0x18] sm:$0xf]
        %v2264 = vld [vmem:[%s2256 + $0x1c] sm:$0xf]
        %v2265 = vld [vmem:[%s2256 + $0x20] sm:$0xf]
        %v2266 = vld [vmem:[%s2256 + $0x24] sm:$0xf]
        %v2267 = vld [vmem:[%s2256 + $0x28] sm:$0xf]
        %v2268 = vld [vmem:[%s2256 + $0x2c] sm:$0xf]
        %s2269 = scalar_lea.vmem %s4, 4
        %v2270 = vld [vmem:[%s2269] sm:$0x1]
        %v2279 = vrot.slane %v2248, 2
        %v2280 = vrot.slane %v2249, 2
        %v2281 = vsel %vm1401, %v2279, %v2280
        %v2282 = vrot.slane %v2250, 2
        %v2283 = vsel %vm1401, %v2280, %v2282
        %v2284 = vrot.slane %v2251, 2
        %v2285 = vsel %vm1401, %v2282, %v2284
        %v2286 = vrot.slane %v2252, 2
        %v2287 = vsel %vm1401, %v2284, %v2286
        %v2288 = vrot.slane %v2253, 2
        %v2289 = vsel %vm1401, %v2286, %v2288
        %v2290 = vrot.slane %v2254, 2
        %v2291 = vsel %vm1401, %v2288, %v2290
        %v2292 = vrot.slane %v2255, 2
        %v2293 = vsel %vm1401, %v2290, %v2292
        %v2302 = vsel %vm1385, 0.0, %v2279
        %v2303 = vsel %vm1386, 0.0, %v2281
        %v2304 = vsel %vm1387, 0.0, %v2283
        %v2305 = vsel %vm1388, 0.0, %v2285
        %v2306 = vsel %vm1389, 0.0, %v2287
        %v2307 = vsel %vm1390, 0.0, %v2289
        %v2308 = vsel %vm1391, 0.0, %v2291
        %v2309 = vsel %vm1392, 0.0, %v2293
        %2310 = vst.msk [vmem:[#allocation2] sm:$0xc0] %vm1433, %v2302
        %2311 = vst.msk [vmem:[#allocation2 + $0x18] sm:$0xff] %vm1127, %v2303
        %2312 = vst.msk [vmem:[#allocation2 + $0x30] sm:$0xff] %vm1127, %v2304
        %2313 = vst.msk [vmem:[#allocation2 + $0x48] sm:$0xff] %vm1127, %v2305
        %2314 = vst.msk [vmem:[#allocation2 + $0x60] sm:$0xff] %vm1127, %v2306
        %2315 = vst.msk [vmem:[#allocation2 + $0x78] sm:$0xff] %vm1127, %v2307
        %2316 = vst.msk [vmem:[#allocation2 + $0x90] sm:$0xff] %vm1127, %v2308
        %2317 = vst.msk [vmem:[#allocation2 + $0xa8] sm:$0xff] %vm1127, %v2309
        %2318 = vst.msk [vmem:[#allocation2] sm:$0x3f] %vm1442, 0.0
        %v2319 = vrot.slane %v2248, 5
        %v2320 = vrot.slane %v2249, 5
        %v2321 = vsel %vm1468, %v2319, %v2320
        %v2322 = vrot.slane %v2250, 5
        %v2323 = vsel %vm1468, %v2320, %v2322
        %v2324 = vrot.slane %v2251, 5
        %v2325 = vsel %vm1468, %v2322, %v2324
        %v2326 = vrot.slane %v2252, 5
        %v2327 = vsel %vm1468, %v2324, %v2326
        %v2328 = vrot.slane %v2253, 5
        %v2329 = vsel %vm1468, %v2326, %v2328
        %v2330 = vrot.slane %v2254, 5
        %v2331 = vsel %vm1468, %v2328, %v2330
        %v2332 = vrot.slane %v2255, 5
        %v2333 = vsel %vm1468, %v2330, %v2332
        %v2342 = vsel %vm1460, 0.0, %v2319
        %v2343 = vsel %vm1461, 0.0, %v2321
        %v2344 = vsel %vm1462, 0.0, %v2323
        %v2345 = vsel %vm1463, 0.0, %v2325
        %v2346 = vsel %vm1464, 0.0, %v2327
        %v2347 = vsel %vm1465, 0.0, %v2329
        %v2348 = vsel %vm1466, 0.0, %v2331
        %v2349 = vsel %vm1467, 0.0, %v2333
        %2358 = vrot.lane.b32.xlu0 %v2342, 32
        %v2359 = vpop.permute.xlu0 %2358
        %2360 = vrot.lane.b32.xlu0 %v2343, 32
        %v2361 = vpop.permute.xlu0 %2360
        %2362 = vrot.lane.b32.xlu0 %v2344, 32
        %v2363 = vpop.permute.xlu0 %2362
        %2364 = vrot.lane.b32.xlu0 %v2345, 32
        %v2365 = vpop.permute.xlu0 %2364
        %2366 = vrot.lane.b32.xlu0 %v2346, 32
        %v2367 = vpop.permute.xlu0 %2366
        %2368 = vrot.lane.b32.xlu0 %v2347, 32
        %v2369 = vpop.permute.xlu0 %2368
        %2370 = vrot.lane.b32.xlu0 %v2348, 32
        %v2371 = vpop.permute.xlu0 %2370
        %2372 = vrot.lane.b32.xlu0 %v2349, 32
        %v2373 = vpop.permute.xlu0 %2372
        %2382 = vst.msk [vmem:[#allocation2] sm:$0xf8] %vm1532, %v2359
        %2383 = vst.msk [vmem:[#allocation2 + $0x18] sm:$0xff] %vm1202, %v2361
        %2384 = vst.msk [vmem:[#allocation2 + $0x30] sm:$0xff] %vm1202, %v2363
        %2385 = vst.msk [vmem:[#allocation2 + $0x48] sm:$0xff] %vm1202, %v2365
        %2386 = vst.msk [vmem:[#allocation2 + $0x60] sm:$0xff] %vm1202, %v2367
        %2387 = vst.msk [vmem:[#allocation2 + $0x78] sm:$0xff] %vm1202, %v2369
        %2388 = vst.msk [vmem:[#allocation2 + $0x90] sm:$0xff] %vm1202, %v2371
        %2389 = vst.msk [vmem:[#allocation2 + $0xa8] sm:$0xff] %vm1202, %v2373
        %2390 = vst.msk [vmem:[#allocation2] sm:$0x7] %vm1541, 0.0
        %2391 = vrot.lane.b32.xlu0 %v2248, 64
        %v2392 = vpop.permute.xlu0 %2391
        %2393 = vrot.lane.b32.xlu0 %v2249, 64
        %v2394 = vpop.permute.xlu0 %2393
        %2395 = vrot.lane.b32.xlu0 %v2250, 64
        %v2396 = vpop.permute.xlu0 %2395
        %2397 = vrot.lane.b32.xlu0 %v2251, 64
        %v2398 = vpop.permute.xlu0 %2397
        %2399 = vrot.lane.b32.xlu0 %v2252, 64
        %v2400 = vpop.permute.xlu0 %2399
        %2401 = vrot.lane.b32.xlu0 %v2253, 64
        %v2402 = vpop.permute.xlu0 %2401
        %2403 = vrot.lane.b32.xlu0 %v2254, 64
        %v2404 = vpop.permute.xlu0 %2403
        %2405 = vrot.lane.b32.xlu0 %v2255, 64
        %v2406 = vpop.permute.xlu0 %2405
        %2415 = vst.msk [vmem:[#allocation2] sm:$0xff] %vm1236, %v2392
        %2416 = vst.msk [vmem:[#allocation2 + $0x18] sm:$0xff] %vm1236, %v2394
        %2417 = vst.msk [vmem:[#allocation2 + $0x30] sm:$0xff] %vm1236, %v2396
        %2418 = vst.msk [vmem:[#allocation2 + $0x48] sm:$0xff] %vm1236, %v2398
        %2419 = vst.msk [vmem:[#allocation2 + $0x60] sm:$0xff] %vm1236, %v2400
        %2420 = vst.msk [vmem:[#allocation2 + $0x78] sm:$0xff] %vm1236, %v2402
        %2421 = vst.msk [vmem:[#allocation2 + $0x90] sm:$0xff] %vm1236, %v2404
        %2422 = vst.msk [vmem:[#allocation2 + $0xa8] sm:$0xff] %vm1236, %v2406
        %v2423 = vld [vmem:[#allocation2] sm:$0xff]
        %v2424 = vld [vmem:[#allocation2 + $0x18] sm:$0xff]
        %v2425 = vld [vmem:[#allocation2 + $0x30] sm:$0xff]
        %v2426 = vld [vmem:[#allocation2 + $0x48] sm:$0xff]
        %v2427 = vld [vmem:[#allocation2 + $0x60] sm:$0xff]
        %v2428 = vld [vmem:[#allocation2 + $0x78] sm:$0xff]
        %v2429 = vld [vmem:[#allocation2 + $0x90] sm:$0xff]
        %v2430 = vld [vmem:[#allocation2 + $0xa8] sm:$0xff]
        %v2431 = vpack.c.bf16 %v2424, %v2423
        %v2432 = vpack.c.bf16 %v2426, %v2425
        %v2433 = vpack.c.bf16 %v2428, %v2427
        %v2434 = vpack.c.bf16 %v2430, %v2429
        %v2436 = vperm.slane %v2270, 0
        %v2450 = vunpack.c.l.b16 %v2257
        %v2451 = vunpack.c.l.b16 %v2258
        %v2452 = vunpack.c.l.b16 %v2259
        %v2453 = vunpack.c.l.b16 %v2260
        %v2454 = vunpack.c.l.b16 %v2261
        %v2455 = vunpack.c.l.b16 %v2262
        %v2456 = vunpack.c.l.b16 %v2263
        %v2457 = vunpack.c.l.b16 %v2264
        %v2458 = vunpack.c.l.b16 %v2265
        %v2459 = vunpack.c.l.b16 %v2266
        %v2460 = vunpack.c.l.b16 %v2267
        %v2461 = vunpack.c.l.b16 %v2268
        %v2462 = vpack.c.b16 %v2451, %v2450
        %v2463 = vpack.c.b16 %v2453, %v2452
        %v2464 = vpack.c.b16 %v2455, %v2454
        %v2465 = vpack.c.b16 %v2457, %v2456
        %v2466 = vpack.c.b16 %v2459, %v2458
        %v2467 = vpack.c.b16 %v2461, %v2460
        %v2475 = vsel %vm1296, %v2431, 0
        %v2478 = vsel %vm1296, %v2432, 0
        %v2481 = vsel %vm1296, %v2433, 0
        %v2484 = vsel %vm1296, %v2434, 0
        %2486 = vmatpush.bf16.msra.mxu0 0
        %2487 = vmatpush.bf16.msra.mxu0 0
        %2488 = vmatpush.bf16.msra.mxu0 %v2467
        %2489 = vmatpush.bf16.msra.mxu0 %v2466
        %2490 = vmatpush.bf16.msra.mxu0 %v2465
        %2491 = vmatpush.bf16.msra.mxu0 %v2464
        %2492 = vmatpush.bf16.msra.mxu0 %v2463
        %2493 = vmatpush.bf16.msra.mxu0 %v2462
        %2494 = vmatmul.bf16.gmra.mxu0 %v2475
        %v2495 = vpop.f32.mrf.mxu0
        %v2496 = vadd.f32 %v2436, %v2495
        %v2497 = vpop.f32.mrf.mxu0
        %v2498 = vadd.f32 %v2436, %v2497
        %2499 = vmatmul.bf16.gmra.mxu0 %v2478
        %v2500 = vpop.f32.mrf.mxu0
        %v2501 = vadd.f32 %v2436, %v2500
        %v2502 = vpop.f32.mrf.mxu0
        %v2503 = vadd.f32 %v2436, %v2502
        %2504 = vmatmul.bf16.gmra.mxu0 %v2481
        %v2505 = vpop.f32.mrf.mxu0
        %v2506 = vadd.f32 %v2436, %v2505
        %v2507 = vpop.f32.mrf.mxu0
        %v2508 = vadd.f32 %v2436, %v2507
        %2509 = vmatmul.bf16.gmra.mxu0 %v2484
        %v2510 = vpop.f32.mrf.mxu0
        %v2511 = vadd.f32 %v2436, %v2510
        %v2512 = vpop.f32.mrf.mxu0
        %v2513 = vadd.f32 %v2436, %v2512
        %2514 = vdwg.mxu0
        %v2515 = vmax.f32 %v2496, 0.0
        %v2516 = vmax.f32 %v2498, 0.0
        %v2517 = vmax.f32 %v2501, 0.0
        %v2518 = vmax.f32 %v2503, 0.0
        %v2519 = vmax.f32 %v2506, 0.0
        %v2520 = vmax.f32 %v2508, 0.0
        %v2521 = vmax.f32 %v2511, 0.0
        %v2522 = vmax.f32 %v2513, 0.0
        %v2523 = vadd.f32 %v2515, %v2248
        %v2524 = vadd.f32 %v2516, %v2249
        %v2525 = vadd.f32 %v2517, %v2250
        %v2526 = vadd.f32 %v2518, %v2251
        %v2527 = vadd.f32 %v2519, %v2252
        %v2528 = vadd.f32 %v2520, %v2253
        %v2529 = vadd.f32 %v2521, %v2254
        %v2530 = vadd.f32 %v2522, %v2255
        %s2531 = scalar_lea.vmem %s3, 240
        %v2532 = vld [vmem:[%s2531] sm:$0xf]
        %v2533 = vld [vmem:[%s2531 + $0x4] sm:$0xf]
        %v2534 = vld [vmem:[%s2531 + $0x8] sm:$0xf]
        %v2535 = vld [vmem:[%s2531 + $0xc] sm:$0xf]
        %v2536 = vld [vmem:[%s2531 + $0x10] sm:$0xf]
        %v2537 = vld [vmem:[%s2531 + $0x14] sm:$0xf]
        %v2538 = vld [vmem:[%s2531 + $0x18] sm:$0xf]
        %v2539 = vld [vmem:[%s2531 + $0x1c] sm:$0xf]
        %v2540 = vld [vmem:[%s2531 + $0x20] sm:$0xf]
        %v2541 = vld [vmem:[%s2531 + $0x24] sm:$0xf]
        %v2542 = vld [vmem:[%s2531 + $0x28] sm:$0xf]
        %v2543 = vld [vmem:[%s2531 + $0x2c] sm:$0xf]
        %s2544 = scalar_lea.vmem %s4, 5
        %v2545 = vld [vmem:[%s2544] sm:$0x1]
        %v2552 = vrot.slane %v2523, 6
        %v2553 = vrot.slane %v2524, 6
        %v2554 = vsel %vm681, %v2552, %v2553
        %v2555 = vrot.slane %v2525, 6
        %v2556 = vsel %vm681, %v2553, %v2555
        %v2557 = vrot.slane %v2526, 6
        %v2558 = vsel %vm681, %v2555, %v2557
        %v2559 = vrot.slane %v2527, 6
        %v2560 = vsel %vm681, %v2557, %v2559
        %v2561 = vrot.slane %v2528, 6
        %v2562 = vsel %vm681, %v2559, %v2561
        %v2569 = vsel %vm1710, 0.0, %v2552
        %v2570 = vsel %vm1711, 0.0, %v2554
        %v2571 = vsel %vm1712, 0.0, %v2556
        %v2572 = vsel %vm1713, 0.0, %v2558
        %v2573 = vsel %vm1714, 0.0, %v2560
        %v2574 = vsel %vm1715, 0.0, %v2562
        %2575 = vst.msk [vmem:[#allocation2 + $0x30] sm:$0xfc] %vm1125, %v2569
        %2576 = vst.msk [vmem:[#allocation2 + $0x48] sm:$0xff] %vm1127, %v2570
        %2577 = vst.msk [vmem:[#allocation2 + $0x60] sm:$0xff] %vm1127, %v2571
        %2578 = vst.msk [vmem:[#allocation2 + $0x78] sm:$0xff] %vm1127, %v2572
        %2579 = vst.msk [vmem:[#allocation2 + $0x90] sm:$0xff] %vm1127, %v2573
        %2580 = vst.msk [vmem:[#allocation2 + $0xa8] sm:$0xff] %vm1127, %v2574
        %2581 = vst.msk [vmem:[#allocation2] sm:$0xff] %vm1127, 0.0
        %2582 = vst.msk [vmem:[#allocation2 + $0x18] sm:$0xff] %vm1127, 0.0
        %2583 = vst.msk [vmem:[#allocation2 + $0x30] sm:$0x3] %vm1135, 0.0
        %v2585 = vrot.slane %v2523, 7
        %v2586 = vrot.slane %v2524, 7
        %v2587 = vsel %vm746, %v2585, %v2586
        %v2588 = vrot.slane %v2525, 7
        %v2589 = vsel %vm746, %v2586, %v2588
        %v2590 = vrot.slane %v2526, 7
        %v2591 = vsel %vm746, %v2588, %v2590
        %v2592 = vrot.slane %v2527, 7
        %v2593 = vsel %vm746, %v2590, %v2592
        %v2594 = vrot.slane %v2528, 7
        %v2595 = vsel %vm746, %v2592, %v2594
        %v2596 = vrot.slane %v2529, 7
        %v2597 = vsel %vm746, %v2594, %v2596
        %v2605 = vsel %vm1768, 0.0, %v2585
        %v2606 = vsel %vm1769, 0.0, %v2587
        %v2607 = vsel %vm1770, 0.0, %v2589
        %v2608 = vsel %vm1771, 0.0, %v2591
        %v2609 = vsel %vm1772, 0.0, %v2593
        %v2610 = vsel %vm1773, 0.0, %v2595
        %v2611 = vsel %vm1774, 0.0, %v2597
        %2619 = vrot.lane.b32.xlu0 %v2605, 32
        %v2620 = vpop.permute.xlu0 %2619
        %2621 = vrot.lane.b32.xlu0 %v2606, 32
        %v2622 = vpop.permute.xlu0 %2621
        %2623 = vrot.lane.b32.xlu0 %v2607, 32
        %v2624 = vpop.permute.xlu0 %2623
        %2625 = vrot.lane.b32.xlu0 %v2608, 32
        %v2626 = vpop.permute.xlu0 %2625
        %2627 = vrot.lane.b32.xlu0 %v2609, 32
        %v2628 = vpop.permute.xlu0 %2627
        %2629 = vrot.lane.b32.xlu0 %v2610, 32
        %v2630 = vpop.permute.xlu0 %2629
        %2631 = vrot.lane.b32.xlu0 %v2611, 32
        %v2632 = vpop.permute.xlu0 %2631
        %2640 = vst.msk [vmem:[#allocation2 + $0x18] sm:$0xfe] %vm1200, %v2620
        %2641 = vst.msk [vmem:[#allocation2 + $0x30] sm:$0xff] %vm1202, %v2622
        %2642 = vst.msk [vmem:[#allocation2 + $0x48] sm:$0xff] %vm1202, %v2624
        %2643 = vst.msk [vmem:[#allocation2 + $0x60] sm:$0xff] %vm1202, %v2626
        %2644 = vst.msk [vmem:[#allocation2 + $0x78] sm:$0xff] %vm1202, %v2628
        %2645 = vst.msk [vmem:[#allocation2 + $0x90] sm:$0xff] %vm1202, %v2630
        %2646 = vst.msk [vmem:[#allocation2 + $0xa8] sm:$0xff] %vm1202, %v2632
        %2647 = vst.msk [vmem:[#allocation2] sm:$0xff] %vm1202, 0.0
        %2648 = vst.msk [vmem:[#allocation2 + $0x18] sm:$0x1] %vm1210, 0.0
        %2650 = vrot.lane.b32.xlu0 %v2523, 64
        %v2651 = vpop.permute.xlu0 %2650
        %2652 = vrot.lane.b32.xlu0 %v2524, 64
        %v2653 = vpop.permute.xlu0 %2652
        %2654 = vrot.lane.b32.xlu0 %v2525, 64
        %v2655 = vpop.permute.xlu0 %2654
        %2656 = vrot.lane.b32.xlu0 %v2526, 64
        %v2657 = vpop.permute.xlu0 %2656
        %2658 = vrot.lane.b32.xlu0 %v2527, 64
        %v2659 = vpop.permute.xlu0 %2658
        %2660 = vrot.lane.b32.xlu0 %v2528, 64
        %v2661 = vpop.permute.xlu0 %2660
        %2662 = vrot.lane.b32.xlu0 %v2529, 64
        %v2663 = vpop.permute.xlu0 %2662
        %2664 = vrot.lane.b32.xlu0 %v2530, 64
        %v2665 = vpop.permute.xlu0 %2664
        %2674 = vst.msk [vmem:[#allocation2] sm:$0xff] %vm1236, %v2651
        %2675 = vst.msk [vmem:[#allocation2 + $0x18] sm:$0xff] %vm1236, %v2653
        %2676 = vst.msk [vmem:[#allocation2 + $0x30] sm:$0xff] %vm1236, %v2655
        %2677 = vst.msk [vmem:[#allocation2 + $0x48] sm:$0xff] %vm1236, %v2657
        %2678 = vst.msk [vmem:[#allocation2 + $0x60] sm:$0xff] %vm1236, %v2659
        %2679 = vst.msk [vmem:[#allocation2 + $0x78] sm:$0xff] %vm1236, %v2661
        %2680 = vst.msk [vmem:[#allocation2 + $0x90] sm:$0xff] %vm1236, %v2663
        %2681 = vst.msk [vmem:[#allocation2 + $0xa8] sm:$0xff] %vm1236, %v2665
        %v2682 = vld [vmem:[#allocation2] sm:$0xff]
        %v2683 = vld [vmem:[#allocation2 + $0x18] sm:$0xff]
        %v2684 = vld [vmem:[#allocation2 + $0x30] sm:$0xff]
        %v2685 = vld [vmem:[#allocation2 + $0x48] sm:$0xff]
        %v2686 = vld [vmem:[#allocation2 + $0x60] sm:$0xff]
        %v2687 = vld [vmem:[#allocation2 + $0x78] sm:$0xff]
        %v2688 = vld [vmem:[#allocation2 + $0x90] sm:$0xff]
        %v2689 = vld [vmem:[#allocation2 + $0xa8] sm:$0xff]
        %v2690 = vpack.c.bf16 %v2683, %v2682
        %v2691 = vpack.c.bf16 %v2685, %v2684
        %v2692 = vpack.c.bf16 %v2687, %v2686
        %v2693 = vpack.c.bf16 %v2689, %v2688
        %v2695 = vperm.slane %v2545, 0
        %v2709 = vunpack.c.l.b16 %v2532
        %v2710 = vunpack.c.l.b16 %v2533
        %v2711 = vunpack.c.l.b16 %v2534
        %v2712 = vunpack.c.l.b16 %v2535
        %v2713 = vunpack.c.l.b16 %v2536
        %v2714 = vunpack.c.l.b16 %v2537
        %v2715 = vunpack.c.l.b16 %v2538
        %v2716 = vunpack.c.l.b16 %v2539
        %v2717 = vunpack.c.l.b16 %v2540
        %v2718 = vunpack.c.l.b16 %v2541
        %v2719 = vunpack.c.l.b16 %v2542
        %v2720 = vunpack.c.l.b16 %v2543
        %v2721 = vpack.c.b16 %v2710, %v2709
        %v2722 = vpack.c.b16 %v2712, %v2711
        %v2723 = vpack.c.b16 %v2714, %v2713
        %v2724 = vpack.c.b16 %v2716, %v2715
        %v2725 = vpack.c.b16 %v2718, %v2717
        %v2726 = vpack.c.b16 %v2720, %v2719
        %v2734 = vsel %vm1296, %v2690, 0
        %v2737 = vsel %vm1296, %v2691, 0
        %v2740 = vsel %vm1296, %v2692, 0
        %v2743 = vsel %vm1296, %v2693, 0
        %2745 = vmatpush.bf16.msra.mxu0 0
        %2746 = vmatpush.bf16.msra.mxu0 0
        %2747 = vmatpush.bf16.msra.mxu0 %v2726
        %2748 = vmatpush.bf16.msra.mxu0 %v2725
        %2749 = vmatpush.bf16.msra.mxu0 %v2724
        %2750 = vmatpush.bf16.msra.mxu0 %v2723
        %2751 = vmatpush.bf16.msra.mxu0 %v2722
        %2752 = vmatpush.bf16.msra.mxu0 %v2721
        %2753 = vmatmul.bf16.gmra.mxu0 %v2734
        %v2754 = vpop.f32.mrf.mxu0
        %v2755 = vadd.f32 %v2695, %v2754
        %v2756 = vpop.f32.mrf.mxu0
        %v2757 = vadd.f32 %v2695, %v2756
        %2758 = vmatmul.bf16.gmra.mxu0 %v2737
        %v2759 = vpop.f32.mrf.mxu0
        %v2760 = vadd.f32 %v2695, %v2759
        %v2761 = vpop.f32.mrf.mxu0
        %v2762 = vadd.f32 %v2695, %v2761
        %2763 = vmatmul.bf16.gmra.mxu0 %v2740
        %v2764 = vpop.f32.mrf.mxu0
        %v2765 = vadd.f32 %v2695, %v2764
        %v2766 = vpop.f32.mrf.mxu0
        %v2767 = vadd.f32 %v2695, %v2766
        %2768 = vmatmul.bf16.gmra.mxu0 %v2743
        %v2769 = vpop.f32.mrf.mxu0
        %v2770 = vadd.f32 %v2695, %v2769
        %v2771 = vpop.f32.mrf.mxu0
        %v2772 = vadd.f32 %v2695, %v2771
        %2773 = vdwg.mxu0
        %v2774 = vmax.f32 %v2755, 0.0
        %v2775 = vmax.f32 %v2757, 0.0
        %v2776 = vmax.f32 %v2760, 0.0
        %v2777 = vmax.f32 %v2762, 0.0
        %v2778 = vmax.f32 %v2765, 0.0
        %v2779 = vmax.f32 %v2767, 0.0
        %v2780 = vmax.f32 %v2770, 0.0
        %v2781 = vmax.f32 %v2772, 0.0
        %v2782 = vadd.f32 %v2774, %v2523
        %v2783 = vadd.f32 %v2775, %v2524
        %v2784 = vadd.f32 %v2776, %v2525
        %v2785 = vadd.f32 %v2777, %v2526
        %v2786 = vadd.f32 %v2778, %v2527
        %v2787 = vadd.f32 %v2779, %v2528
        %v2788 = vadd.f32 %v2780, %v2529
        %v2789 = vadd.f32 %v2781, %v2530
        %s2790 = scalar_lea.vmem %s3, 288
        %v2791 = vld [vmem:[%s2790] sm:$0xf]
        %v2792 = vld [vmem:[%s2790 + $0x4] sm:$0xf]
        %v2793 = vld [vmem:[%s2790 + $0x8] sm:$0xf]
        %v2794 = vld [vmem:[%s2790 + $0xc] sm:$0xf]
        %v2795 = vld [vmem:[%s2790 + $0x10] sm:$0xf]
        %v2796 = vld [vmem:[%s2790 + $0x14] sm:$0xf]
        %v2797 = vld [vmem:[%s2790 + $0x18] sm:$0xf]
        %v2798 = vld [vmem:[%s2790 + $0x1c] sm:$0xf]
        %v2799 = vld [vmem:[%s2790 + $0x20] sm:$0xf]
        %v2800 = vld [vmem:[%s2790 + $0x24] sm:$0xf]
        %v2801 = vld [vmem:[%s2790 + $0x28] sm:$0xf]
        %v2802 = vld [vmem:[%s2790 + $0x2c] sm:$0xf]
        %s2803 = scalar_lea.vmem %s4, 6
        %v2804 = vld [vmem:[%s2803] sm:$0x1]
        %v2813 = vrot.slane %v2782, 6
        %v2814 = vrot.slane %v2783, 6
        %v2815 = vsel %vm681, %v2813, %v2814
        %v2816 = vrot.slane %v2784, 6
        %v2817 = vsel %vm681, %v2814, %v2816
        %v2818 = vrot.slane %v2785, 6
        %v2819 = vsel %vm681, %v2816, %v2818
        %v2820 = vrot.slane %v2786, 6
        %v2821 = vsel %vm681, %v2818, %v2820
        %v2822 = vrot.slane %v2787, 6
        %v2823 = vsel %vm681, %v2820, %v2822
        %v2824 = vrot.slane %v2788, 6
        %v2825 = vsel %vm681, %v2822, %v2824
        %v2826 = vrot.slane %v2789, 6
        %v2827 = vsel %vm681, %v2824, %v2826
        %v2836 = vsel %vm665, 0.0, %v2813
        %v2837 = vsel %vm666, 0.0, %v2815
        %v2838 = vsel %vm667, 0.0, %v2817
        %v2839 = vsel %vm668, 0.0, %v2819
        %v2840 = vsel %vm669, 0.0, %v2821
        %v2841 = vsel %vm670, 0.0, %v2823
        %v2842 = vsel %vm671, 0.0, %v2825
        %v2843 = vsel %vm672, 0.0, %v2827
        %2844 = vst.msk [vmem:[#allocation2] sm:$0xfc] %vm1125, %v2836
        %2845 = vst.msk [vmem:[#allocation2 + $0x18] sm:$0xff] %vm1127, %v2837
        %2846 = vst.msk [vmem:[#allocation2 + $0x30] sm:$0xff] %vm1127, %v2838
        %2847 = vst.msk [vmem:[#allocation2 + $0x48] sm:$0xff] %vm1127, %v2839
        %2848 = vst.msk [vmem:[#allocation2 + $0x60] sm:$0xff] %vm1127, %v2840
        %2849 = vst.msk [vmem:[#allocation2 + $0x78] sm:$0xff] %vm1127, %v2841
        %2850 = vst.msk [vmem:[#allocation2 + $0x90] sm:$0xff] %vm1127, %v2842
        %2851 = vst.msk [vmem:[#allocation2 + $0xa8] sm:$0xff] %vm1127, %v2843
        %2852 = vst.msk [vmem:[#allocation2] sm:$0x3] %vm1135, 0.0
        %v2853 = vrot.slane %v2782, 7
        %v2854 = vrot.slane %v2783, 7
        %v2855 = vsel %vm746, %v2853, %v2854
        %v2856 = vrot.slane %v2784, 7
        %v2857 = vsel %vm746, %v2854, %v2856
        %v2858 = vrot.slane %v2785, 7
        %v2859 = vsel %vm746, %v2856, %v2858
        %v2860 = vrot.slane %v2786, 7
        %v2861 = vsel %vm746, %v2858, %v2860
        %v2862 = vrot.slane %v2787, 7
        %v2863 = vsel %vm746, %v2860, %v2862
        %v2864 = vrot.slane %v2788, 7
        %v2865 = vsel %vm746, %v2862, %v2864
        %v2866 = vrot.slane %v2789, 7
        %v2867 = vsel %vm746, %v2864, %v2866
        %v2876 = vsel %vm738, 0.0, %v2853
        %v2877 = vsel %vm739, 0.0, %v2855
        %v2878 = vsel %vm740, 0.0, %v2857
        %v2879 = vsel %vm741, 0.0, %v2859
        %v2880 = vsel %vm742, 0.0, %v2861
        %v2881 = vsel %vm743, 0.0, %v2863
        %v2882 = vsel %vm744, 0.0, %v2865
        %v2883 = vsel %vm745, 0.0, %v2867
        %2892 = vrot.lane.b32.xlu0 %v2876, 32
        %v2893 = vpop.permute.xlu0 %2892
        %2894 = vrot.lane.b32.xlu0 %v2877, 32
        %v2895 = vpop.permute.xlu0 %2894
        %2896 = vrot.lane.b32.xlu0 %v2878, 32
        %v2897 = vpop.permute.xlu0 %2896
        %2898 = vrot.lane.b32.xlu0 %v2879, 32
        %v2899 = vpop.permute.xlu0 %2898
        %2900 = vrot.lane.b32.xlu0 %v2880, 32
        %v2901 = vpop.permute.xlu0 %2900
        %2902 = vrot.lane.b32.xlu0 %v2881, 32
        %v2903 = vpop.permute.xlu0 %2902
        %2904 = vrot.lane.b32.xlu0 %v2882, 32
        %v2905 = vpop.permute.xlu0 %2904
        %2906 = vrot.lane.b32.xlu0 %v2883, 32
        %v2907 = vpop.permute.xlu0 %2906
        %2916 = vst.msk [vmem:[#allocation2] sm:$0xfe] %vm1200, %v2893
        %2917 = vst.msk [vmem:[#allocation2 + $0x18] sm:$0xff] %vm1202, %v2895
        %2918 = vst.msk [vmem:[#allocation2 + $0x30] sm:$0xff] %vm1202, %v2897
        %2919 = vst.msk [vmem:[#allocation2 + $0x48] sm:$0xff] %vm1202, %v2899
        %2920 = vst.msk [vmem:[#allocation2 + $0x60] sm:$0xff] %vm1202, %v2901
        %2921 = vst.msk [vmem:[#allocation2 + $0x78] sm:$0xff] %vm1202, %v2903
        %2922 = vst.msk [vmem:[#allocation2 + $0x90] sm:$0xff] %vm1202, %v2905
        %2923 = vst.msk [vmem:[#allocation2 + $0xa8] sm:$0xff] %vm1202, %v2907
        %2924 = vst.msk [vmem:[#allocation2] sm:$0x1] %vm1210, 0.0
        %2925 = vrot.lane.b32.xlu0 %v2782, 64
        %v2926 = vpop.permute.xlu0 %2925
        %2927 = vrot.lane.b32.xlu0 %v2783, 64
        %v2928 = vpop.permute.xlu0 %2927
        %2929 = vrot.lane.b32.xlu0 %v2784, 64
        %v2930 = vpop.permute.xlu0 %2929
        %2931 = vrot.lane.b32.xlu0 %v2785, 64
        %v2932 = vpop.permute.xlu0 %2931
        %2933 = vrot.lane.b32.xlu0 %v2786, 64
        %v2934 = vpop.permute.xlu0 %2933
        %2935 = vrot.lane.b32.xlu0 %v2787, 64
        %v2936 = vpop.permute.xlu0 %2935
        %2937 = vrot.lane.b32.xlu0 %v2788, 64
        %v2938 = vpop.permute.xlu0 %2937
        %2939 = vrot.lane.b32.xlu0 %v2789, 64
        %v2940 = vpop.permute.xlu0 %2939
        %2949 = vst.msk [vmem:[#allocation2] sm:$0xff] %vm1236, %v2926
        %2950 = vst.msk [vmem:[#allocation2 + $0x18] sm:$0xff] %vm1236, %v2928
        %2951 = vst.msk [vmem:[#allocation2 + $0x30] sm:$0xff] %vm1236, %v2930
        %2952 = vst.msk [vmem:[#allocation2 + $0x48] sm:$0xff] %vm1236, %v2932
        %2953 = vst.msk [vmem:[#allocation2 + $0x60] sm:$0xff] %vm1236, %v2934
        %2954 = vst.msk [vmem:[#allocation2 + $0x78] sm:$0xff] %vm1236, %v2936
        %2955 = vst.msk [vmem:[#allocation2 + $0x90] sm:$0xff] %vm1236, %v2938
        %2956 = vst.msk [vmem:[#allocation2 + $0xa8] sm:$0xff] %vm1236, %v2940
        %v2957 = vld [vmem:[#allocation2] sm:$0xff]
        %v2958 = vld [vmem:[#allocation2 + $0x18] sm:$0xff]
        %v2959 = vld [vmem:[#allocation2 + $0x30] sm:$0xff]
        %v2960 = vld [vmem:[#allocation2 + $0x48] sm:$0xff]
        %v2961 = vld [vmem:[#allocation2 + $0x60] sm:$0xff]
        %v2962 = vld [vmem:[#allocation2 + $0x78] sm:$0xff]
        %v2963 = vld [vmem:[#allocation2 + $0x90] sm:$0xff]
        %v2964 = vld [vmem:[#allocation2 + $0xa8] sm:$0xff]
        %v2965 = vpack.c.bf16 %v2958, %v2957
        %v2966 = vpack.c.bf16 %v2960, %v2959
        %v2967 = vpack.c.bf16 %v2962, %v2961
        %v2968 = vpack.c.bf16 %v2964, %v2963
        %v2970 = vperm.slane %v2804, 0
        %v2984 = vunpack.c.l.b16 %v2791
        %v2985 = vunpack.c.l.b16 %v2792
        %v2986 = vunpack.c.l.b16 %v2793
        %v2987 = vunpack.c.l.b16 %v2794
        %v2988 = vunpack.c.l.b16 %v2795
        %v2989 = vunpack.c.l.b16 %v2796
        %v2990 = vunpack.c.l.b16 %v2797
        %v2991 = vunpack.c.l.b16 %v2798
        %v2992 = vunpack.c.l.b16 %v2799
        %v2993 = vunpack.c.l.b16 %v2800
        %v2994 = vunpack.c.l.b16 %v2801
        %v2995 = vunpack.c.l.b16 %v2802
        %v2996 = vpack.c.b16 %v2985, %v2984
        %v2997 = vpack.c.b16 %v2987, %v2986
        %v2998 = vpack.c.b16 %v2989, %v2988
        %v2999 = vpack.c.b16 %v2991, %v2990
        %v3000 = vpack.c.b16 %v2993, %v2992
        %v3001 = vpack.c.b16 %v2995, %v2994
        %v3009 = vsel %vm1296, %v2965, 0
        %v3012 = vsel %vm1296, %v2966, 0
        %v3015 = vsel %vm1296, %v2967, 0
        %v3018 = vsel %vm1296, %v2968, 0
        %3020 = vmatpush.bf16.msra.mxu0 0
        %3021 = vmatpush.bf16.msra.mxu0 0
        %3022 = vmatpush.bf16.msra.mxu0 %v3001
        %3023 = vmatpush.bf16.msra.mxu0 %v3000
        %3024 = vmatpush.bf16.msra.mxu0 %v2999
        %3025 = vmatpush.bf16.msra.mxu0 %v2998
        %3026 = vmatpush.bf16.msra.mxu0 %v2997
        %3027 = vmatpush.bf16.msra.mxu0 %v2996
        %3028 = vmatmul.bf16.gmra.mxu0 %v3009
        %v3029 = vpop.f32.mrf.mxu0
        %v3030 = vadd.f32 %v2970, %v3029
        %v3031 = vpop.f32.mrf.mxu0
        %v3032 = vadd.f32 %v2970, %v3031
        %3033 = vmatmul.bf16.gmra.mxu0 %v3012
        %v3034 = vpop.f32.mrf.mxu0
        %v3035 = vadd.f32 %v2970, %v3034
        %v3036 = vpop.f32.mrf.mxu0
        %v3037 = vadd.f32 %v2970, %v3036
        %3038 = vmatmul.bf16.gmra.mxu0 %v3015
        %v3039 = vpop.f32.mrf.mxu0
        %v3040 = vadd.f32 %v2970, %v3039
        %v3041 = vpop.f32.mrf.mxu0
        %v3042 = vadd.f32 %v2970, %v3041
        %3043 = vmatmul.bf16.gmra.mxu0 %v3018
        %v3044 = vpop.f32.mrf.mxu0
        %v3045 = vadd.f32 %v2970, %v3044
        %v3046 = vpop.f32.mrf.mxu0
        %v3047 = vadd.f32 %v2970, %v3046
        %3048 = vdwg.mxu0
        %v3049 = vmax.f32 %v3030, 0.0
        %v3050 = vmax.f32 %v3032, 0.0
        %v3051 = vmax.f32 %v3035, 0.0
        %v3052 = vmax.f32 %v3037, 0.0
        %v3053 = vmax.f32 %v3040, 0.0
        %v3054 = vmax.f32 %v3042, 0.0
        %v3055 = vmax.f32 %v3045, 0.0
        %v3056 = vmax.f32 %v3047, 0.0
        %v3057 = vadd.f32 %v3049, %v2782
        %v3058 = vadd.f32 %v3050, %v2783
        %v3059 = vadd.f32 %v3051, %v2784
        %v3060 = vadd.f32 %v3052, %v2785
        %v3061 = vadd.f32 %v3053, %v2786
        %v3062 = vadd.f32 %v3054, %v2787
        %v3063 = vadd.f32 %v3055, %v2788
        %v3064 = vadd.f32 %v3056, %v2789
        %s3065 = scalar_lea.vmem %s3, 336
        %v3066 = vld [vmem:[%s3065] sm:$0xf]
        %v3067 = vld [vmem:[%s3065 + $0x4] sm:$0xf]
        %v3068 = vld [vmem:[%s3065 + $0x8] sm:$0xf]
        %v3069 = vld [vmem:[%s3065 + $0xc] sm:$0xf]
        %v3070 = vld [vmem:[%s3065 + $0x10] sm:$0xf]
        %v3071 = vld [vmem:[%s3065 + $0x14] sm:$0xf]
        %v3072 = vld [vmem:[%s3065 + $0x18] sm:$0xf]
        %v3073 = vld [vmem:[%s3065 + $0x1c] sm:$0xf]
        %v3074 = vld [vmem:[%s3065 + $0x20] sm:$0xf]
        %v3075 = vld [vmem:[%s3065 + $0x24] sm:$0xf]
        %v3076 = vld [vmem:[%s3065 + $0x28] sm:$0xf]
        %v3077 = vld [vmem:[%s3065 + $0x2c] sm:$0xf]
        %s3078 = scalar_lea.vmem %s4, 7
        %v3079 = vld [vmem:[%s3078] sm:$0x1]
        %v3088 = vrot.slane %v3057, 2
        %v3089 = vrot.slane %v3058, 2
        %v3090 = vsel %vm1401, %v3088, %v3089
        %v3091 = vrot.slane %v3059, 2
        %v3092 = vsel %vm1401, %v3089, %v3091
        %v3093 = vrot.slane %v3060, 2
        %v3094 = vsel %vm1401, %v3091, %v3093
        %v3095 = vrot.slane %v3061, 2
        %v3096 = vsel %vm1401, %v3093, %v3095
        %v3097 = vrot.slane %v3062, 2
        %v3098 = vsel %vm1401, %v3095, %v3097
        %v3099 = vrot.slane %v3063, 2
        %v3100 = vsel %vm1401, %v3097, %v3099
        %v3101 = vrot.slane %v3064, 2
        %v3102 = vsel %vm1401, %v3099, %v3101
        %v3111 = vsel %vm1385, 0.0, %v3088
        %v3112 = vsel %vm1386, 0.0, %v3090
        %v3113 = vsel %vm1387, 0.0, %v3092
        %v3114 = vsel %vm1388, 0.0, %v3094
        %v3115 = vsel %vm1389, 0.0, %v3096
        %v3116 = vsel %vm1390, 0.0, %v3098
        %v3117 = vsel %vm1391, 0.0, %v3100
        %v3118 = vsel %vm1392, 0.0, %v3102
        %3119 = vst.msk [vmem:[#allocation2] sm:$0xc0] %vm1433, %v3111
        %3120 = vst.msk [vmem:[#allocation2 + $0x18] sm:$0xff] %vm1127, %v3112
        %3121 = vst.msk [vmem:[#allocation2 + $0x30] sm:$0xff] %vm1127, %v3113
        %3122 = vst.msk [vmem:[#allocation2 + $0x48] sm:$0xff] %vm1127, %v3114
        %3123 = vst.msk [vmem:[#allocation2 + $0x60] sm:$0xff] %vm1127, %v3115
        %3124 = vst.msk [vmem:[#allocation2 + $0x78] sm:$0xff] %vm1127, %v3116
        %3125 = vst.msk [vmem:[#allocation2 + $0x90] sm:$0xff] %vm1127, %v3117
        %3126 = vst.msk [vmem:[#allocation2 + $0xa8] sm:$0xff] %vm1127, %v3118
        %3127 = vst.msk [vmem:[#allocation2] sm:$0x3f] %vm1442, 0.0
        %v3128 = vrot.slane %v3057, 5
        %v3129 = vrot.slane %v3058, 5
        %v3130 = vsel %vm1468, %v3128, %v3129
        %v3131 = vrot.slane %v3059, 5
        %v3132 = vsel %vm1468, %v3129, %v3131
        %v3133 = vrot.slane %v3060, 5
        %v3134 = vsel %vm1468, %v3131, %v3133
        %v3135 = vrot.slane %v3061, 5
        %v3136 = vsel %vm1468, %v3133, %v3135
        %v3137 = vrot.slane %v3062, 5
        %v3138 = vsel %vm1468, %v3135, %v3137
        %v3139 = vrot.slane %v3063, 5
        %v3140 = vsel %vm1468, %v3137, %v3139
        %v3141 = vrot.slane %v3064, 5
        %v3142 = vsel %vm1468, %v3139, %v3141
        %v3151 = vsel %vm1460, 0.0, %v3128
        %v3152 = vsel %vm1461, 0.0, %v3130
        %v3153 = vsel %vm1462, 0.0, %v3132
        %v3154 = vsel %vm1463, 0.0, %v3134
        %v3155 = vsel %vm1464, 0.0, %v3136
        %v3156 = vsel %vm1465, 0.0, %v3138
        %v3157 = vsel %vm1466, 0.0, %v3140
        %v3158 = vsel %vm1467, 0.0, %v3142
        %3167 = vrot.lane.b32.xlu0 %v3151, 32
        %v3168 = vpop.permute.xlu0 %3167
        %3169 = vrot.lane.b32.xlu0 %v3152, 32
        %v3170 = vpop.permute.xlu0 %3169
        %3171 = vrot.lane.b32.xlu0 %v3153, 32
        %v3172 = vpop.permute.xlu0 %3171
        %3173 = vrot.lane.b32.xlu0 %v3154, 32
        %v3174 = vpop.permute.xlu0 %3173
        %3175 = vrot.lane.b32.xlu0 %v3155, 32
        %v3176 = vpop.permute.xlu0 %3175
        %3177 = vrot.lane.b32.xlu0 %v3156, 32
        %v3178 = vpop.permute.xlu0 %3177
        %3179 = vrot.lane.b32.xlu0 %v3157, 32
        %v3180 = vpop.permute.xlu0 %3179
        %3181 = vrot.lane.b32.xlu0 %v3158, 32
        %v3182 = vpop.permute.xlu0 %3181
        %3191 = vst.msk [vmem:[#allocation2] sm:$0xf8] %vm1532, %v3168
        %3192 = vst.msk [vmem:[#allocation2 + $0x18] sm:$0xff] %vm1202, %v3170
        %3193 = vst.msk [vmem:[#allocation2 + $0x30] sm:$0xff] %vm1202, %v3172
        %3194 = vst.msk [vmem:[#allocation2 + $0x48] sm:$0xff] %vm1202, %v3174
        %3195 = vst.msk [vmem:[#allocation2 + $0x60] sm:$0xff] %vm1202, %v3176
        %3196 = vst.msk [vmem:[#allocation2 + $0x78] sm:$0xff] %vm1202, %v3178
        %3197 = vst.msk [vmem:[#allocation2 + $0x90] sm:$0xff] %vm1202, %v3180
        %3198 = vst.msk [vmem:[#allocation2 + $0xa8] sm:$0xff] %vm1202, %v3182
        %3199 = vst.msk [vmem:[#allocation2] sm:$0x7] %vm1541, 0.0
        %3200 = vrot.lane.b32.xlu0 %v3057, 64
        %v3201 = vpop.permute.xlu0 %3200
        %3202 = vrot.lane.b32.xlu0 %v3058, 64
        %v3203 = vpop.permute.xlu0 %3202
        %3204 = vrot.lane.b32.xlu0 %v3059, 64
        %v3205 = vpop.permute.xlu0 %3204
        %3206 = vrot.lane.b32.xlu0 %v3060, 64
        %v3207 = vpop.permute.xlu0 %3206
        %3208 = vrot.lane.b32.xlu0 %v3061, 64
        %v3209 = vpop.permute.xlu0 %3208
        %3210 = vrot.lane.b32.xlu0 %v3062, 64
        %v3211 = vpop.permute.xlu0 %3210
        %3212 = vrot.lane.b32.xlu0 %v3063, 64
        %v3213 = vpop.permute.xlu0 %3212
        %3214 = vrot.lane.b32.xlu0 %v3064, 64
        %v3215 = vpop.permute.xlu0 %3214
        %3224 = vst.msk [vmem:[#allocation2] sm:$0xff] %vm1236, %v3201
        %3225 = vst.msk [vmem:[#allocation2 + $0x18] sm:$0xff] %vm1236, %v3203
        %3226 = vst.msk [vmem:[#allocation2 + $0x30] sm:$0xff] %vm1236, %v3205
        %3227 = vst.msk [vmem:[#allocation2 + $0x48] sm:$0xff] %vm1236, %v3207
        %3228 = vst.msk [vmem:[#allocation2 + $0x60] sm:$0xff] %vm1236, %v3209
        %3229 = vst.msk [vmem:[#allocation2 + $0x78] sm:$0xff] %vm1236, %v3211
        %3230 = vst.msk [vmem:[#allocation2 + $0x90] sm:$0xff] %vm1236, %v3213
        %3231 = vst.msk [vmem:[#allocation2 + $0xa8] sm:$0xff] %vm1236, %v3215
        %v3232 = vld [vmem:[#allocation2] sm:$0xff]
        %v3233 = vld [vmem:[#allocation2 + $0x18] sm:$0xff]
        %v3234 = vld [vmem:[#allocation2 + $0x30] sm:$0xff]
        %v3235 = vld [vmem:[#allocation2 + $0x48] sm:$0xff]
        %v3236 = vld [vmem:[#allocation2 + $0x60] sm:$0xff]
        %v3237 = vld [vmem:[#allocation2 + $0x78] sm:$0xff]
        %v3238 = vld [vmem:[#allocation2 + $0x90] sm:$0xff]
        %v3239 = vld [vmem:[#allocation2 + $0xa8] sm:$0xff]
        %v3240 = vpack.c.bf16 %v3233, %v3232
        %v3241 = vpack.c.bf16 %v3235, %v3234
        %v3242 = vpack.c.bf16 %v3237, %v3236
        %v3243 = vpack.c.bf16 %v3239, %v3238
        %v3245 = vperm.slane %v3079, 0
        %v3259 = vunpack.c.l.b16 %v3066
        %v3260 = vunpack.c.l.b16 %v3067
        %v3261 = vunpack.c.l.b16 %v3068
        %v3262 = vunpack.c.l.b16 %v3069
        %v3263 = vunpack.c.l.b16 %v3070
        %v3264 = vunpack.c.l.b16 %v3071
        %v3265 = vunpack.c.l.b16 %v3072
        %v3266 = vunpack.c.l.b16 %v3073
        %v3267 = vunpack.c.l.b16 %v3074
        %v3268 = vunpack.c.l.b16 %v3075
        %v3269 = vunpack.c.l.b16 %v3076
        %v3270 = vunpack.c.l.b16 %v3077
        %v3271 = vpack.c.b16 %v3260, %v3259
        %v3272 = vpack.c.b16 %v3262, %v3261
        %v3273 = vpack.c.b16 %v3264, %v3263
        %v3274 = vpack.c.b16 %v3266, %v3265
        %v3275 = vpack.c.b16 %v3268, %v3267
        %v3276 = vpack.c.b16 %v3270, %v3269
        %v3284 = vsel %vm1296, %v3240, 0
        %v3287 = vsel %vm1296, %v3241, 0
        %v3290 = vsel %vm1296, %v3242, 0
        %v3293 = vsel %vm1296, %v3243, 0
        %3295 = vmatpush.bf16.msra.mxu0 0
        %3296 = vmatpush.bf16.msra.mxu0 0
        %3297 = vmatpush.bf16.msra.mxu0 %v3276
        %3298 = vmatpush.bf16.msra.mxu0 %v3275
        %3299 = vmatpush.bf16.msra.mxu0 %v3274
        %3300 = vmatpush.bf16.msra.mxu0 %v3273
        %3301 = vmatpush.bf16.msra.mxu0 %v3272
        %3302 = vmatpush.bf16.msra.mxu0 %v3271
        %3303 = vmatmul.bf16.gmra.mxu0 %v3284
        %v3304 = vpop.f32.mrf.mxu0
        %v3305 = vadd.f32 %v3245, %v3304
        %v3306 = vpop.f32.mrf.mxu0
        %v3307 = vadd.f32 %v3245, %v3306
        %3308 = vmatmul.bf16.gmra.mxu0 %v3287
        %v3309 = vpop.f32.mrf.mxu0
        %v3310 = vadd.f32 %v3245, %v3309
        %v3311 = vpop.f32.mrf.mxu0
        %v3312 = vadd.f32 %v3245, %v3311
        %3313 = vmatmul.bf16.gmra.mxu0 %v3290
        %v3314 = vpop.f32.mrf.mxu0
        %v3315 = vadd.f32 %v3245, %v3314
        %v3316 = vpop.f32.mrf.mxu0
        %v3317 = vadd.f32 %v3245, %v3316
        %3318 = vmatmul.bf16.gmra.mxu0 %v3293
        %v3319 = vpop.f32.mrf.mxu0
        %v3320 = vadd.f32 %v3245, %v3319
        %v3321 = vpop.f32.mrf.mxu0
        %v3322 = vadd.f32 %v3245, %v3321
        %3323 = vdwg.mxu0
        %v3324 = vmax.f32 %v3305, 0.0
        %v3325 = vmax.f32 %v3307, 0.0
        %v3326 = vmax.f32 %v3310, 0.0
        %v3327 = vmax.f32 %v3312, 0.0
        %v3328 = vmax.f32 %v3315, 0.0
        %v3329 = vmax.f32 %v3317, 0.0
        %v3330 = vmax.f32 %v3320, 0.0
        %v3331 = vmax.f32 %v3322, 0.0
        %v3332 = vadd.f32 %v3324, %v3057
        %v3333 = vadd.f32 %v3325, %v3058
        %v3334 = vadd.f32 %v3326, %v3059
        %v3335 = vadd.f32 %v3327, %v3060
        %v3336 = vadd.f32 %v3328, %v3061
        %v3337 = vadd.f32 %v3329, %v3062
        %v3338 = vadd.f32 %v3330, %v3063
        %v3339 = vadd.f32 %v3331, %v3064
        %s3340 = scalar_lea.vmem %s3, 384
        %v3341 = vld [vmem:[%s3340] sm:$0xf]
        %v3342 = vld [vmem:[%s3340 + $0x4] sm:$0xf]
        %v3343 = vld [vmem:[%s3340 + $0x8] sm:$0xf]
        %v3344 = vld [vmem:[%s3340 + $0xc] sm:$0xf]
        %v3345 = vld [vmem:[%s3340 + $0x10] sm:$0xf]
        %v3346 = vld [vmem:[%s3340 + $0x14] sm:$0xf]
        %v3347 = vld [vmem:[%s3340 + $0x18] sm:$0xf]
        %v3348 = vld [vmem:[%s3340 + $0x1c] sm:$0xf]
        %v3349 = vld [vmem:[%s3340 + $0x20] sm:$0xf]
        %v3350 = vld [vmem:[%s3340 + $0x24] sm:$0xf]
        %v3351 = vld [vmem:[%s3340 + $0x28] sm:$0xf]
        %v3352 = vld [vmem:[%s3340 + $0x2c] sm:$0xf]
        %s3353 = scalar_lea.vmem %s4, 8
        %v3354 = vld [vmem:[%s3353] sm:$0x1]
        %v3361 = vrot.slane %v3332, 6
        %v3362 = vrot.slane %v3333, 6
        %v3363 = vsel %vm681, %v3361, %v3362
        %v3364 = vrot.slane %v3334, 6
        %v3365 = vsel %vm681, %v3362, %v3364
        %v3366 = vrot.slane %v3335, 6
        %v3367 = vsel %vm681, %v3364, %v3366
        %v3368 = vrot.slane %v3336, 6
        %v3369 = vsel %vm681, %v3366, %v3368
        %v3370 = vrot.slane %v3337, 6
        %v3371 = vsel %vm681, %v3368, %v3370
        %v3378 = vsel %vm1710, 0.0, %v3361
        %v3379 = vsel %vm1711, 0.0, %v3363
        %v3380 = vsel %vm1712, 0.0, %v3365
        %v3381 = vsel %vm1713, 0.0, %v3367
        %v3382 = vsel %vm1714, 0.0, %v3369
        %v3383 = vsel %vm1715, 0.0, %v3371
        %3384 = vst.msk [vmem:[#allocation2 + $0x30] sm:$0xfc] %vm1125, %v3378
        %3385 = vst.msk [vmem:[#allocation2 + $0x48] sm:$0xff] %vm1127, %v3379
        %3386 = vst.msk [vmem:[#allocation2 + $0x60] sm:$0xff] %vm1127, %v3380
        %3387 = vst.msk [vmem:[#allocation2 + $0x78] sm:$0xff] %vm1127, %v3381
        %3388 = vst.msk [vmem:[#allocation2 + $0x90] sm:$0xff] %vm1127, %v3382
        %3389 = vst.msk [vmem:[#allocation2 + $0xa8] sm:$0xff] %vm1127, %v3383
        %3390 = vst.msk [vmem:[#allocation2] sm:$0xff] %vm1127, 0.0
        %3391 = vst.msk [vmem:[#allocation2 + $0x18] sm:$0xff] %vm1127, 0.0
        %3392 = vst.msk [vmem:[#allocation2 + $0x30] sm:$0x3] %vm1135, 0.0
        %v3394 = vrot.slane %v3332, 7
        %v3395 = vrot.slane %v3333, 7
        %v3396 = vsel %vm746, %v3394, %v3395
        %v3397 = vrot.slane %v3334, 7
        %v3398 = vsel %vm746, %v3395, %v3397
        %v3399 = vrot.slane %v3335, 7
        %v3400 = vsel %vm746, %v3397, %v3399
        %v3401 = vrot.slane %v3336, 7
        %v3402 = vsel %vm746, %v3399, %v3401
        %v3403 = vrot.slane %v3337, 7
        %v3404 = vsel %vm746, %v3401, %v3403
        %v3405 = vrot.slane %v3338, 7
        %v3406 = vsel %vm746, %v3403, %v3405
        %v3414 = vsel %vm1768, 0.0, %v3394
        %v3415 = vsel %vm1769, 0.0, %v3396
        %v3416 = vsel %vm1770, 0.0, %v3398
        %v3417 = vsel %vm1771, 0.0, %v3400
        %v3418 = vsel %vm1772, 0.0, %v3402
        %v3419 = vsel %vm1773, 0.0, %v3404
        %v3420 = vsel %vm1774, 0.0, %v3406
        %3428 = vrot.lane.b32.xlu0 %v3414, 32
        %v3429 = vpop.permute.xlu0 %3428
        %3430 = vrot.lane.b32.xlu0 %v3415, 32
        %v3431 = vpop.permute.xlu0 %3430
        %3432 = vrot.lane.b32.xlu0 %v3416, 32
        %v3433 = vpop.permute.xlu0 %3432
        %3434 = vrot.lane.b32.xlu0 %v3417, 32
        %v3435 = vpop.permute.xlu0 %3434
        %3436 = vrot.lane.b32.xlu0 %v3418, 32
        %v3437 = vpop.permute.xlu0 %3436
        %3438 = vrot.lane.b32.xlu0 %v3419, 32
        %v3439 = vpop.permute.xlu0 %3438
        %3440 = vrot.lane.b32.xlu0 %v3420, 32
        %v3441 = vpop.permute.xlu0 %3440
        %3449 = vst.msk [vmem:[#allocation2 + $0x18] sm:$0xfe] %vm1200, %v3429
        %3450 = vst.msk [vmem:[#allocation2 + $0x30] sm:$0xff] %vm1202, %v3431
        %3451 = vst.msk [vmem:[#allocation2 + $0x48] sm:$0xff] %vm1202, %v3433
        %3452 = vst.msk [vmem:[#allocation2 + $0x60] sm:$0xff] %vm1202, %v3435
        %3453 = vst.msk [vmem:[#allocation2 + $0x78] sm:$0xff] %vm1202, %v3437
        %3454 = vst.msk [vmem:[#allocation2 + $0x90] sm:$0xff] %vm1202, %v3439
        %3455 = vst.msk [vmem:[#allocation2 + $0xa8] sm:$0xff] %vm1202, %v3441
        %3456 = vst.msk [vmem:[#allocation2] sm:$0xff] %vm1202, 0.0
        %3457 = vst.msk [vmem:[#allocation2 + $0x18] sm:$0x1] %vm1210, 0.0
        %3459 = vrot.lane.b32.xlu0 %v3332, 64
        %v3460 = vpop.permute.xlu0 %3459
        %3461 = vrot.lane.b32.xlu0 %v3333, 64
        %v3462 = vpop.permute.xlu0 %3461
        %3463 = vrot.lane.b32.xlu0 %v3334, 64
        %v3464 = vpop.permute.xlu0 %3463
        %3465 = vrot.lane.b32.xlu0 %v3335, 64
        %v3466 = vpop.permute.xlu0 %3465
        %3467 = vrot.lane.b32.xlu0 %v3336, 64
        %v3468 = vpop.permute.xlu0 %3467
        %3469 = vrot.lane.b32.xlu0 %v3337, 64
        %v3470 = vpop.permute.xlu0 %3469
        %3471 = vrot.lane.b32.xlu0 %v3338, 64
        %v3472 = vpop.permute.xlu0 %3471
        %3473 = vrot.lane.b32.xlu0 %v3339, 64
        %v3474 = vpop.permute.xlu0 %3473
        %3483 = vst.msk [vmem:[#allocation2] sm:$0xff] %vm1236, %v3460
        %3484 = vst.msk [vmem:[#allocation2 + $0x18] sm:$0xff] %vm1236, %v3462
        %3485 = vst.msk [vmem:[#allocation2 + $0x30] sm:$0xff] %vm1236, %v3464
        %3486 = vst.msk [vmem:[#allocation2 + $0x48] sm:$0xff] %vm1236, %v3466
        %3487 = vst.msk [vmem:[#allocation2 + $0x60] sm:$0xff] %vm1236, %v3468
        %3488 = vst.msk [vmem:[#allocation2 + $0x78] sm:$0xff] %vm1236, %v3470
        %3489 = vst.msk [vmem:[#allocation2 + $0x90] sm:$0xff] %vm1236, %v3472
        %3490 = vst.msk [vmem:[#allocation2 + $0xa8] sm:$0xff] %vm1236, %v3474
        %v3491 = vld [vmem:[#allocation2] sm:$0xff]
        %v3492 = vld [vmem:[#allocation2 + $0x18] sm:$0xff]
        %v3493 = vld [vmem:[#allocation2 + $0x30] sm:$0xff]
        %v3494 = vld [vmem:[#allocation2 + $0x48] sm:$0xff]
        %v3495 = vld [vmem:[#allocation2 + $0x60] sm:$0xff]
        %v3496 = vld [vmem:[#allocation2 + $0x78] sm:$0xff]
        %v3497 = vld [vmem:[#allocation2 + $0x90] sm:$0xff]
        %v3498 = vld [vmem:[#allocation2 + $0xa8] sm:$0xff]
        %v3499 = vpack.c.bf16 %v3492, %v3491
        %v3500 = vpack.c.bf16 %v3494, %v3493
        %v3501 = vpack.c.bf16 %v3496, %v3495
        %v3502 = vpack.c.bf16 %v3498, %v3497
        %v3504 = vperm.slane %v3354, 0
        %v3518 = vunpack.c.l.b16 %v3341
        %v3519 = vunpack.c.l.b16 %v3342
        %v3520 = vunpack.c.l.b16 %v3343
        %v3521 = vunpack.c.l.b16 %v3344
        %v3522 = vunpack.c.l.b16 %v3345
        %v3523 = vunpack.c.l.b16 %v3346
        %v3524 = vunpack.c.l.b16 %v3347
        %v3525 = vunpack.c.l.b16 %v3348
        %v3526 = vunpack.c.l.b16 %v3349
        %v3527 = vunpack.c.l.b16 %v3350
        %v3528 = vunpack.c.l.b16 %v3351
        %v3529 = vunpack.c.l.b16 %v3352
        %v3530 = vpack.c.b16 %v3519, %v3518
        %v3531 = vpack.c.b16 %v3521, %v3520
        %v3532 = vpack.c.b16 %v3523, %v3522
        %v3533 = vpack.c.b16 %v3525, %v3524
        %v3534 = vpack.c.b16 %v3527, %v3526
        %v3535 = vpack.c.b16 %v3529, %v3528
        %v3543 = vsel %vm1296, %v3499, 0
        %v3546 = vsel %vm1296, %v3500, 0
        %v3549 = vsel %vm1296, %v3501, 0
        %v3552 = vsel %vm1296, %v3502, 0
        %3554 = vmatpush.bf16.msra.mxu0 0
        %3555 = vmatpush.bf16.msra.mxu0 0
        %3556 = vmatpush.bf16.msra.mxu0 %v3535
        %3557 = vmatpush.bf16.msra.mxu0 %v3534
        %3558 = vmatpush.bf16.msra.mxu0 %v3533
        %3559 = vmatpush.bf16.msra.mxu0 %v3532
        %3560 = vmatpush.bf16.msra.mxu0 %v3531
        %3561 = vmatpush.bf16.msra.mxu0 %v3530
        %3562 = vmatmul.bf16.gmra.mxu0 %v3543
        %v3563 = vpop.f32.mrf.mxu0
        %v3564 = vadd.f32 %v3504, %v3563
        %v3565 = vpop.f32.mrf.mxu0
        %v3566 = vadd.f32 %v3504, %v3565
        %3567 = vmatmul.bf16.gmra.mxu0 %v3546
        %v3568 = vpop.f32.mrf.mxu0
        %v3569 = vadd.f32 %v3504, %v3568
        %v3570 = vpop.f32.mrf.mxu0
        %v3571 = vadd.f32 %v3504, %v3570
        %3572 = vmatmul.bf16.gmra.mxu0 %v3549
        %v3573 = vpop.f32.mrf.mxu0
        %v3574 = vadd.f32 %v3504, %v3573
        %v3575 = vpop.f32.mrf.mxu0
        %v3576 = vadd.f32 %v3504, %v3575
        %3577 = vmatmul.bf16.gmra.mxu0 %v3552
        %v3578 = vpop.f32.mrf.mxu0
        %v3579 = vadd.f32 %v3504, %v3578
        %v3580 = vpop.f32.mrf.mxu0
        %v3581 = vadd.f32 %v3504, %v3580
        %3582 = vdwg.mxu0
        %v3583 = vmax.f32 %v3564, 0.0
        %v3584 = vmax.f32 %v3566, 0.0
        %v3585 = vmax.f32 %v3569, 0.0
        %v3586 = vmax.f32 %v3571, 0.0
        %v3587 = vmax.f32 %v3574, 0.0
        %v3588 = vmax.f32 %v3576, 0.0
        %v3589 = vmax.f32 %v3579, 0.0
        %v3590 = vmax.f32 %v3581, 0.0
        %v3591 = vadd.f32 %v3583, %v3332
        %v3592 = vadd.f32 %v3584, %v3333
        %v3593 = vadd.f32 %v3585, %v3334
        %v3594 = vadd.f32 %v3586, %v3335
        %v3595 = vadd.f32 %v3587, %v3336
        %v3596 = vadd.f32 %v3588, %v3337
        %v3597 = vadd.f32 %v3589, %v3338
        %v3598 = vadd.f32 %v3590, %v3339
        %v3599 = vld [vmem:[%s5] sm:$0xf]
        %v3600 = vld [vmem:[%s5 + $0x4] sm:$0xf]
        %v3601 = vld [vmem:[%s5 + $0x8] sm:$0xf]
        %v3602 = vld [vmem:[%s5 + $0xc] sm:$0xf]
        %v3603 = vld [vmem:[%s5 + $0x10] sm:$0xf]
        %v3604 = vld [vmem:[%s5 + $0x14] sm:$0xf]
        %v3605 = vld [vmem:[%s5 + $0x18] sm:$0xf]
        %v3606 = vld [vmem:[%s5 + $0x1c] sm:$0xf]
        %v3607 = vld [vmem:[%s5 + $0x20] sm:$0xf]
        %v3608 = vld [vmem:[%s5 + $0x24] sm:$0xf]
        %v3609 = vld [vmem:[%s5 + $0x28] sm:$0xf]
        %v3610 = vld [vmem:[%s5 + $0x2c] sm:$0xf]
        %v3611 = vld [vmem:[%s6] sm:$0x1]
        %v3620 = vrot.slane %v3591, 6
        %v3621 = vrot.slane %v3592, 6
        %v3622 = vsel %vm681, %v3620, %v3621
        %v3623 = vrot.slane %v3593, 6
        %v3624 = vsel %vm681, %v3621, %v3623
        %v3625 = vrot.slane %v3594, 6
        %v3626 = vsel %vm681, %v3623, %v3625
        %v3627 = vrot.slane %v3595, 6
        %v3628 = vsel %vm681, %v3625, %v3627
        %v3629 = vrot.slane %v3596, 6
        %v3630 = vsel %vm681, %v3627, %v3629
        %v3631 = vrot.slane %v3597, 6
        %v3632 = vsel %vm681, %v3629, %v3631
        %v3633 = vrot.slane %v3598, 6
        %v3634 = vsel %vm681, %v3631, %v3633
        %v3643 = vsel %vm665, 0.0, %v3620
        %v3644 = vsel %vm666, 0.0, %v3622
        %v3645 = vsel %vm667, 0.0, %v3624
        %v3646 = vsel %vm668, 0.0, %v3626
        %v3647 = vsel %vm669, 0.0, %v3628
        %v3648 = vsel %vm670, 0.0, %v3630
        %v3649 = vsel %vm671, 0.0, %v3632
        %v3650 = vsel %vm672, 0.0, %v3634
        %3651 = vst.msk [vmem:[#allocation2] sm:$0xfc] %vm1125, %v3643
        %3652 = vst.msk [vmem:[#allocation2 + $0x18] sm:$0xff] %vm1127, %v3644
        %3653 = vst.msk [vmem:[#allocation2 + $0x30] sm:$0xff] %vm1127, %v3645
        %3654 = vst.msk [vmem:[#allocation2 + $0x48] sm:$0xff] %vm1127, %v3646
        %3655 = vst.msk [vmem:[#allocation2 + $0x60] sm:$0xff] %vm1127, %v3647
        %3656 = vst.msk [vmem:[#allocation2 + $0x78] sm:$0xff] %vm1127, %v3648
        %3657 = vst.msk [vmem:[#allocation2 + $0x90] sm:$0xff] %vm1127, %v3649
        %3658 = vst.msk [vmem:[#allocation2 + $0xa8] sm:$0xff] %vm1127, %v3650
        %3659 = vst.msk [vmem:[#allocation2] sm:$0x3] %vm1135, 0.0
        %v3660 = vrot.slane %v3591, 7
        %v3661 = vrot.slane %v3592, 7
        %v3662 = vsel %vm746, %v3660, %v3661
        %v3663 = vrot.slane %v3593, 7
        %v3664 = vsel %vm746, %v3661, %v3663
        %v3665 = vrot.slane %v3594, 7
        %v3666 = vsel %vm746, %v3663, %v3665
        %v3667 = vrot.slane %v3595, 7
        %v3668 = vsel %vm746, %v3665, %v3667
        %v3669 = vrot.slane %v3596, 7
        %v3670 = vsel %vm746, %v3667, %v3669
        %v3671 = vrot.slane %v3597, 7
        %v3672 = vsel %vm746, %v3669, %v3671
        %v3673 = vrot.slane %v3598, 7
        %v3674 = vsel %vm746, %v3671, %v3673
        %v3683 = vsel %vm738, 0.0, %v3660
        %v3684 = vsel %vm739, 0.0, %v3662
        %v3685 = vsel %vm740, 0.0, %v3664
        %v3686 = vsel %vm741, 0.0, %v3666
        %v3687 = vsel %vm742, 0.0, %v3668
        %v3688 = vsel %vm743, 0.0, %v3670
        %v3689 = vsel %vm744, 0.0, %v3672
        %v3690 = vsel %vm745, 0.0, %v3674
        %3699 = vrot.lane.b32.xlu0 %v3683, 32
        %v3700 = vpop.permute.xlu0 %3699
        %3701 = vrot.lane.b32.xlu0 %v3684, 32
        %v3702 = vpop.permute.xlu0 %3701
        %3703 = vrot.lane.b32.xlu0 %v3685, 32
        %v3704 = vpop.permute.xlu0 %3703
        %3705 = vrot.lane.b32.xlu0 %v3686, 32
        %v3706 = vpop.permute.xlu0 %3705
        %3707 = vrot.lane.b32.xlu0 %v3687, 32
        %v3708 = vpop.permute.xlu0 %3707
        %3709 = vrot.lane.b32.xlu0 %v3688, 32
        %v3710 = vpop.permute.xlu0 %3709
        %3711 = vrot.lane.b32.xlu0 %v3689, 32
        %v3712 = vpop.permute.xlu0 %3711
        %3713 = vrot.lane.b32.xlu0 %v3690, 32
        %v3714 = vpop.permute.xlu0 %3713
        %3723 = vst.msk [vmem:[#allocation2] sm:$0xfe] %vm1200, %v3700
        %3724 = vst.msk [vmem:[#allocation2 + $0x18] sm:$0xff] %vm1202, %v3702
        %3725 = vst.msk [vmem:[#allocation2 + $0x30] sm:$0xff] %vm1202, %v3704
        %3726 = vst.msk [vmem:[#allocation2 + $0x48] sm:$0xff] %vm1202, %v3706
        %3727 = vst.msk [vmem:[#allocation2 + $0x60] sm:$0xff] %vm1202, %v3708
        %3728 = vst.msk [vmem:[#allocation2 + $0x78] sm:$0xff] %vm1202, %v3710
        %3729 = vst.msk [vmem:[#allocation2 + $0x90] sm:$0xff] %vm1202, %v3712
        %3730 = vst.msk [vmem:[#allocation2 + $0xa8] sm:$0xff] %vm1202, %v3714
        %3731 = vst.msk [vmem:[#allocation2] sm:$0x1] %vm1210, 0.0
        %3732 = vrot.lane.b32.xlu0 %v3591, 64
        %v3733 = vpop.permute.xlu0 %3732
        %3734 = vrot.lane.b32.xlu0 %v3592, 64
        %v3735 = vpop.permute.xlu0 %3734
        %3736 = vrot.lane.b32.xlu0 %v3593, 64
        %v3737 = vpop.permute.xlu0 %3736
        %3738 = vrot.lane.b32.xlu0 %v3594, 64
        %v3739 = vpop.permute.xlu0 %3738
        %3740 = vrot.lane.b32.xlu0 %v3595, 64
        %v3741 = vpop.permute.xlu0 %3740
        %3742 = vrot.lane.b32.xlu0 %v3596, 64
        %v3743 = vpop.permute.xlu0 %3742
        %3744 = vrot.lane.b32.xlu0 %v3597, 64
        %v3745 = vpop.permute.xlu0 %3744
        %3746 = vrot.lane.b32.xlu0 %v3598, 64
        %v3747 = vpop.permute.xlu0 %3746
        %3756 = vst.msk [vmem:[#allocation2] sm:$0xff] %vm1236, %v3733
        %3757 = vst.msk [vmem:[#allocation2 + $0x18] sm:$0xff] %vm1236, %v3735
        %3758 = vst.msk [vmem:[#allocation2 + $0x30] sm:$0xff] %vm1236, %v3737
        %3759 = vst.msk [vmem:[#allocation2 + $0x48] sm:$0xff] %vm1236, %v3739
        %3760 = vst.msk [vmem:[#allocation2 + $0x60] sm:$0xff] %vm1236, %v3741
        %3761 = vst.msk [vmem:[#allocation2 + $0x78] sm:$0xff] %vm1236, %v3743
        %3762 = vst.msk [vmem:[#allocation2 + $0x90] sm:$0xff] %vm1236, %v3745
        %3763 = vst.msk [vmem:[#allocation2 + $0xa8] sm:$0xff] %vm1236, %v3747
        %v3764 = vld [vmem:[#allocation2] sm:$0xff]
        %v3765 = vld [vmem:[#allocation2 + $0x18] sm:$0xff]
        %v3766 = vld [vmem:[#allocation2 + $0x30] sm:$0xff]
        %v3767 = vld [vmem:[#allocation2 + $0x48] sm:$0xff]
        %v3768 = vld [vmem:[#allocation2 + $0x60] sm:$0xff]
        %v3769 = vld [vmem:[#allocation2 + $0x78] sm:$0xff]
        %v3770 = vld [vmem:[#allocation2 + $0x90] sm:$0xff]
        %v3771 = vld [vmem:[#allocation2 + $0xa8] sm:$0xff]
        %v3772 = vpack.c.bf16 %v3765, %v3764
        %v3773 = vpack.c.bf16 %v3767, %v3766
        %v3774 = vpack.c.bf16 %v3769, %v3768
        %v3775 = vpack.c.bf16 %v3771, %v3770
        %v3777 = vperm.slane %v3611, 0
        %v3791 = vunpack.c.l.b16 %v3599
        %v3792 = vunpack.c.l.b16 %v3600
        %v3793 = vunpack.c.l.b16 %v3601
        %v3794 = vunpack.c.l.b16 %v3602
        %v3795 = vunpack.c.l.b16 %v3603
        %v3796 = vunpack.c.l.b16 %v3604
        %v3797 = vunpack.c.l.b16 %v3605
        %v3798 = vunpack.c.l.b16 %v3606
        %v3799 = vunpack.c.l.b16 %v3607
        %v3800 = vunpack.c.l.b16 %v3608
        %v3801 = vunpack.c.l.b16 %v3609
        %v3802 = vunpack.c.l.b16 %v3610
        %v3803 = vpack.c.b16 %v3792, %v3791
        %v3804 = vpack.c.b16 %v3794, %v3793
        %v3805 = vpack.c.b16 %v3796, %v3795
        %v3806 = vpack.c.b16 %v3798, %v3797
        %v3807 = vpack.c.b16 %v3800, %v3799
        %v3808 = vpack.c.b16 %v3802, %v3801
        %v3816 = vsel %vm1296, %v3772, 0
        %v3819 = vsel %vm1296, %v3773, 0
        %v3822 = vsel %vm1296, %v3774, 0
        %v3825 = vsel %vm1296, %v3775, 0
        %3827 = vmatpush.bf16.msra.mxu0 0
        %3828 = vmatpush.bf16.msra.mxu0 0
        %3829 = vmatpush.bf16.msra.mxu0 %v3808
        %3830 = vmatpush.bf16.msra.mxu0 %v3807
        %3831 = vmatpush.bf16.msra.mxu0 %v3806
        %3832 = vmatpush.bf16.msra.mxu0 %v3805
        %3833 = vmatpush.bf16.msra.mxu0 %v3804
        %3834 = vmatpush.bf16.msra.mxu0 %v3803
        %3835 = vmatmul.bf16.gmra.mxu0 %v3816
        %v3836 = vpop.f32.mrf.mxu0
        %v3837 = vadd.f32 %v3777, %v3836
        %v3838 = vpop.f32.mrf.mxu0
        %v3839 = vadd.f32 %v3777, %v3838
        %3840 = vmatmul.bf16.gmra.mxu0 %v3819
        %v3841 = vpop.f32.mrf.mxu0
        %v3842 = vadd.f32 %v3777, %v3841
        %v3843 = vpop.f32.mrf.mxu0
        %v3844 = vadd.f32 %v3777, %v3843
        %3845 = vmatmul.bf16.gmra.mxu0 %v3822
        %v3846 = vpop.f32.mrf.mxu0
        %v3847 = vadd.f32 %v3777, %v3846
        %v3848 = vpop.f32.mrf.mxu0
        %v3849 = vadd.f32 %v3777, %v3848
        %3850 = vmatmul.bf16.gmra.mxu0 %v3825
        %v3851 = vpop.f32.mrf.mxu0
        %v3852 = vadd.f32 %v3777, %v3851
        %v3853 = vpop.f32.mrf.mxu0
        %v3854 = vadd.f32 %v3777, %v3853
        %3855 = vdwg.mxu0
        %v3856 = vpack.c.bf16 %v3839, %v3837
        %v3857 = vpack.c.bf16 %v3844, %v3842
        %v3858 = vpack.c.bf16 %v3849, %v3847
        %v3859 = vpack.c.bf16 %v3854, %v3852
        %v3860 = vld [vmem:[%s7] sm:$0xf]
        %v3861 = vld [vmem:[%s7 + $0x4] sm:$0xf]
        %v3862 = vld [vmem:[%s7 + $0x8] sm:$0xf]
        %v3863 = vld [vmem:[%s7 + $0xc] sm:$0xf]
        %v3864 = vld [vmem:[%s8] sm:$0x1]
        %v3866 = vperm.slane %v3864, 0
        %v3872 = vunpack.c.l.b16 %v3860
        %v3873 = vunpack.c.l.b16 %v3861
        %v3874 = vunpack.c.l.b16 %v3862
        %v3875 = vunpack.c.l.b16 %v3863
        %v3876 = vpack.c.b16 %v3873, %v3872
        %v3877 = vpack.c.b16 %v3875, %v3874
        %v3881 = vsel %vm1127, %v3856, 0
        %v3884 = vsel %vm1127, %v3857, 0
        %v3887 = vsel %vm1127, %v3858, 0
        %v3890 = vsel %vm1127, %v3859, 0
        %3892 = vmatpush.bf16.msra.mxu0 0
        %3893 = vmatpush.bf16.msra.mxu0 0
        %3894 = vmatpush.bf16.msra.mxu0 0
        %3895 = vmatpush.bf16.msra.mxu0 0
        %3896 = vmatpush.bf16.msra.mxu0 0
        %3897 = vmatpush.bf16.msra.mxu0 0
        %3898 = vmatpush.bf16.msra.mxu0 %v3877
        %3899 = vmatpush.bf16.msra.mxu0 %v3876
        %3900 = vmatmul.bf16.gmra.mxu0 %v3881
        %v3901 = vpop.f32.mrf.mxu0
        %v3902 = vadd.f32 %v3866, %v3901
        %v3903 = vpop.f32.mrf.mxu0
        %v3904 = vadd.f32 %v3866, %v3903
        %3905 = vmatmul.bf16.gmra.mxu0 %v3884
        %v3906 = vpop.f32.mrf.mxu0
        %v3907 = vadd.f32 %v3866, %v3906
        %v3908 = vpop.f32.mrf.mxu0
        %v3909 = vadd.f32 %v3866, %v3908
        %3910 = vmatmul.bf16.gmra.mxu0 %v3887
        %v3911 = vpop.f32.mrf.mxu0
        %v3912 = vadd.f32 %v3866, %v3911
        %v3913 = vpop.f32.mrf.mxu0
        %v3914 = vadd.f32 %v3866, %v3913
        %3915 = vmatmul.bf16.gmra.mxu0 %v3890
        %v3916 = vpop.f32.mrf.mxu0
        %v3917 = vadd.f32 %v3866, %v3916
        %v3918 = vpop.f32.mrf.mxu0
        %v3919 = vadd.f32 %v3866, %v3918
        %3920 = vdwg.mxu0
        %v3921 = vmax.f32 %v3902, 0.0
        %v3922 = vmax.f32 %v3904, 0.0
        %v3923 = vmax.f32 %v3907, 0.0
        %v3924 = vmax.f32 %v3909, 0.0
        %v3925 = vmax.f32 %v3912, 0.0
        %v3926 = vmax.f32 %v3914, 0.0
        %v3927 = vmax.f32 %v3917, 0.0
        %v3928 = vmax.f32 %v3919, 0.0
        %v3929 = vpack.c.bf16 %v3922, %v3921
        %v3930 = vpack.c.bf16 %v3924, %v3923
        %v3931 = vpack.c.bf16 %v3926, %v3925
        %v3932 = vpack.c.bf16 %v3928, %v3927
        %v3933 = vld [vmem:[%s9] sm:$0xf]
        %v3934 = vld [vmem:[%s9 + $0x4] sm:$0xf]
        %v3935 = vld [vmem:[%s9 + $0x8] sm:$0xf]
        %v3936 = vld [vmem:[%s9 + $0xc] sm:$0xf]
        %v3937 = vld [vmem:[%s9 + $0x10] sm:$0xf]
        %v3938 = vld [vmem:[%s9 + $0x14] sm:$0xf]
        %v3939 = vld [vmem:[%s9 + $0x18] sm:$0xf]
        %v3940 = vld [vmem:[%s9 + $0x1c] sm:$0xf]
        %v3941 = vld [vmem:[%s9 + $0x20] sm:$0xf]
        %v3942 = vld [vmem:[%s9 + $0x24] sm:$0xf]
        %v3943 = vld [vmem:[%s9 + $0x28] sm:$0xf]
        %v3944 = vld [vmem:[%s9 + $0x2c] sm:$0xf]
        %v3945 = vld [vmem:[%s10] sm:$0x1]
        %v3947 = vperm.slane %v3945, 0
        %v3961 = vunpack.c.l.b16 %v3933
        %v3962 = vunpack.c.l.b16 %v3934
        %v3963 = vunpack.c.l.b16 %v3935
        %v3964 = vunpack.c.l.b16 %v3936
        %v3965 = vunpack.c.l.b16 %v3937
        %v3966 = vunpack.c.l.b16 %v3938
        %v3967 = vunpack.c.l.b16 %v3939
        %v3968 = vunpack.c.l.b16 %v3940
        %v3969 = vunpack.c.l.b16 %v3941
        %v3970 = vunpack.c.l.b16 %v3942
        %v3971 = vunpack.c.l.b16 %v3943
        %v3972 = vunpack.c.l.b16 %v3944
        %v3973 = vpack.c.b16 %v3962, %v3961
        %v3974 = vpack.c.b16 %v3964, %v3963
        %v3975 = vpack.c.b16 %v3966, %v3965
        %v3976 = vpack.c.b16 %v3968, %v3967
        %v3977 = vpack.c.b16 %v3970, %v3969
        %v3978 = vpack.c.b16 %v3972, %v3971
        %v3986 = vsel %vm1296, %v3929, 0
        %v3989 = vsel %vm1296, %v3930, 0
        %v3992 = vsel %vm1296, %v3931, 0
        %v3995 = vsel %vm1296, %v3932, 0
        %3997 = vmatpush.bf16.msra.mxu0 0
        %3998 = vmatpush.bf16.msra.mxu0 0
        %3999 = vmatpush.bf16.msra.mxu0 %v3978
        %4000 = vmatpush.bf16.msra.mxu0 %v3977
        %4001 = vmatpush.bf16.msra.mxu0 %v3976
        %4002 = vmatpush.bf16.msra.mxu0 %v3975
        %4003 = vmatpush.bf16.msra.mxu0 %v3974
        %4004 = vmatpush.bf16.msra.mxu0 %v3973
        %4005 = vmatmul.bf16.gmra.mxu0 %v3986
        %v4006 = vpop.f32.mrf.mxu0
        %v4007 = vadd.f32 %v3947, %v4006
        %v4008 = vpop.f32.mrf.mxu0
        %v4009 = vadd.f32 %v3947, %v4008
        %4010 = vmatmul.bf16.gmra.mxu0 %v3989
        %v4011 = vpop.f32.mrf.mxu0
        %v4012 = vadd.f32 %v3947, %v4011
        %v4013 = vpop.f32.mrf.mxu0
        %v4014 = vadd.f32 %v3947, %v4013
        %4015 = vmatmul.bf16.gmra.mxu0 %v3992
        %v4016 = vpop.f32.mrf.mxu0
        %v4017 = vadd.f32 %v3947, %v4016
        %v4018 = vpop.f32.mrf.mxu0
        %v4019 = vadd.f32 %v3947, %v4018
        %4020 = vmatmul.bf16.gmra.mxu0 %v3995
        %v4021 = vpop.f32.mrf.mxu0
        %v4022 = vadd.f32 %v3947, %v4021
        %v4023 = vpop.f32.mrf.mxu0
        %v4024 = vadd.f32 %v3947, %v4023
        %4025 = vdwg.mxu0
        %v4026 = vmax.f32 %v4007, 0.0
        %v4027 = vmax.f32 %v4009, 0.0
        %v4028 = vmax.f32 %v4012, 0.0
        %v4029 = vmax.f32 %v4014, 0.0
        %v4030 = vmax.f32 %v4017, 0.0
        %v4031 = vmax.f32 %v4019, 0.0
        %v4032 = vmax.f32 %v4022, 0.0
        %v4033 = vmax.f32 %v4024, 0.0
        %v4034 = vpack.c.bf16 %v4027, %v4026
        %v4035 = vpack.c.bf16 %v4029, %v4028
        %v4036 = vpack.c.bf16 %v4031, %v4030
        %v4037 = vpack.c.bf16 %v4033, %v4032
        %v4038 = vld [vmem:[%s11] sm:$0xff]
        %v4039 = vld [vmem:[%s11 + $0x8] sm:$0xff]
        %v4040 = vld [vmem:[%s11 + $0x10] sm:$0xff]
        %v4041 = vld [vmem:[%s11 + $0x18] sm:$0xff]
        %v4042 = vld [vmem:[%s11 + $0x20] sm:$0xff]
        %v4043 = vld [vmem:[%s11 + $0x28] sm:$0xff]
        %v4044 = vld [vmem:[%s11 + $0x30] sm:$0xff]
        %v4045 = vld [vmem:[%s11 + $0x38] sm:$0xff]
        %v4046 = vld [vmem:[%s11 + $0x40] sm:$0xff]
        %v4047 = vld [vmem:[%s11 + $0x48] sm:$0xff]
        %v4048 = vld [vmem:[%s11 + $0x50] sm:$0xff]
        %v4049 = vld [vmem:[%s11 + $0x58] sm:$0xff]
        %v4050 = vld [vmem:[%s12] sm:$0x3]
        %v4052 = vperm.slane %v4050, 0
        %v4053 = vperm.slane %v4050, 1
        %v4068 = vunpack.c.l.b16 %v4038
        %v4069 = vunpack.c.h.b16 %v4038
        %v4070 = vunpack.c.l.b16 %v4039
        %v4071 = vunpack.c.h.b16 %v4039
        %v4072 = vunpack.c.l.b16 %v4040
        %v4073 = vunpack.c.h.b16 %v4040
        %v4074 = vunpack.c.l.b16 %v4041
        %v4075 = vunpack.c.h.b16 %v4041
        %v4076 = vunpack.c.l.b16 %v4042
        %v4077 = vunpack.c.h.b16 %v4042
        %v4078 = vunpack.c.l.b16 %v4043
        %v4079 = vunpack.c.h.b16 %v4043
        %v4080 = vunpack.c.l.b16 %v4044
        %v4081 = vunpack.c.h.b16 %v4044
        %v4082 = vunpack.c.l.b16 %v4045
        %v4083 = vunpack.c.h.b16 %v4045
        %v4084 = vunpack.c.l.b16 %v4046
        %v4085 = vunpack.c.h.b16 %v4046
        %v4086 = vunpack.c.l.b16 %v4047
        %v4087 = vunpack.c.h.b16 %v4047
        %v4088 = vunpack.c.l.b16 %v4048
        %v4089 = vunpack.c.h.b16 %v4048
        %v4090 = vunpack.c.l.b16 %v4049
        %v4091 = vunpack.c.h.b16 %v4049
        %v4092 = vpack.c.b16 %v4070, %v4068
        %v4093 = vpack.c.b16 %v4071, %v4069
        %v4094 = vpack.c.b16 %v4074, %v4072
        %v4095 = vpack.c.b16 %v4075, %v4073
        %v4096 = vpack.c.b16 %v4078, %v4076
        %v4097 = vpack.c.b16 %v4079, %v4077
        %v4098 = vpack.c.b16 %v4082, %v4080
        %v4099 = vpack.c.b16 %v4083, %v4081
        %v4100 = vpack.c.b16 %v4086, %v4084
        %v4101 = vpack.c.b16 %v4087, %v4085
        %v4102 = vpack.c.b16 %v4090, %v4088
        %v4103 = vpack.c.b16 %v4091, %v4089
        %v4117 = vsel %vm1296, %v4034, 0
        %v4120 = vsel %vm1296, %v4035, 0
        %v4123 = vsel %vm1296, %v4036, 0
        %v4126 = vsel %vm1296, %v4037, 0
        %4128 = vmatpush.bf16.msra.mxu0 0
        %4129 = vmatpush.bf16.msra.mxu0 0
        %4130 = vmatpush.bf16.msra.mxu0 %v4102
        %4131 = vmatpush.bf16.msra.mxu0 %v4100
        %4132 = vmatpush.bf16.msra.mxu0 %v4098
        %4133 = vmatpush.bf16.msra.mxu0 %v4096
        %4134 = vmatpush.bf16.msra.mxu0 %v4094
        %4135 = vmatpush.bf16.msra.mxu0 %v4092
        %4136 = vmatmul.bf16.gmra.mxu0 %v4117
        %v4137 = vpop.f32.mrf.mxu0
        %v4138 = vadd.f32 %v4052, %v4137
        %v4139 = vpop.f32.mrf.mxu0
        %v4140 = vadd.f32 %v4052, %v4139
        %4141 = vmatmul.bf16.gmra.mxu0 %v4120
        %v4142 = vpop.f32.mrf.mxu0
        %v4143 = vadd.f32 %v4052, %v4142
        %v4144 = vpop.f32.mrf.mxu0
        %v4145 = vadd.f32 %v4052, %v4144
        %4146 = vmatmul.bf16.gmra.mxu0 %v4123
        %v4147 = vpop.f32.mrf.mxu0
        %v4148 = vadd.f32 %v4052, %v4147
        %v4149 = vpop.f32.mrf.mxu0
        %v4150 = vadd.f32 %v4052, %v4149
        %4151 = vmatmul.bf16.gmra.mxu0 %v4126
        %v4152 = vpop.f32.mrf.mxu0
        %v4153 = vadd.f32 %v4052, %v4152
        %v4154 = vpop.f32.mrf.mxu0
        %v4155 = vadd.f32 %v4052, %v4154
        %4156 = vdwg.mxu0
        %4157 = vmatpush.bf16.msra.mxu0 0
        %4158 = vmatpush.bf16.msra.mxu0 0
        %4159 = vmatpush.bf16.msra.mxu0 %v4103
        %4160 = vmatpush.bf16.msra.mxu0 %v4101
        %4161 = vmatpush.bf16.msra.mxu0 %v4099
        %4162 = vmatpush.bf16.msra.mxu0 %v4097
        %4163 = vmatpush.bf16.msra.mxu0 %v4095
        %4164 = vmatpush.bf16.msra.mxu0 %v4093
        %4165 = vmatmul.bf16.gmra.mxu0 %v4117
        %v4166 = vpop.f32.mrf.mxu0
        %v4167 = vadd.f32 %v4053, %v4166
        %v4168 = vpop.f32.mrf.mxu0
        %v4169 = vadd.f32 %v4053, %v4168
        %4170 = vmatmul.bf16.gmra.mxu0 %v4120
        %v4171 = vpop.f32.mrf.mxu0
        %v4172 = vadd.f32 %v4053, %v4171
        %v4173 = vpop.f32.mrf.mxu0
        %v4174 = vadd.f32 %v4053, %v4173
        %4175 = vmatmul.bf16.gmra.mxu0 %v4123
        %v4176 = vpop.f32.mrf.mxu0
        %v4177 = vadd.f32 %v4053, %v4176
        %v4178 = vpop.f32.mrf.mxu0
        %v4179 = vadd.f32 %v4053, %v4178
        %4180 = vmatmul.bf16.gmra.mxu0 %v4126
        %v4181 = vpop.f32.mrf.mxu0
        %v4182 = vadd.f32 %v4053, %v4181
        %v4183 = vpop.f32.mrf.mxu0
        %v4184 = vadd.f32 %v4053, %v4183
        %4185 = vdwg.mxu0
        %4186 = vst [vmem:[%s464] sm:$0xff] %v4138
        %4187 = vst [vmem:[%s464 + $0x8] sm:$0xff] %v4140
        %4188 = vst [vmem:[%s464 + $0x10] sm:$0xff] %v4143
        %4189 = vst [vmem:[%s464 + $0x18] sm:$0xff] %v4145
        %4190 = vst [vmem:[%s464 + $0x20] sm:$0xff] %v4148
        %4191 = vst [vmem:[%s464 + $0x28] sm:$0xff] %v4150
        %4192 = vst [vmem:[%s464 + $0x30] sm:$0xff] %v4153
        %4193 = vst [vmem:[%s464 + $0x38] sm:$0xff] %v4155
        %v4194 = vxor.u32 %v4167, 2147483648
        %v4195 = vxor.u32 %v4169, 2147483648
        %v4196 = vxor.u32 %v4172, 2147483648
        %v4197 = vxor.u32 %v4174, 2147483648
        %v4198 = vxor.u32 %v4177, 2147483648
        %v4199 = vxor.u32 %v4179, 2147483648
        %v4200 = vxor.u32 %v4182, 2147483648
        %v4201 = vxor.u32 %v4184, 2147483648
        %v4202 = vmul.f32 %v4194, 1.442695
        %v4203 = vpow.pop %v4202
        %v4204 = vmul.f32 %v4195, 1.442695
        %v4205 = vpow.pop %v4204
        %v4206 = vmul.f32 %v4196, 1.442695
        %v4207 = vpow.pop %v4206
        %v4208 = vmul.f32 %v4197, 1.442695
        %v4209 = vpow.pop %v4208
        %v4210 = vmul.f32 %v4198, 1.442695
        %v4211 = vpow.pop %v4210
        %v4212 = vmul.f32 %v4199, 1.442695
        %v4213 = vpow.pop %v4212
        %v4214 = vmul.f32 %v4200, 1.442695
        %v4215 = vpow.pop %v4214
        %v4216 = vmul.f32 %v4201, 1.442695
        %v4217 = vpow.pop %v4216
        %v4218 = vadd.f32 %v4203, 1.0
        %v4219 = vadd.f32 %v4205, 1.0
        %v4220 = vadd.f32 %v4207, 1.0
        %v4221 = vadd.f32 %v4209, 1.0
        %v4222 = vadd.f32 %v4211, 1.0
        %v4223 = vadd.f32 %v4213, 1.0
        %v4224 = vadd.f32 %v4215, 1.0
        %v4225 = vadd.f32 %v4217, 1.0
        %v4226 = vrcp.pop %v4218
        %v4227 = vmul.f32 %v4218, %v4226
        %v4228 = vsub.f32 1.0, %v4227
        %v4229 = vmul.f32 %v4226, %v4228
        %v4230 = vadd.f32 %v4226, %v4229
        %vm4231 = vweird.f32 %v4218
        %vm4232 = vweird.f32 %v4226
        %vm4233 = vmor %vm4231, %vm4232
        %v4234 = vsel %vm4233, %v4226, %v4230
        %v4235 = vand.u32 2147483647, %v4218
        %vm4236 = vcmp.eq.f32.partialorder %v4235, 8.507059e+37
        %v4237 = vand.u32 %v4218, 2147483648
        %v4238 = vor.u32 1.1754944e-38, %v4237
        %v4239 = vsel %vm4236, %v4238, %v4234
        %v4240 = vmul.f32 1.0, %v4239
        %v4241 = vrcp.pop %v4219
        %v4242 = vmul.f32 %v4219, %v4241
        %v4243 = vsub.f32 1.0, %v4242
        %v4244 = vmul.f32 %v4241, %v4243
        %v4245 = vadd.f32 %v4241, %v4244
        %vm4246 = vweird.f32 %v4219
        %vm4247 = vweird.f32 %v4241
        %vm4248 = vmor %vm4246, %vm4247
        %v4249 = vsel %vm4248, %v4241, %v4245
        %v4250 = vand.u32 2147483647, %v4219
        %vm4251 = vcmp.eq.f32.partialorder %v4250, 8.507059e+37
        %v4252 = vand.u32 %v4219, 2147483648
        %v4253 = vor.u32 1.1754944e-38, %v4252
        %v4254 = vsel %vm4251, %v4253, %v4249
        %v4255 = vmul.f32 1.0, %v4254
        %v4256 = vrcp.pop %v4220
        %v4257 = vmul.f32 %v4220, %v4256
        %v4258 = vsub.f32 1.0, %v4257
        %v4259 = vmul.f32 %v4256, %v4258
        %v4260 = vadd.f32 %v4256, %v4259
        %vm4261 = vweird.f32 %v4220
        %vm4262 = vweird.f32 %v4256
        %vm4263 = vmor %vm4261, %vm4262
        %v4264 = vsel %vm4263, %v4256, %v4260
        %v4265 = vand.u32 2147483647, %v4220
        %vm4266 = vcmp.eq.f32.partialorder %v4265, 8.507059e+37
        %v4267 = vand.u32 %v4220, 2147483648
        %v4268 = vor.u32 1.1754944e-38, %v4267
        %v4269 = vsel %vm4266, %v4268, %v4264
        %v4270 = vmul.f32 1.0, %v4269
        %v4271 = vrcp.pop %v4221
        %v4272 = vmul.f32 %v4221, %v4271
        %v4273 = vsub.f32 1.0, %v4272
        %v4274 = vmul.f32 %v4271, %v4273
        %v4275 = vadd.f32 %v4271, %v4274
        %vm4276 = vweird.f32 %v4221
        %vm4277 = vweird.f32 %v4271
        %vm4278 = vmor %vm4276, %vm4277
        %v4279 = vsel %vm4278, %v4271, %v4275
        %v4280 = vand.u32 2147483647, %v4221
        %vm4281 = vcmp.eq.f32.partialorder %v4280, 8.507059e+37
        %v4282 = vand.u32 %v4221, 2147483648
        %v4283 = vor.u32 1.1754944e-38, %v4282
        %v4284 = vsel %vm4281, %v4283, %v4279
        %v4285 = vmul.f32 1.0, %v4284
        %v4286 = vrcp.pop %v4222
        %v4287 = vmul.f32 %v4222, %v4286
        %v4288 = vsub.f32 1.0, %v4287
        %v4289 = vmul.f32 %v4286, %v4288
        %v4290 = vadd.f32 %v4286, %v4289
        %vm4291 = vweird.f32 %v4222
        %vm4292 = vweird.f32 %v4286
        %vm4293 = vmor %vm4291, %vm4292
        %v4294 = vsel %vm4293, %v4286, %v4290
        %v4295 = vand.u32 2147483647, %v4222
        %vm4296 = vcmp.eq.f32.partialorder %v4295, 8.507059e+37
        %v4297 = vand.u32 %v4222, 2147483648
        %v4298 = vor.u32 1.1754944e-38, %v4297
        %v4299 = vsel %vm4296, %v4298, %v4294
        %v4300 = vmul.f32 1.0, %v4299
        %v4301 = vrcp.pop %v4223
        %v4302 = vmul.f32 %v4223, %v4301
        %v4303 = vsub.f32 1.0, %v4302
        %v4304 = vmul.f32 %v4301, %v4303
        %v4305 = vadd.f32 %v4301, %v4304
        %vm4306 = vweird.f32 %v4223
        %vm4307 = vweird.f32 %v4301
        %vm4308 = vmor %vm4306, %vm4307
        %v4309 = vsel %vm4308, %v4301, %v4305
        %v4310 = vand.u32 2147483647, %v4223
        %vm4311 = vcmp.eq.f32.partialorder %v4310, 8.507059e+37
        %v4312 = vand.u32 %v4223, 2147483648
        %v4313 = vor.u32 1.1754944e-38, %v4312
        %v4314 = vsel %vm4311, %v4313, %v4309
        %v4315 = vmul.f32 1.0, %v4314
        %v4316 = vrcp.pop %v4224
        %v4317 = vmul.f32 %v4224, %v4316
        %v4318 = vsub.f32 1.0, %v4317
        %v4319 = vmul.f32 %v4316, %v4318
        %v4320 = vadd.f32 %v4316, %v4319
        %vm4321 = vweird.f32 %v4224
        %vm4322 = vweird.f32 %v4316
        %vm4323 = vmor %vm4321, %vm4322
        %v4324 = vsel %vm4323, %v4316, %v4320
        %v4325 = vand.u32 2147483647, %v4224
        %vm4326 = vcmp.eq.f32.partialorder %v4325, 8.507059e+37
        %v4327 = vand.u32 %v4224, 2147483648
        %v4328 = vor.u32 1.1754944e-38, %v4327
        %v4329 = vsel %vm4326, %v4328, %v4324
        %v4330 = vmul.f32 1.0, %v4329
        %v4331 = vrcp.pop %v4225
        %v4332 = vmul.f32 %v4225, %v4331
        %v4333 = vsub.f32 1.0, %v4332
        %v4334 = vmul.f32 %v4331, %v4333
        %v4335 = vadd.f32 %v4331, %v4334
        %vm4336 = vweird.f32 %v4225
        %vm4337 = vweird.f32 %v4331
        %vm4338 = vmor %vm4336, %vm4337
        %v4339 = vsel %vm4338, %v4331, %v4335
        %v4340 = vand.u32 2147483647, %v4225
        %vm4341 = vcmp.eq.f32.partialorder %v4340, 8.507059e+37
        %v4342 = vand.u32 %v4225, 2147483648
        %v4343 = vor.u32 1.1754944e-38, %v4342
        %v4344 = vsel %vm4341, %v4343, %v4339
        %v4345 = vmul.f32 1.0, %v4344
        %v4346 = vmul.f32 %v4240, 8.0
        %v4347 = vmul.f32 %v4255, 8.0
        %v4348 = vmul.f32 %v4270, 8.0
        %v4349 = vmul.f32 %v4285, 8.0
        %v4350 = vmul.f32 %v4300, 8.0
        %v4351 = vmul.f32 %v4315, 8.0
        %v4352 = vmul.f32 %v4330, 8.0
        %v4353 = vmul.f32 %v4345, 8.0
        %vm4354 = vcmask 7168
        %v4355 = vsel %vm4354, %v4240, %v4346
        %v4356 = vsel %vm4354, %v4255, %v4347
        %v4357 = vsel %vm4354, %v4270, %v4348
        %v4358 = vsel %vm4354, %v4285, %v4349
        %v4359 = vsel %vm4354, %v4300, %v4350
        %v4360 = vsel %vm4354, %v4315, %v4351
        %v4361 = vsel %vm4354, %v4330, %v4352
        %v4362 = vsel %vm4354, %v4345, %v4353
        %vm4363 = vcmask 15360
        %v4364 = vsel %vm4363, %v4355, 0.0
        %v4365 = vsel %vm4363, %v4356, 0.0
        %v4366 = vsel %vm4363, %v4357, 0.0
        %v4367 = vsel %vm4363, %v4358, 0.0
        %v4368 = vsel %vm4363, %v4359, 0.0
        %v4369 = vsel %vm4363, %v4360, 0.0
        %v4370 = vsel %vm4363, %v4361, 0.0
        %v4371 = vsel %vm4363, %v4362, 0.0
        %v4372 = vlaneseq
        %v4373 = vand.u32 %v4372, 127
        %vm4374 = vcmp.eq.s32.totalorder %v488, %v4373
        %v4375 = vsel %vm4374, 1, 0
        %v4376 = vcvt.s32.f32 %v4375
        %vm4377 = vcmask 64512
        %v4379 = vsel %vm4377, %v4376, 0
        %v4382 = vsel %vm4377, %v4364, 0
        %v4385 = vsel %vm4377, %v4365, 0
        %v4388 = vsel %vm4377, %v4366, 0
        %v4391 = vsel %vm4377, %v4367, 0
        %4393 = vmatpush.xpose.msra.mxu0 0.0
        %4394 = vmatpush.xpose.msra.mxu0 0.0
        %4395 = vmatpush.xpose.msra.mxu0 0.0
        %4396 = vmatpush.xpose.msra.mxu0 0.0
        %4397 = vmatpush.xpose.msra.mxu0 0.0
        %4398 = vmatpush.xpose.msra.mxu0 0.0
        %4399 = vmatpush.xpose.msra.mxu0 0.0
        %4400 = vmatpush.xpose.msra.mxu0 0.0
        %4401 = vmatpush.xpose.msra.mxu0 0.0
        %4402 = vmatpush.xpose.msra.mxu0 0.0
        %4403 = vmatpush.xpose.msra.mxu0 0.0
        %4404 = vmatpush.xpose.msra.mxu0 0.0
        %4405 = vmatpush.xpose.msra.mxu0 %v4391
        %4406 = vmatpush.xpose.msra.mxu0 %v4388
        %4407 = vmatpush.xpose.msra.mxu0 %v4385
        %4408 = vmatpush.xpose.msra.mxu0 %v4382
        %4409 = vmatmul.f32.gmra.mxu0 %v4379
        %v4410 = vpop.f32.mrf.mxu0
        %v4411 = vadd.f32 0.0, %v4410
        %4412 = vdwg.mxu0
        %4413 = vst.msk [vmem:[%s484] sm:$0xff] %vm1127, %v4411
        %v4415 = vsel %vm4377, %v4368, 0
        %v4418 = vsel %vm4377, %v4369, 0
        %v4421 = vsel %vm4377, %v4370, 0
        %v4424 = vsel %vm4377, %v4371, 0
        %4426 = vmatpush.xpose.msra.mxu0 0.0
        %4427 = vmatpush.xpose.msra.mxu0 0.0
        %4428 = vmatpush.xpose.msra.mxu0 0.0
        %4429 = vmatpush.xpose.msra.mxu0 0.0
        %4430 = vmatpush.xpose.msra.mxu0 0.0
        %4431 = vmatpush.xpose.msra.mxu0 0.0
        %4432 = vmatpush.xpose.msra.mxu0 0.0
        %4433 = vmatpush.xpose.msra.mxu0 0.0
        %4434 = vmatpush.xpose.msra.mxu0 0.0
        %4435 = vmatpush.xpose.msra.mxu0 0.0
        %4436 = vmatpush.xpose.msra.mxu0 0.0
        %4437 = vmatpush.xpose.msra.mxu0 0.0
        %4438 = vmatpush.xpose.msra.mxu0 %v4424
        %4439 = vmatpush.xpose.msra.mxu0 %v4421
        %4440 = vmatpush.xpose.msra.mxu0 %v4418
        %4441 = vmatpush.xpose.msra.mxu0 %v4415
        %4442 = vmatmul.f32.gmra.mxu0 %v4379
        %v4443 = vpop.f32.mrf.mxu0
        %v4444 = vadd.f32 0.0, %v4443
        %4445 = vdwg.mxu0
        %s4446 = scalar_lea.vmem %s484, 8
        %4447 = vst.msk [vmem:[%s4446] sm:$0xff] %vm1127, %v4444
        %s4448 = sand.u32 %s315, 1
        %s4449 = scalar_lea.sflag [#allocation4], %s4448
        %s4450 = sand.u32 %s315, 1
        %s4451 = smul.addr %s4450, 64
        %s4452 = scalar_lea.vmem [#allocation3], %s4451
        %s4453 = smul.u32 2, %s29
        %p4454 = scmp.lt.s32.totalorder %s4453, 3
        %s4455 = scalar_select %p4454, %s4453, 3
        %s4456 = smul.addr %s4455, 8
        %s4457 = scalar_lea.vmem %s14, %s4456
        // Predicated region
        $region73: #{rt_pitch_tracker_forward.1} parent=71 // pred_check
          %p4458 = pneg %p325
        $region74: #{rt_pitch_tracker_forward.1} parent=71 // pred_check_branch
          %4460 = sbr.rel (%p4458) target = $region76
        $region75: #{rt_pitch_tracker_forward.1} parent=71 // pred_region
          %s4461 = smul.u32 2, %s29
          %4463 = vsyncadd %s4449, 0
          %s4464 = smul.addr %s4461, 4
          %s4465 = smul.addr %s4464, 8
          %s4466 = scalar_lea.hbm %s13, %s4465
          %s4467 = sshll.u32 %s4452, 4
          %s4468 = int_to_ptr.vmem [resolvable:$true] %s4467
          %s4469 = sshll.u32 %s4466, 4
          %s4470 = int_to_ptr.hbm [resolvable:$true] %s4469
          %4475 = dma.vmem_to_hbm [thread:$0]  %s4468, 1024, %s4470, %s4449, 128, 128, 8
        $region76: #{rt_pitch_tracker_forward.1} parent=71 // pred_fallthru
          _
        // Predicated region
        $region77: #{rt_pitch_tracker_forward.1} parent=71 // pred_check
          %p4476 = pneg %p351
        $region78: #{rt_pitch_tracker_forward.1} parent=71 // pred_check_branch
          %4478 = sbr.rel (%p4476) target = $region80
        $region79: #{rt_pitch_tracker_forward.1} parent=71 // pred_region
          %s4479 = smul.u32 2, %s29
        $region80: #{rt_pitch_tracker_forward.1} parent=71 // pred_fallthru
          _
      $region72: #{rt_pitch_tracker_forward.1} parent=5 // pred_fallthru
        _
      %p4480 = scmp.le.s32.totalorder 2, %s24
      // Predicated region
      $region81: #{rt_pitch_tracker_forward.1} parent=5 // pred_check
        %p4481 = pneg %p4480
      $region82: #{rt_pitch_tracker_forward.1} parent=5 // pred_check_branch
        %4483 = sbr.rel (%p4481) target = $region84
      $region83: #{rt_pitch_tracker_forward.1} parent=5 // pred_region
        %s4484 = ssub.s32 %s24, 2
        // Predicated region
        $region85: #{rt_pitch_tracker_forward.1} parent=83 // pred_check
          %p4485 = pneg %p331
        $region86: #{rt_pitch_tracker_forward.1} parent=83 // pred_check_branch
          %4487 = sbr.rel (%p4485) target = $region88
        $region87: #{rt_pitch_tracker_forward.1} parent=83 // pred_region
          %s4488 = sand.u32 %s316, 1
          %s4489 = scalar_lea.sflag [#allocation4], %s4488
          %s4490 = sand.u32 %s316, 1
          %s4491 = smul.addr %s4490, 64
          %s4492 = scalar_lea.vmem [#allocation3], %s4491
          %4494 = dma.done %s4489, 1024
        $region88: #{rt_pitch_tracker_forward.1} parent=83 // pred_fallthru
          _
        // Predicated region
        $region89: #{rt_pitch_tracker_forward.1} parent=83 // pred_check
          %p4495 = pneg %p357
        $region90: #{rt_pitch_tracker_forward.1} parent=83 // pred_check_branch
          %4497 = sbr.rel (%p4495) target = $region92
        $region91: #{rt_pitch_tracker_forward.1} parent=83 // pred_region
          %s4498 = smul.u32 2, %s30
          %p4499 = scmp.lt.s32.totalorder %s4498, 3
          %s4500 = scalar_select %p4499, %s4498, 3
          %s4501 = smul.addr %s4500, 8
          %s4502 = scalar_lea.vmem %s14, %s4501
        $region92: #{rt_pitch_tracker_forward.1} parent=83 // pred_fallthru
          _
      $region84: #{rt_pitch_tracker_forward.1} parent=5 // pred_fallthru
        _
    $region6: #{rt_pitch_tracker_forward.1} parent=1 // loop_footer
      %s28 = sadd.s32 1, %s24
    $region7: #{rt_pitch_tracker_forward.1} parent=1 // loop_footer_branch
      %23 = sbr.rel target = $region3
    $region8: #{rt_pitch_tracker_forward.1} parent=1 // loop_exit
      _
    %4503 = vsyncpa [#allocation4], 1
    %s4504 = scalar_lea.sflag [#allocation4], 1
    %4505 = vsyncpa %s4504, 1

</llo_original>
